<compile_context>
chip_gen: v7x
topology: tpu7x:2x2x1
jax: 0.10.0
libtpu: 0.0.40
codegen_flags: <defaults>
</compile_context>

<pallas_src>
import functools

import jax
import jax.numpy as jnp
from jax.experimental import pallas as pl
from jax.experimental.pallas import tpu as pltpu

BN_EPS = 1e-5

da = [0.45, 0.45, 0.3, 0.3, 0.45, 0.45, 0.35, 0.35,
      0.45, 0.45, 0.4, 0.4, 0.45, 0.45, 0.3, 0.3]
density_array = {'layer1_1': [da[0], da[1]], 'layer1_2': [da[2], da[3]],
                 'layer2_1': [da[4], da[5]], 'layer2_2': [da[6], da[7]],
                 'layer3_1': [da[8], da[9]], 'layer3_2': [da[10], da[11]],
                 'layer4_1': [da[12], da[13]], 'layer4_2': [da[14], da[15]]}


# ---------------------------------------------------------------------------
# Pallas kernels
# ---------------------------------------------------------------------------
def _conv_stats_kernel(xp_ref, w_ref, conv_ref, sum_ref, ssq_ref, acc_ref):
    """3x3 conv (stride 1, input pre-padded by 1) + per-sample channel stats.

    xp_ref  : (1, H+2, W+2, Cp) bf16 padded NHWC input block (one sample)
    w_ref   : (3, 3, Cp, Cp)    bf16 HWIO conv weight
    conv_ref: (1, H, W, Cp)     f32 raw conv output
    sum_ref : (1, 1, Cp)        f32 per-sample sum over H*W
    ssq_ref : (1, 1, Cp)        f32 per-sample sum of squares over H*W
    acc_ref : (H*W, Cp)         f32 VMEM scratch accumulator
    """
    _, Hp, Wp, Cp = xp_ref.shape
    H, W = Hp - 2, Wp - 2

    xb = xp_ref[0]                                # (H+2, W+2, Cp) bf16
    acc_ref[...] = jnp.zeros_like(acc_ref)
    for dh in range(3):                           # static unroll: 9 MXU matmuls
        row = xb[dh:dh + H]                       # (H, W+2, Cp) -- loaded once per dh
        for dw in range(3):
            patch = row[:, dw:dw + W, :].reshape(H * W, Cp)
            acc_ref[...] += jnp.dot(patch, w_ref[dh, dw],
                                    preferred_element_type=jnp.float32)

    acc = acc_ref[...]
    conv_ref[...] = acc.reshape(1, H, W, Cp)
    sum_ref[...] = jnp.sum(acc, axis=0, keepdims=True).reshape(1, 1, Cp)
    ssq_ref[...] = jnp.sum(acc * acc, axis=0, keepdims=True).reshape(1, 1, Cp)


def _bn_relu_drop_kernel(conv_ref, scale_ref, shift_ref, lo_ref, hi_ref, o_ref):
    """Fused BN-apply (one mul+add) + ReLU + top-k spatial drop.

    conv_ref  : (1, H, W, Cp) f32 raw conv output block (one sample)
    scale_ref : (1, 1, 1, Cp) f32 folded BN scale (gamma * rsqrt(var+eps))
    shift_ref : (1, 1, 1, Cp) f32 folded BN shift (beta - mean*scale)
    lo_ref/hi_ref : (1, 1, 1, Cp) f32 keep-band on the raw conv value
        (keep iff lo <= x <= hi) -- exact image of the y-space top-k threshold
        because BN is a per-channel affine and ReLU is monotone.
    o_ref     : (1, H, W, Cp) f32
    """
    x = conv_ref[...]
    y = jnp.maximum(x * scale_ref[...] + shift_ref[...], 0.0)
    keep = jnp.logical_and(x >= lo_ref[...], x <= hi_ref[...])
    o_ref[...] = jnp.where(keep, y, 0.0).astype(o_ref.dtype)


# ---------------------------------------------------------------------------
# pallas_call wrappers
# ---------------------------------------------------------------------------
def _compiler_params():
    return pltpu.CompilerParams(
        dimension_semantics=("parallel",),      # batch axis -> megacore shard (v7x)
        vmem_limit_bytes=48 * 1024 * 1024)      # fits v7x's 64 MiB with headroom


def _conv_stats(xp_bf16, w_bf16):
    N, Hp, Wp, Cp = xp_bf16.shape
    H, W = Hp - 2, Wp - 2
    return pl.pallas_call(
        _conv_stats_kernel,
        out_shape=(jax.ShapeDtypeStruct((N, H, W, Cp), jnp.float32),
                   jax.ShapeDtypeStruct((N, 1, Cp), jnp.float32),
                   jax.ShapeDtypeStruct((N, 1, Cp), jnp.float32)),
        grid=(N,),
        in_specs=[
            pl.BlockSpec((1, Hp, Wp, Cp), lambda n: (n, 0, 0, 0)),
            pl.BlockSpec((3, 3, Cp, Cp), lambda n: (0, 0, 0, 0)),
        ],
        out_specs=(
            pl.BlockSpec((1, H, W, Cp), lambda n: (n, 0, 0, 0)),
            pl.BlockSpec((1, 1, Cp), lambda n: (n, 0, 0)),
            pl.BlockSpec((1, 1, Cp), lambda n: (n, 0, 0)),
        ),
        scratch_shapes=[pltpu.VMEM((H * W, Cp), jnp.float32)],
        compiler_params=_compiler_params(),
    )(xp_bf16, w_bf16)


def _bn_relu_drop(conv_out, scale, shift, lo, hi):
    N, H, W, Cp = conv_out.shape
    return pl.pallas_call(
        _bn_relu_drop_kernel,
        out_shape=jax.ShapeDtypeStruct((N, H, W, Cp), jnp.float32),
        grid=(N,),
        in_specs=[
            pl.BlockSpec((1, H, W, Cp), lambda n: (n, 0, 0, 0)),
            pl.BlockSpec((1, 1, 1, Cp), lambda n: (0, 0, 0, 0)),
            pl.BlockSpec((1, 1, 1, Cp), lambda n: (0, 0, 0, 0)),
            pl.BlockSpec((1, 1, 1, Cp), lambda n: (n, 0, 0, 0)),
            pl.BlockSpec((1, 1, 1, Cp), lambda n: (n, 0, 0, 0)),
        ],
        out_specs=pl.BlockSpec((1, H, W, Cp), lambda n: (n, 0, 0, 0)),
        compiler_params=_compiler_params(),
    )(conv_out, scale.reshape(1, 1, 1, Cp), shift.reshape(1, 1, 1, Cp), lo, hi)


# ---------------------------------------------------------------------------
# Tiny XLA glue (per-channel scalars / order statistics)
# ---------------------------------------------------------------------------
def _bn_scale_shift(ssum, ssq, gamma, beta, count):
    s1 = jnp.sum(ssum, axis=(0, 1))                 # (Cp,)
    s2 = jnp.sum(ssq, axis=(0, 1))
    mean = s1 / count
    var = jnp.maximum(s2 / count - mean * mean, 0.0)
    scale = gamma * jax.lax.rsqrt(var + BN_EPS)
    shift = beta - mean * scale
    return scale, shift


def _drop_keep_bounds(conv_out, scale, density):
    # TODO(synk): the k-th order-statistic selection still runs as XLA glue
    # (transpose + jax.lax.top_k); an in-kernel selection (value binary search
    # with VPU count passes) would keep it fully on-chip.
    N, H, W, Cp = conv_out.shape
    k = max(int(density * H * W), 1)
    flat = jnp.transpose(conv_out.reshape(N, H * W, Cp), (0, 2, 1))   # (N,Cp,HW)
    q_hi = jax.lax.top_k(flat, k)[0][..., -1]        # k-th largest raw conv value
    q_lo = -jax.lax.top_k(-flat, k)[0][..., -1]      # k-th smallest
    s = scale[None, :]
    # y = relu(s*x + b) with s = BN scale: the y-space top-k threshold maps to
    #   s > 0: keep x >= k-th largest;  s < 0: keep x <= k-th smallest;  s == 0: keep all.
    lo = jnp.where(s > 0, q_hi, -jnp.inf).astype(jnp.float32)
    hi = jnp.where(s < 0, q_lo, jnp.inf).astype(jnp.float32)
    return lo.reshape(N, 1, 1, Cp), hi.reshape(N, 1, 1, Cp)


def _conv_bn_relu_drop(a, w_bf16, gamma, beta, density):
    N, H, W, Cp = a.shape
    # TODO(synk): the 1-pixel halo is materialized with jnp.pad (one extra HBM
    # pass); an Element-indexed halo BlockSpec would avoid it.
    xp = jnp.pad(a, ((0, 0), (1, 1), (1, 1), (0, 0))).astype(jnp.bfloat16)
    conv_out, ssum, ssq = _conv_stats(xp, w_bf16)
    scale, shift = _bn_scale_shift(ssum, ssq, gamma, beta, jnp.float32(N * H * W))
    lo, hi = _drop_keep_bounds(conv_out, scale, density)
    return _bn_relu_drop(conv_out, scale, shift, lo, hi)


# ---------------------------------------------------------------------------
# Public forward (NCHW in/out, like the PyTorch module)
# ---------------------------------------------------------------------------
def _round_up(x, m):
    return ((x + m - 1) // m) * m


def _pad_channels(a, Cp):
    pad = Cp - a.shape[-1]
    if pad == 0:
        return a
    cfg = [(0, 0)] * (a.ndim - 1) + [(0, pad)]
    return jnp.pad(a, cfg)


def _pad_weight(w, Cp):
    pad = Cp - w.shape[-1]
    if pad == 0:
        return w
    return jnp.pad(w, ((0, 0), (0, 0), (0, pad), (0, pad)))


def _pad_vec(v, Cp):
    pad = Cp - v.shape[-1]
    return v if pad == 0 else jnp.pad(v, ((0, pad),))


def basic_block2_forward(t, x_nchw, params, layer_name):
    """Pallas implementation of BasicBlock2.forward(t, x). `t` is unused (as in
    the PyTorch module); the python-side `nfe` counter side-effect is omitted."""
    del t
    d0, d1 = density_array[layer_name]
    N, C, H, W = x_nchw.shape
    Cp = _round_up(C, 128)                         # lane-dense channel padding

    x = jnp.transpose(x_nchw, (0, 2, 3, 1)).astype(jnp.float32)   # NCHW -> NHWC
    x = _pad_channels(x, Cp)

    w1 = _pad_weight(params['w1'], Cp).astype(jnp.bfloat16)
    w2 = _pad_weight(params['w2'], Cp).astype(jnp.bfloat16)
    g1, b1 = _pad_vec(params['g1'], Cp), _pad_vec(params['b1'], Cp)
    g2, b2 = _pad_vec(params['g2'], Cp), _pad_vec(params['b2'], Cp)

    out = _conv_bn_relu_drop(x, w1, g1, b1, d0)
    out = _conv_bn_relu_drop(out, w2, g2, b2, d1)

    out = out[..., :C]                                            # strip channel pad
    return jnp.transpose(out, (0, 3, 1, 2))                       # NHWC -> NCHW


# ---------------------------------------------------------------------------
# Deterministic synthetic parameters (shapes from the module's __init__)
# ---------------------------------------------------------------------------
def init_params(key, dim):
    k1, k2, k3, k4, k5, k6 = jax.random.split(key, 6)
    scale = 1.0 / jnp.sqrt(jnp.float32(dim * 9))
    return dict(
        w1=jax.random.normal(k1, (3, 3, dim, dim), jnp.float32) * scale,  # HWIO
        w2=jax.random.normal(k2, (3, 3, dim, dim), jnp.float32) * scale,
        g1=1.0 + 0.1 * jax.random.normal(k3, (dim,), jnp.float32),
        b1=0.1 * jax.random.normal(k4, (dim,), jnp.float32),
        g2=1.0 + 0.1 * jax.random.normal(k5, (dim,), jnp.float32),
        b2=0.1 * jax.random.normal(k6, (dim,), jnp.float32),
    )


# ---------------------------------------------------------------------------
# Pure-JAX reference (mirrors the PyTorch NCHW forward; conv operands cast to
# bf16 with f32 accumulation to match the kernel's MXU precision)
# ---------------------------------------------------------------------------
def reference_forward(x_nchw, params, layer_name):
    d0, d1 = density_array[layer_name]

    def conv(x, w_hwio):
        w_oihw = jnp.transpose(w_hwio, (3, 2, 0, 1))
        return jax.lax.conv_general_dilated(
            x.astype(jnp.bfloat16), w_oihw.astype(jnp.bfloat16),
            window_strides=(1, 1), padding=((1, 1), (1, 1)),
            dimension_numbers=('NCHW', 'OIHW', 'NCHW'),
            preferred_element_type=jnp.float32)

    def bn(x, g, b):
        mean = jnp.mean(x, axis=(0, 2, 3), keepdims=True)
        var = jnp.mean((x - mean) ** 2, axis=(0, 2, 3), keepdims=True)
        return ((x - mean) * jax.lax.rsqrt(var + BN_EPS)
                * g.reshape(1, -1, 1, 1) + b.reshape(1, -1, 1, 1))

    def drop(x, density):
        N, C, H, W = x.shape
        k = max(int(density * H * W), 1)
        flat = x.reshape(N, C, H * W)
        thr = jax.lax.top_k(flat, k)[0][..., -1:]
        return (flat * (flat >= thr).astype(flat.dtype)).reshape(N, C, H, W)

    out = drop(jax.nn.relu(bn(conv(x_nchw, params['w1']),
                              params['g1'], params['b1'])), d0)
    out = drop(jax.nn.relu(bn(conv(out, params['w2']),
                              params['g2'], params['b2'])), d1)
    return out


if __name__ == "__main__":
    key = jax.random.PRNGKey(0)
    kx, kp = jax.random.split(key)

    N, C, H, W = 2, 4, 16, 16
    layer_name = 'layer1_1'
    x = jax.random.normal(kx, (N, C, H, W), jnp.float32)
    params = init_params(kp, C)
    # Flip one gamma negative to also exercise the negative-BN-scale drop path.
    params['g1'] = params['g1'].at[1].set(-params['g1'][1])

    fwd = jax.jit(functools.partial(basic_block2_forward, layer_name=layer_name))
    out = jax.block_until_ready(fwd(jnp.float32(0.0), x, params))
    assert out.shape == (N, C, H, W)
    assert bool(jnp.all(jnp.isfinite(out)))

    ref = reference_forward(x, params, layer_name)
    # A few elements may legitimately differ when a conv value sits exactly on
    # the top-k boundary (accumulation-order rounding can flip its keep/drop
    # mask), so require near-total -- not bitwise -- agreement.
    mismatch_frac = float(jnp.mean((jnp.abs(out - ref) > 1e-2).astype(jnp.float32)))
    assert mismatch_frac < 0.01, f"mismatch fraction too high: {mismatch_frac}"

    print("KERNEL_OK")
</pallas_src>

<mosaic_0001>
module attributes {stable_mosaic.version = 11 : i64} {
  func.func @_conv_stats_kernel(%arg0: i32, %arg1: memref<1x18x18x128xbf16, #tpu.memory_space<vmem>>, %arg2: memref<3x3x128x128xbf16, #tpu.memory_space<vmem>>, %arg3: memref<1x16x16x128xf32, #tpu.memory_space<vmem>>, %arg4: memref<1x1x128xf32, #tpu.memory_space<vmem>>, %arg5: memref<1x1x128xf32, #tpu.memory_space<vmem>>, %arg6: memref<256x128xf32, #tpu.memory_space<vmem>>) attributes {dimension_semantics = [#tpu.dimension_semantics<parallel>], iteration_bounds = array<i64: 2>, scalar_prefetch = 0 : i64, scratch_operands = 1 : i64, tpu.core_type = #tpu.core_type<tc>, window_params = [{transform_indices = @transform_0, window_bounds = array<i64: 1, 18, 18, 128>}, {pipeline_mode = #tpu.pipeline_mode<synchronous>, transform_indices = @transform_1, window_bounds = array<i64: 3, 3, 128, 128>}, {transform_indices = @transform_2, window_bounds = array<i64: 1, 16, 16, 128>}, {transform_indices = @transform_3, window_bounds = array<i64: 1, 1, 128>}, {transform_indices = @transform_4, window_bounds = array<i64: 1, 1, 128>}]} {
    %c0 = arith.constant 0 : index
    %c0_0 = arith.constant 0 : index
    %c0_1 = arith.constant 0 : index
    %c0_2 = arith.constant 0 : index
    %0 = vector.load %arg1[%c0, %c0_0, %c0_1, %c0_2] : memref<1x18x18x128xbf16, #tpu.memory_space<vmem>>, vector<1x18x18x128xbf16>
    %1 = vector.shape_cast %0 : vector<1x18x18x128xbf16> to vector<18x18x128xbf16>
    %cst = arith.constant 0.000000e+00 : f32
    %2 = vector.broadcast %cst : f32 to vector<256x128xf32>
    %c0_3 = arith.constant 0 : index
    %c0_4 = arith.constant 0 : index
    %3 = vector.load %arg6[%c0_3, %c0_4] : memref<256x128xf32, #tpu.memory_space<vmem>>, vector<256x128xf32>
    tpu.vector_store %arg6[%c0_3, %c0_4], %2 {strides = array<i32>} : memref<256x128xf32, #tpu.memory_space<vmem>>, vector<256x128xf32>,
    %4 = vector.extract_strided_slice %1 {offsets = [0, 0, 0], sizes = [16, 18, 128], strides = [1, 1, 1]} : vector<18x18x128xbf16> to vector<16x18x128xbf16>
    %5 = vector.extract_strided_slice %4 {offsets = [0, 0, 0], sizes = [16, 16, 128], strides = [1, 1, 1]} : vector<16x18x128xbf16> to vector<16x16x128xbf16>
    %6 = vector.shape_cast %5 : vector<16x16x128xbf16> to vector<256x128xbf16>
    %c0_5 = arith.constant 0 : index
    %c0_6 = arith.constant 0 : index
    %7 = vector.load %arg6[%c0_5, %c0_6] : memref<256x128xf32, #tpu.memory_space<vmem>>, vector<256x128xf32>
    %c0_7 = arith.constant 0 : index
    %c0_8 = arith.constant 0 : index
    %c0_9 = arith.constant 0 : index
    %c0_10 = arith.constant 0 : index
    %8 = vector.load %arg2[%c0_7, %c0_8, %c0_9, %c0_10] : memref<3x3x128x128xbf16, #tpu.memory_space<vmem>>, vector<1x1x128x128xbf16>
    %9 = vector.shape_cast %8 : vector<1x1x128x128xbf16> to vector<128x128xbf16>
    %cst_11 = arith.constant dense<0.000000e+00> : vector<256x128xf32>
    %10 = tpu.matmul %6, %9, %cst_11 {dimension_numbers = #tpu.dot_dimension_numbers<[1], [0], [0], [1], [0, 0, 1, 1], [], []>} : vector<256x128xbf16>, vector<128x128xbf16>, vector<256x128xf32> -> vector<256x128xf32>
    %11 = arith.addf %7, %10 : vector<256x128xf32>
    %c0_12 = arith.constant 0 : index
    %c0_13 = arith.constant 0 : index
    %12 = vector.load %arg6[%c0_12, %c0_13] : memref<256x128xf32, #tpu.memory_space<vmem>>, vector<256x128xf32>
    tpu.vector_store %arg6[%c0_12, %c0_13], %11 {strides = array<i32>} : memref<256x128xf32, #tpu.memory_space<vmem>>, vector<256x128xf32>,
    %13 = vector.extract_strided_slice %4 {offsets = [0, 1, 0], sizes = [16, 16, 128], strides = [1, 1, 1]} : vector<16x18x128xbf16> to vector<16x16x128xbf16>
    %14 = vector.shape_cast %13 : vector<16x16x128xbf16> to vector<256x128xbf16>
    %c0_14 = arith.constant 0 : index
    %c0_15 = arith.constant 0 : index
    %15 = vector.load %arg6[%c0_14, %c0_15] : memref<256x128xf32, #tpu.memory_space<vmem>>, vector<256x128xf32>
    %c0_16 = arith.constant 0 : index
    %c1 = arith.constant 1 : index
    %c0_17 = arith.constant 0 : index
    %c0_18 = arith.constant 0 : index
    %16 = vector.load %arg2[%c0_16, %c1, %c0_17, %c0_18] : memref<3x3x128x128xbf16, #tpu.memory_space<vmem>>, vector<1x1x128x128xbf16>
    %17 = vector.shape_cast %16 : vector<1x1x128x128xbf16> to vector<128x128xbf16>
    %cst_19 = arith.constant dense<0.000000e+00> : vector<256x128xf32>
    %18 = tpu.matmul %14, %17, %cst_19 {dimension_numbers = #tpu.dot_dimension_numbers<[1], [0], [0], [1], [0, 0, 1, 1], [], []>} : vector<256x128xbf16>, vector<128x128xbf16>, vector<256x128xf32> -> vector<256x128xf32>
    %19 = arith.addf %15, %18 : vector<256x128xf32>
    %c0_20 = arith.constant 0 : index
    %c0_21 = arith.constant 0 : index
    %20 = vector.load %arg6[%c0_20, %c0_21] : memref<256x128xf32, #tpu.memory_space<vmem>>, vector<256x128xf32>
    tpu.vector_store %arg6[%c0_20, %c0_21], %19 {strides = array<i32>} : memref<256x128xf32, #tpu.memory_space<vmem>>, vector<256x128xf32>,
    %21 = vector.extract_strided_slice %4 {offsets = [0, 2, 0], sizes = [16, 16, 128], strides = [1, 1, 1]} : vector<16x18x128xbf16> to vector<16x16x128xbf16>
    %22 = vector.shape_cast %21 : vector<16x16x128xbf16> to vector<256x128xbf16>
    %c0_22 = arith.constant 0 : index
    %c0_23 = arith.constant 0 : index
    %23 = vector.load %arg6[%c0_22, %c0_23] : memref<256x128xf32, #tpu.memory_space<vmem>>, vector<256x128xf32>
    %c0_24 = arith.constant 0 : index
    %c2 = arith.constant 2 : index
    %c0_25 = arith.constant 0 : index
    %c0_26 = arith.constant 0 : index
    %24 = vector.load %arg2[%c0_24, %c2, %c0_25, %c0_26] : memref<3x3x128x128xbf16, #tpu.memory_space<vmem>>, vector<1x1x128x128xbf16>
    %25 = vector.shape_cast %24 : vector<1x1x128x128xbf16> to vector<128x128xbf16>
    %cst_27 = arith.constant dense<0.000000e+00> : vector<256x128xf32>
    %26 = tpu.matmul %22, %25, %cst_27 {dimension_numbers = #tpu.dot_dimension_numbers<[1], [0], [0], [1], [0, 0, 1, 1], [], []>} : vector<256x128xbf16>, vector<128x128xbf16>, vector<256x128xf32> -> vector<256x128xf32>
    %27 = arith.addf %23, %26 : vector<256x128xf32>
    %c0_28 = arith.constant 0 : index
    %c0_29 = arith.constant 0 : index
    %28 = vector.load %arg6[%c0_28, %c0_29] : memref<256x128xf32, #tpu.memory_space<vmem>>, vector<256x128xf32>
    tpu.vector_store %arg6[%c0_28, %c0_29], %27 {strides = array<i32>} : memref<256x128xf32, #tpu.memory_space<vmem>>, vector<256x128xf32>,
    %29 = vector.extract_strided_slice %1 {offsets = [1, 0, 0], sizes = [16, 18, 128], strides = [1, 1, 1]} : vector<18x18x128xbf16> to vector<16x18x128xbf16>
    %30 = vector.extract_strided_slice %29 {offsets = [0, 0, 0], sizes = [16, 16, 128], strides = [1, 1, 1]} : vector<16x18x128xbf16> to vector<16x16x128xbf16>
    %31 = vector.shape_cast %30 : vector<16x16x128xbf16> to vector<256x128xbf16>
    %c0_30 = arith.constant 0 : index
    %c0_31 = arith.constant 0 : index
    %32 = vector.load %arg6[%c0_30, %c0_31] : memref<256x128xf32, #tpu.memory_space<vmem>>, vector<256x128xf32>
    %c1_32 = arith.constant 1 : index
    %c0_33 = arith.constant 0 : index
    %c0_34 = arith.constant 0 : index
    %c0_35 = arith.constant 0 : index
    %33 = vector.load %arg2[%c1_32, %c0_33, %c0_34, %c0_35] : memref<3x3x128x128xbf16, #tpu.memory_space<vmem>>, vector<1x1x128x128xbf16>
    %34 = vector.shape_cast %33 : vector<1x1x128x128xbf16> to vector<128x128xbf16>
    %cst_36 = arith.constant dense<0.000000e+00> : vector<256x128xf32>
    %35 = tpu.matmul %31, %34, %cst_36 {dimension_numbers = #tpu.dot_dimension_numbers<[1], [0], [0], [1], [0, 0, 1, 1], [], []>} : vector<256x128xbf16>, vector<128x128xbf16>, vector<256x128xf32> -> vector<256x128xf32>
    %36 = arith.addf %32, %35 : vector<256x128xf32>
    %c0_37 = arith.constant 0 : index
    %c0_38 = arith.constant 0 : index
    %37 = vector.load %arg6[%c0_37, %c0_38] : memref<256x128xf32, #tpu.memory_space<vmem>>, vector<256x128xf32>
    tpu.vector_store %arg6[%c0_37, %c0_38], %36 {strides = array<i32>} : memref<256x128xf32, #tpu.memory_space<vmem>>, vector<256x128xf32>,
    %38 = vector.extract_strided_slice %29 {offsets = [0, 1, 0], sizes = [16, 16, 128], strides = [1, 1, 1]} : vector<16x18x128xbf16> to vector<16x16x128xbf16>
    %39 = vector.shape_cast %38 : vector<16x16x128xbf16> to vector<256x128xbf16>
    %c0_39 = arith.constant 0 : index
    %c0_40 = arith.constant 0 : index
    %40 = vector.load %arg6[%c0_39, %c0_40] : memref<256x128xf32, #tpu.memory_space<vmem>>, vector<256x128xf32>
    %c1_41 = arith.constant 1 : index
    %c1_42 = arith.constant 1 : index
    %c0_43 = arith.constant 0 : index
    %c0_44 = arith.constant 0 : index
    %41 = vector.load %arg2[%c1_41, %c1_42, %c0_43, %c0_44] : memref<3x3x128x128xbf16, #tpu.memory_space<vmem>>, vector<1x1x128x128xbf16>
    %42 = vector.shape_cast %41 : vector<1x1x128x128xbf16> to vector<128x128xbf16>
    %cst_45 = arith.constant dense<0.000000e+00> : vector<256x128xf32>
    %43 = tpu.matmul %39, %42, %cst_45 {dimension_numbers = #tpu.dot_dimension_numbers<[1], [0], [0], [1], [0, 0, 1, 1], [], []>} : vector<256x128xbf16>, vector<128x128xbf16>, vector<256x128xf32> -> vector<256x128xf32>
    %44 = arith.addf %40, %43 : vector<256x128xf32>
    %c0_46 = arith.constant 0 : index
    %c0_47 = arith.constant 0 : index
    %45 = vector.load %arg6[%c0_46, %c0_47] : memref<256x128xf32, #tpu.memory_space<vmem>>, vector<256x128xf32>
    tpu.vector_store %arg6[%c0_46, %c0_47], %44 {strides = array<i32>} : memref<256x128xf32, #tpu.memory_space<vmem>>, vector<256x128xf32>,
    %46 = vector.extract_strided_slice %29 {offsets = [0, 2, 0], sizes = [16, 16, 128], strides = [1, 1, 1]} : vector<16x18x128xbf16> to vector<16x16x128xbf16>
    %47 = vector.shape_cast %46 : vector<16x16x128xbf16> to vector<256x128xbf16>
    %c0_48 = arith.constant 0 : index
    %c0_49 = arith.constant 0 : index
    %48 = vector.load %arg6[%c0_48, %c0_49] : memref<256x128xf32, #tpu.memory_space<vmem>>, vector<256x128xf32>
    %c1_50 = arith.constant 1 : index
    %c2_51 = arith.constant 2 : index
    %c0_52 = arith.constant 0 : index
    %c0_53 = arith.constant 0 : index
    %49 = vector.load %arg2[%c1_50, %c2_51, %c0_52, %c0_53] : memref<3x3x128x128xbf16, #tpu.memory_space<vmem>>, vector<1x1x128x128xbf16>
    %50 = vector.shape_cast %49 : vector<1x1x128x128xbf16> to vector<128x128xbf16>
    %cst_54 = arith.constant dense<0.000000e+00> : vector<256x128xf32>
    %51 = tpu.matmul %47, %50, %cst_54 {dimension_numbers = #tpu.dot_dimension_numbers<[1], [0], [0], [1], [0, 0, 1, 1], [], []>} : vector<256x128xbf16>, vector<128x128xbf16>, vector<256x128xf32> -> vector<256x128xf32>
    %52 = arith.addf %48, %51 : vector<256x128xf32>
    %c0_55 = arith.constant 0 : index
    %c0_56 = arith.constant 0 : index
    %53 = vector.load %arg6[%c0_55, %c0_56] : memref<256x128xf32, #tpu.memory_space<vmem>>, vector<256x128xf32>
    tpu.vector_store %arg6[%c0_55, %c0_56], %52 {strides = array<i32>} : memref<256x128xf32, #tpu.memory_space<vmem>>, vector<256x128xf32>,
    %54 = vector.extract_strided_slice %1 {offsets = [2, 0, 0], sizes = [16, 18, 128], strides = [1, 1, 1]} : vector<18x18x128xbf16> to vector<16x18x128xbf16>
    %55 = vector.extract_strided_slice %54 {offsets = [0, 0, 0], sizes = [16, 16, 128], strides = [1, 1, 1]} : vector<16x18x128xbf16> to vector<16x16x128xbf16>
    %56 = vector.shape_cast %55 : vector<16x16x128xbf16> to vector<256x128xbf16>
    %c0_57 = arith.constant 0 : index
    %c0_58 = arith.constant 0 : index
    %57 = vector.load %arg6[%c0_57, %c0_58] : memref<256x128xf32, #tpu.memory_space<vmem>>, vector<256x128xf32>
    %c2_59 = arith.constant 2 : index
    %c0_60 = arith.constant 0 : index
    %c0_61 = arith.constant 0 : index
    %c0_62 = arith.constant 0 : index
    %58 = vector.load %arg2[%c2_59, %c0_60, %c0_61, %c0_62] : memref<3x3x128x128xbf16, #tpu.memory_space<vmem>>, vector<1x1x128x128xbf16>
    %59 = vector.shape_cast %58 : vector<1x1x128x128xbf16> to vector<128x128xbf16>
    %cst_63 = arith.constant dense<0.000000e+00> : vector<256x128xf32>
    %60 = tpu.matmul %56, %59, %cst_63 {dimension_numbers = #tpu.dot_dimension_numbers<[1], [0], [0], [1], [0, 0, 1, 1], [], []>} : vector<256x128xbf16>, vector<128x128xbf16>, vector<256x128xf32> -> vector<256x128xf32>
    %61 = arith.addf %57, %60 : vector<256x128xf32>
    %c0_64 = arith.constant 0 : index
    %c0_65 = arith.constant 0 : index
    %62 = vector.load %arg6[%c0_64, %c0_65] : memref<256x128xf32, #tpu.memory_space<vmem>>, vector<256x128xf32>
    tpu.vector_store %arg6[%c0_64, %c0_65], %61 {strides = array<i32>} : memref<256x128xf32, #tpu.memory_space<vmem>>, vector<256x128xf32>,
    %63 = vector.extract_strided_slice %54 {offsets = [0, 1, 0], sizes = [16, 16, 128], strides = [1, 1, 1]} : vector<16x18x128xbf16> to vector<16x16x128xbf16>
    %64 = vector.shape_cast %63 : vector<16x16x128xbf16> to vector<256x128xbf16>
    %c0_66 = arith.constant 0 : index
    %c0_67 = arith.constant 0 : index
    %65 = vector.load %arg6[%c0_66, %c0_67] : memref<256x128xf32, #tpu.memory_space<vmem>>, vector<256x128xf32>
    %c2_68 = arith.constant 2 : index
    %c1_69 = arith.constant 1 : index
    %c0_70 = arith.constant 0 : index
    %c0_71 = arith.constant 0 : index
    %66 = vector.load %arg2[%c2_68, %c1_69, %c0_70, %c0_71] : memref<3x3x128x128xbf16, #tpu.memory_space<vmem>>, vector<1x1x128x128xbf16>
    %67 = vector.shape_cast %66 : vector<1x1x128x128xbf16> to vector<128x128xbf16>
    %cst_72 = arith.constant dense<0.000000e+00> : vector<256x128xf32>
    %68 = tpu.matmul %64, %67, %cst_72 {dimension_numbers = #tpu.dot_dimension_numbers<[1], [0], [0], [1], [0, 0, 1, 1], [], []>} : vector<256x128xbf16>, vector<128x128xbf16>, vector<256x128xf32> -> vector<256x128xf32>
    %69 = arith.addf %65, %68 : vector<256x128xf32>
    %c0_73 = arith.constant 0 : index
    %c0_74 = arith.constant 0 : index
    %70 = vector.load %arg6[%c0_73, %c0_74] : memref<256x128xf32, #tpu.memory_space<vmem>>, vector<256x128xf32>
    tpu.vector_store %arg6[%c0_73, %c0_74], %69 {strides = array<i32>} : memref<256x128xf32, #tpu.memory_space<vmem>>, vector<256x128xf32>,
    %71 = vector.extract_strided_slice %54 {offsets = [0, 2, 0], sizes = [16, 16, 128], strides = [1, 1, 1]} : vector<16x18x128xbf16> to vector<16x16x128xbf16>
    %72 = vector.shape_cast %71 : vector<16x16x128xbf16> to vector<256x128xbf16>
    %c0_75 = arith.constant 0 : index
    %c0_76 = arith.constant 0 : index
    %73 = vector.load %arg6[%c0_75, %c0_76] : memref<256x128xf32, #tpu.memory_space<vmem>>, vector<256x128xf32>
    %c2_77 = arith.constant 2 : index
    %c2_78 = arith.constant 2 : index
    %c0_79 = arith.constant 0 : index
    %c0_80 = arith.constant 0 : index
    %74 = vector.load %arg2[%c2_77, %c2_78, %c0_79, %c0_80] : memref<3x3x128x128xbf16, #tpu.memory_space<vmem>>, vector<1x1x128x128xbf16>
    %75 = vector.shape_cast %74 : vector<1x1x128x128xbf16> to vector<128x128xbf16>
    %cst_81 = arith.constant dense<0.000000e+00> : vector<256x128xf32>
    %76 = tpu.matmul %72, %75, %cst_81 {dimension_numbers = #tpu.dot_dimension_numbers<[1], [0], [0], [1], [0, 0, 1, 1], [], []>} : vector<256x128xbf16>, vector<128x128xbf16>, vector<256x128xf32> -> vector<256x128xf32>
    %77 = arith.addf %73, %76 : vector<256x128xf32>
    %c0_82 = arith.constant 0 : index
    %c0_83 = arith.constant 0 : index
    %78 = vector.load %arg6[%c0_82, %c0_83] : memref<256x128xf32, #tpu.memory_space<vmem>>, vector<256x128xf32>
    tpu.vector_store %arg6[%c0_82, %c0_83], %77 {strides = array<i32>} : memref<256x128xf32, #tpu.memory_space<vmem>>, vector<256x128xf32>,
    %c0_84 = arith.constant 0 : index
    %c0_85 = arith.constant 0 : index
    %79 = vector.load %arg6[%c0_84, %c0_85] : memref<256x128xf32, #tpu.memory_space<vmem>>, vector<256x128xf32>
    %80 = vector.shape_cast %79 : vector<256x128xf32> to vector<1x16x16x128xf32>
    %c0_86 = arith.constant 0 : index
    %c0_87 = arith.constant 0 : index
    %c0_88 = arith.constant 0 : index
    %c0_89 = arith.constant 0 : index
    %81 = vector.load %arg3[%c0_86, %c0_87, %c0_88, %c0_89] : memref<1x16x16x128xf32, #tpu.memory_space<vmem>>, vector<1x16x16x128xf32>
    tpu.vector_store %arg3[%c0_86, %c0_87, %c0_88, %c0_89], %80 {strides = array<i32>} : memref<1x16x16x128xf32, #tpu.memory_space<vmem>>, vector<1x16x16x128xf32>,
    %cst_90 = arith.constant dense<0.000000e+00> : vector<128xf32>
    %82 = vector.multi_reduction <add>, %79, %cst_90 [0] : vector<256x128xf32> to vector<128xf32>
    %83 = vector.shape_cast %82 : vector<128xf32> to vector<1x128xf32>
    %84 = vector.shape_cast %83 : vector<1x128xf32> to vector<1x1x128xf32>
    %c0_91 = arith.constant 0 : index
    %c0_92 = arith.constant 0 : index
    %c0_93 = arith.constant 0 : index
    %85 = vector.load %arg4[%c0_91, %c0_92, %c0_93] : memref<1x1x128xf32, #tpu.memory_space<vmem>>, vector<1x1x128xf32>
    tpu.vector_store %arg4[%c0_91, %c0_92, %c0_93], %84 {strides = array<i32>} : memref<1x1x128xf32, #tpu.memory_space<vmem>>, vector<1x1x128xf32>,
    %86 = arith.mulf %79, %79 : vector<256x128xf32>
    %cst_94 = arith.constant dense<0.000000e+00> : vector<128xf32>
    %87 = vector.multi_reduction <add>, %86, %cst_94 [0] : vector<256x128xf32> to vector<128xf32>
    %88 = vector.shape_cast %87 : vector<128xf32> to vector<1x128xf32>
    %89 = vector.shape_cast %88 : vector<1x128xf32> to vector<1x1x128xf32>
    %c0_95 = arith.constant 0 : index
    %c0_96 = arith.constant 0 : index
    %c0_97 = arith.constant 0 : index
    %90 = vector.load %arg5[%c0_95, %c0_96, %c0_97] : memref<1x1x128xf32, #tpu.memory_space<vmem>>, vector<1x1x128xf32>
    tpu.vector_store %arg5[%c0_95, %c0_96, %c0_97], %89 {strides = array<i32>} : memref<1x1x128xf32, #tpu.memory_space<vmem>>, vector<1x1x128xf32>,
    return
  }
  func.func @transform_0(%arg0: i32) -> (i32, i32, i32, i32) {
    %c0_i32 = arith.constant 0 : i32
    %c0_i32_0 = arith.constant 0 : i32
    %c0_i32_1 = arith.constant 0 : i32
    %c0_i32_2 = arith.constant 0 : i32
    return %arg0, %c0_i32, %c0_i32_0, %c0_i32_1 : i32, i32, i32, i32
  }
  func.func @transform_1(%arg0: i32) -> (i32, i32, i32, i32) {
    %c0_i32 = arith.constant 0 : i32
    %c0_i32_0 = arith.constant 0 : i32
    %c0_i32_1 = arith.constant 0 : i32
    %c0_i32_2 = arith.constant 0 : i32
    %c0_i32_3 = arith.constant 0 : i32
    return %c0_i32, %c0_i32_0, %c0_i32_1, %c0_i32_2 : i32, i32, i32, i32
  }
  func.func @transform_2(%arg0: i32) -> (i32, i32, i32, i32) {
    %c0_i32 = arith.constant 0 : i32
    %c0_i32_0 = arith.constant 0 : i32
    %c0_i32_1 = arith.constant 0 : i32
    %c0_i32_2 = arith.constant 0 : i32
    return %arg0, %c0_i32, %c0_i32_0, %c0_i32_1 : i32, i32, i32, i32
  }
  func.func @transform_3(%arg0: i32) -> (i32, i32, i32) {
    %c0_i32 = arith.constant 0 : i32
    %c0_i32_0 = arith.constant 0 : i32
    %c0_i32_1 = arith.constant 0 : i32
    return %arg0, %c0_i32, %c0_i32_0 : i32, i32, i32
  }
  func.func @transform_4(%arg0: i32) -> (i32, i32, i32) {
    %c0_i32 = arith.constant 0 : i32
    %c0_i32_0 = arith.constant 0 : i32
    %c0_i32_1 = arith.constant 0 : i32
    return %arg0, %c0_i32, %c0_i32_0 : i32, i32, i32
  }
}

module attributes {stable_mosaic.version = 11 : i64} {
  func.func @_bn_relu_drop_kernel(%arg0: i32, %arg1: memref<1x16x16x128xf32, #tpu.memory_space<vmem>>, %arg2: memref<1x1x1x128xf32, #tpu.memory_space<vmem>>, %arg3: memref<1x1x1x128xf32, #tpu.memory_space<vmem>>, %arg4: memref<1x1x1x128xf32, #tpu.memory_space<vmem>>, %arg5: memref<1x1x1x128xf32, #tpu.memory_space<vmem>>, %arg6: memref<1x16x16x128xf32, #tpu.memory_space<vmem>>) attributes {dimension_semantics = [#tpu.dimension_semantics<parallel>], iteration_bounds = array<i64: 2>, scalar_prefetch = 0 : i64, scratch_operands = 0 : i64, tpu.core_type = #tpu.core_type<tc>, window_params = [{transform_indices = @transform_0, window_bounds = array<i64: 1, 16, 16, 128>}, {pipeline_mode = #tpu.pipeline_mode<synchronous>, transform_indices = @transform_1, window_bounds = array<i64: 1, 1, 1, 128>}, {pipeline_mode = #tpu.pipeline_mode<synchronous>, transform_indices = @transform_2, window_bounds = array<i64: 1, 1, 1, 128>}, {transform_indices = @transform_3, window_bounds = array<i64: 1, 1, 1, 128>}, {transform_indices = @transform_4, window_bounds = array<i64: 1, 1, 1, 128>}, {transform_indices = @transform_5, window_bounds = array<i64: 1, 16, 16, 128>}]} {
    %c0 = arith.constant 0 : index
    %c0_0 = arith.constant 0 : index
    %c0_1 = arith.constant 0 : index
    %c0_2 = arith.constant 0 : index
    %0 = vector.load %arg1[%c0, %c0_0, %c0_1, %c0_2] : memref<1x16x16x128xf32, #tpu.memory_space<vmem>>, vector<1x16x16x128xf32>
    %c0_3 = arith.constant 0 : index
    %c0_4 = arith.constant 0 : index
    %c0_5 = arith.constant 0 : index
    %c0_6 = arith.constant 0 : index
    %1 = vector.load %arg2[%c0_3, %c0_4, %c0_5, %c0_6] : memref<1x1x1x128xf32, #tpu.memory_space<vmem>>, vector<1x1x1x128xf32>
    %2 = vector.broadcast %1 : vector<1x1x1x128xf32> to vector<1x16x16x128xf32>
    %3 = arith.mulf %0, %2 : vector<1x16x16x128xf32>
    %c0_7 = arith.constant 0 : index
    %c0_8 = arith.constant 0 : index
    %c0_9 = arith.constant 0 : index
    %c0_10 = arith.constant 0 : index
    %4 = vector.load %arg3[%c0_7, %c0_8, %c0_9, %c0_10] : memref<1x1x1x128xf32, #tpu.memory_space<vmem>>, vector<1x1x1x128xf32>
    %5 = vector.broadcast %4 : vector<1x1x1x128xf32> to vector<1x16x16x128xf32>
    %6 = arith.addf %3, %5 : vector<1x16x16x128xf32>
    %cst = arith.constant 0.000000e+00 : f32
    %7 = vector.broadcast %cst : f32 to vector<1x16x16x128xf32>
    %8 = arith.maximumf %6, %7 : vector<1x16x16x128xf32>
    %c0_11 = arith.constant 0 : index
    %c0_12 = arith.constant 0 : index
    %c0_13 = arith.constant 0 : index
    %c0_14 = arith.constant 0 : index
    %9 = vector.load %arg4[%c0_11, %c0_12, %c0_13, %c0_14] : memref<1x1x1x128xf32, #tpu.memory_space<vmem>>, vector<1x1x1x128xf32>
    %10 = vector.broadcast %9 : vector<1x1x1x128xf32> to vector<1x16x16x128xf32>
    %11 = arith.cmpf oge, %0, %10 : vector<1x16x16x128xf32>
    %c0_15 = arith.constant 0 : index
    %c0_16 = arith.constant 0 : index
    %c0_17 = arith.constant 0 : index
    %c0_18 = arith.constant 0 : index
    %12 = vector.load %arg5[%c0_15, %c0_16, %c0_17, %c0_18] : memref<1x1x1x128xf32, #tpu.memory_space<vmem>>, vector<1x1x1x128xf32>
    %13 = vector.broadcast %12 : vector<1x1x1x128xf32> to vector<1x16x16x128xf32>
    %14 = arith.cmpf ole, %0, %13 : vector<1x16x16x128xf32>
    %15 = arith.andi %11, %14 : vector<1x16x16x128xi1>
    %cst_19 = arith.constant 0.000000e+00 : f32
    %16 = vector.broadcast %cst_19 : f32 to vector<1x16x16x128xf32>
    %17 = arith.select %15, %8, %16 : vector<1x16x16x128xi1>, vector<1x16x16x128xf32>
    %c0_20 = arith.constant 0 : index
    %c0_21 = arith.constant 0 : index
    %c0_22 = arith.constant 0 : index
    %c0_23 = arith.constant 0 : index
    %18 = vector.load %arg6[%c0_20, %c0_21, %c0_22, %c0_23] : memref<1x16x16x128xf32, #tpu.memory_space<vmem>>, vector<1x16x16x128xf32>
    tpu.vector_store %arg6[%c0_20, %c0_21, %c0_22, %c0_23], %17 {strides = array<i32>} : memref<1x16x16x128xf32, #tpu.memory_space<vmem>>, vector<1x16x16x128xf32>,
    return
  }
  func.func @transform_0(%arg0: i32) -> (i32, i32, i32, i32) {
    %c0_i32 = arith.constant 0 : i32
    %c0_i32_0 = arith.constant 0 : i32
    %c0_i32_1 = arith.constant 0 : i32
    %c0_i32_2 = arith.constant 0 : i32
    return %arg0, %c0_i32, %c0_i32_0, %c0_i32_1 : i32, i32, i32, i32
  }
  func.func @transform_1(%arg0: i32) -> (i32, i32, i32, i32) {
    %c0_i32 = arith.constant 0 : i32
    %c0_i32_0 = arith.constant 0 : i32
    %c0_i32_1 = arith.constant 0 : i32
    %c0_i32_2 = arith.constant 0 : i32
    %c0_i32_3 = arith.constant 0 : i32
    return %c0_i32, %c0_i32_0, %c0_i32_1, %c0_i32_2 : i32, i32, i32, i32
  }
  func.func @transform_2(%arg0: i32) -> (i32, i32, i32, i32) {
    %c0_i32 = arith.constant 0 : i32
    %c0_i32_0 = arith.constant 0 : i32
    %c0_i32_1 = arith.constant 0 : i32
    %c0_i32_2 = arith.constant 0 : i32
    %c0_i32_3 = arith.constant 0 : i32
    return %c0_i32, %c0_i32_0, %c0_i32_1, %c0_i32_2 : i32, i32, i32, i32
  }
  func.func @transform_3(%arg0: i32) -> (i32, i32, i32, i32) {
    %c0_i32 = arith.constant 0 : i32
    %c0_i32_0 = arith.constant 0 : i32
    %c0_i32_1 = arith.constant 0 : i32
    %c0_i32_2 = arith.constant 0 : i32
    return %arg0, %c0_i32, %c0_i32_0, %c0_i32_1 : i32, i32, i32, i32
  }
  func.func @transform_4(%arg0: i32) -> (i32, i32, i32, i32) {
    %c0_i32 = arith.constant 0 : i32
    %c0_i32_0 = arith.constant 0 : i32
    %c0_i32_1 = arith.constant 0 : i32
    %c0_i32_2 = arith.constant 0 : i32
    return %arg0, %c0_i32, %c0_i32_0, %c0_i32_1 : i32, i32, i32, i32
  }
  func.func @transform_5(%arg0: i32) -> (i32, i32, i32, i32) {
    %c0_i32 = arith.constant 0 : i32
    %c0_i32_0 = arith.constant 0 : i32
    %c0_i32_1 = arith.constant 0 : i32
    %c0_i32_2 = arith.constant 0 : i32
    return %arg0, %c0_i32, %c0_i32_0, %c0_i32_1 : i32, i32, i32, i32
  }
}

</mosaic_0001>

<llo_original>
// kernel: basic_block2_forward.5
$region0: #{basic_block2_forward.5}
  #allocation0 [shape = 'u32[]', space=smem, size = 0x4, offset = 0x4, fixed_abs, tag = 'smem constant byte address 0x4 - core index']
  #allocation1 [shape = 'u32[144,128]{1,0:T(1,128)}', space=vmem, size = 0x12000, scoped, tag = 'internal scratch']
  %s0 = inlined_call_operand.vmem [shape: f32[2,16,16,128], index: 0, kind: input, shape index: {}]
  %s1 = inlined_call_operand.vmem [shape: f32[1,1,1,128], index: 1, kind: input, shape index: {}]
  %s2 = inlined_call_operand.vmem [shape: f32[1,1,1,128], index: 2, kind: input, shape index: {}]
  %s3 = inlined_call_operand.vmem [shape: f32[2,1,1,128], index: 3, kind: input, shape index: {}]
  %s4 = inlined_call_operand.vmem [shape: f32[2,1,1,128], index: 4, kind: input, shape index: {}]
  %s5 = inlined_call_operand.vmem [shape: f32[2,16,16,128], index: 5, kind: output, shape index: {}]
  %s6 = sld [smem:[#allocation0]]
  $region53: #{basic_block2_forward.5} parent=0
    _
  %s8 = ssub.s32 1, %s6
  %s9 = scalar_select 0, %s8, %s6
  loop: start=0, step=1, limit=4
  $region2: #{basic_block2_forward.5} parent=0 // loop_pre_header
    _
  $region3: #{basic_block2_forward.5} parent=0 // loop_header
    %s11 = sphi 0, %s15
    %p12 = scmp.ge.s32.totalorder %s11, 4
    %s21 = sphi 0, %s23
    %s24 = sphi 0, %s21
    %s25 = sphi 0, %s24
    %s41 = sphi 0, %s25
    %s45 = sphi 0, %s45
    %s47 = sphi 0, %s45
    %s48 = sphi 0, %s47
    %s62 = sphi 0, %s48
    %s66 = sphi 0, %s66
    %s68 = sphi 0, %s66
    %s69 = sphi 0, %s68
    %s83 = sphi 0, %s69
    %s89 = sphi 0, %s91
    %s92 = sphi 0, %s89
    %s93 = sphi 0, %s92
    %s109 = sphi 0, %s93
    %s115 = sphi 0, %s117
    %s118 = sphi 0, %s115
    %s119 = sphi 0, %s118
    %s135 = sphi 0, %s119
    %s141 = sphi 0, %s143
    %s144 = sphi 0, %s141
    %s145 = sphi 0, %s144
    %s161 = sphi 0, %s145
  $region4: #{basic_block2_forward.5} parent=0 // loop_header_branch
    %14 = sbr.rel (%p12) target = $region8
  $region5: #{basic_block2_forward.5} parent=0 // loop_body
    %s16 = ssub.s32 %s11, 1
    %s17 = ssub.s32 %s11, 2
    %s18 = sadd.s32 %s11, 1
    %s19 = ssub.s32 %s11, %s18
    %p20 = scmp.eq.s32.totalorder %s19, 0
    %s22 = sadd.s32 %s21, 1
    %s23 = scalar_select %p20, %s21, %s22
    %p26 = pneg %p20
    %p27 = scmp.eq.s32.totalorder %s11, 1
    %p28 = por %p26, %p27
    %p29 = scmp.ne.s32.totalorder %s21, %s24
    %p30 = scmp.eq.s32.totalorder %s11, 0
    %p31 = por %p29, %p30
    %p32 = scmp.ne.s32.totalorder %s21, %s24
    %p33 = scmp.eq.s32.totalorder %s16, 1
    %p34 = por %p32, %p33
    %p35 = scmp.ne.s32.totalorder %s24, %s25
    %p36 = scmp.eq.s32.totalorder %s16, 0
    %p37 = por %p35, %p36
    %p38 = scmp.ne.s32.totalorder %s24, %s25
    %p39 = scmp.eq.s32.totalorder %s17, 1
    %p40 = por %p38, %p39
    %p42 = scmp.ne.s32.totalorder %s25, %s41
    %p43 = scmp.eq.s32.totalorder %s17, 0
    %p44 = por %p42, %p43
    %s46 = sadd.s32 %s45, 1
    %p49 = scmp.eq.s32.totalorder %s11, 1
    %p50 = scmp.ne.s32.totalorder %s45, %s47
    %p51 = scmp.eq.s32.totalorder %s11, 0
    %p52 = por %p50, %p51
    %p53 = scmp.ne.s32.totalorder %s45, %s47
    %p54 = scmp.eq.s32.totalorder %s16, 1
    %p55 = por %p53, %p54
    %p56 = scmp.ne.s32.totalorder %s47, %s48
    %p57 = scmp.eq.s32.totalorder %s16, 0
    %p58 = por %p56, %p57
    %p59 = scmp.ne.s32.totalorder %s47, %s48
    %p60 = scmp.eq.s32.totalorder %s17, 1
    %p61 = por %p59, %p60
    %p63 = scmp.ne.s32.totalorder %s48, %s62
    %p64 = scmp.eq.s32.totalorder %s17, 0
    %p65 = por %p63, %p64
    %s67 = sadd.s32 %s66, 1
    %p70 = scmp.eq.s32.totalorder %s11, 1
    %p71 = scmp.ne.s32.totalorder %s66, %s68
    %p72 = scmp.eq.s32.totalorder %s11, 0
    %p73 = por %p71, %p72
    %p74 = scmp.ne.s32.totalorder %s66, %s68
    %p75 = scmp.eq.s32.totalorder %s16, 1
    %p76 = por %p74, %p75
    %p77 = scmp.ne.s32.totalorder %s68, %s69
    %p78 = scmp.eq.s32.totalorder %s16, 0
    %p79 = por %p77, %p78
    %p80 = scmp.ne.s32.totalorder %s68, %s69
    %p81 = scmp.eq.s32.totalorder %s17, 1
    %p82 = por %p80, %p81
    %p84 = scmp.ne.s32.totalorder %s69, %s83
    %p85 = scmp.eq.s32.totalorder %s17, 0
    %p86 = por %p84, %p85
    %s87 = ssub.s32 %s11, %s18
    %p88 = scmp.eq.s32.totalorder %s87, 0
    %s90 = sadd.s32 %s89, 1
    %s91 = scalar_select %p88, %s89, %s90
    %p94 = pneg %p88
    %p95 = scmp.eq.s32.totalorder %s11, 1
    %p96 = por %p94, %p95
    %p97 = scmp.ne.s32.totalorder %s89, %s92
    %p98 = scmp.eq.s32.totalorder %s11, 0
    %p99 = por %p97, %p98
    %p100 = scmp.ne.s32.totalorder %s89, %s92
    %p101 = scmp.eq.s32.totalorder %s16, 1
    %p102 = por %p100, %p101
    %p103 = scmp.ne.s32.totalorder %s92, %s93
    %p104 = scmp.eq.s32.totalorder %s16, 0
    %p105 = por %p103, %p104
    %p106 = scmp.ne.s32.totalorder %s92, %s93
    %p107 = scmp.eq.s32.totalorder %s17, 1
    %p108 = por %p106, %p107
    %p110 = scmp.ne.s32.totalorder %s93, %s109
    %p111 = scmp.eq.s32.totalorder %s17, 0
    %p112 = por %p110, %p111
    %s113 = ssub.s32 %s11, %s18
    %p114 = scmp.eq.s32.totalorder %s113, 0
    %s116 = sadd.s32 %s115, 1
    %s117 = scalar_select %p114, %s115, %s116
    %p120 = pneg %p114
    %p121 = scmp.eq.s32.totalorder %s11, 1
    %p122 = por %p120, %p121
    %p123 = scmp.ne.s32.totalorder %s115, %s118
    %p124 = scmp.eq.s32.totalorder %s11, 0
    %p125 = por %p123, %p124
    %p126 = scmp.ne.s32.totalorder %s115, %s118
    %p127 = scmp.eq.s32.totalorder %s16, 1
    %p128 = por %p126, %p127
    %p129 = scmp.ne.s32.totalorder %s118, %s119
    %p130 = scmp.eq.s32.totalorder %s16, 0
    %p131 = por %p129, %p130
    %p132 = scmp.ne.s32.totalorder %s118, %s119
    %p133 = scmp.eq.s32.totalorder %s17, 1
    %p134 = por %p132, %p133
    %p136 = scmp.ne.s32.totalorder %s119, %s135
    %p137 = scmp.eq.s32.totalorder %s17, 0
    %p138 = por %p136, %p137
    %s139 = ssub.s32 %s11, %s18
    %p140 = scmp.eq.s32.totalorder %s139, 0
    %s142 = sadd.s32 %s141, 1
    %s143 = scalar_select %p140, %s141, %s142
    %p146 = pneg %p140
    %p147 = scmp.eq.s32.totalorder %s11, 1
    %p148 = por %p146, %p147
    %p149 = scmp.ne.s32.totalorder %s141, %s144
    %p150 = scmp.eq.s32.totalorder %s11, 0
    %p151 = por %p149, %p150
    %p152 = scmp.ne.s32.totalorder %s141, %s144
    %p153 = scmp.eq.s32.totalorder %s16, 1
    %p154 = por %p152, %p153
    %p155 = scmp.ne.s32.totalorder %s144, %s145
    %p156 = scmp.eq.s32.totalorder %s16, 0
    %p157 = por %p155, %p156
    %p158 = scmp.ne.s32.totalorder %s144, %s145
    %p159 = scmp.eq.s32.totalorder %s17, 1
    %p160 = por %p158, %p159
    %p162 = scmp.ne.s32.totalorder %s145, %s161
    %p163 = scmp.eq.s32.totalorder %s17, 0
    %p164 = por %p162, %p163
    %p165 = scmp.le.s32.totalorder 1, %s11
    %p166 = scmp.lt.s32.totalorder %s11, 3
    %p167 = pnand %p165, %p166
    %p168 = pneg %p167
    // Predicated region
    $region9: #{basic_block2_forward.5} parent=5 // pred_check
      _
    $region10: #{basic_block2_forward.5} parent=5 // pred_check_branch
      %170 = sbr.rel (%p167) target = $region12
    $region11: #{basic_block2_forward.5} parent=5 // pred_region
      %s171 = ssub.s32 %s11, 1
      // Predicated region
      $region13: #{basic_block2_forward.5} parent=11 // pred_check
        %p172 = pneg %p58
      $region14: #{basic_block2_forward.5} parent=11 // pred_check_branch
        %174 = sbr.rel (%p172) target = $region16
      $region15: #{basic_block2_forward.5} parent=11 // pred_region
        _
      $region16: #{basic_block2_forward.5} parent=11 // pred_fallthru
        _
      // Predicated region
      $region17: #{basic_block2_forward.5} parent=11 // pred_check
        %p175 = pneg %p79
      $region18: #{basic_block2_forward.5} parent=11 // pred_check_branch
        %177 = sbr.rel (%p175) target = $region20
      $region19: #{basic_block2_forward.5} parent=11 // pred_region
        _
      $region20: #{basic_block2_forward.5} parent=11 // pred_fallthru
        _
    $region12: #{basic_block2_forward.5} parent=5 // pred_fallthru
      _
    %p178 = scmp.lt.s32.totalorder %s11, 2
    // Predicated region
    $region21: #{basic_block2_forward.5} parent=5 // pred_check
      %p179 = pneg %p178
    $region22: #{basic_block2_forward.5} parent=5 // pred_check_branch
      %181 = sbr.rel (%p179) target = $region24
    $region23: #{basic_block2_forward.5} parent=5 // pred_region
      // Predicated region
      $region25: #{basic_block2_forward.5} parent=23 // pred_check
        %p182 = pneg %p31
      $region26: #{basic_block2_forward.5} parent=23 // pred_check_branch
        %184 = sbr.rel (%p182) target = $region28
      $region27: #{basic_block2_forward.5} parent=23 // pred_region
        %p185 = scmp.lt.s32.totalorder %s11, 1
        %s186 = scalar_select %p185, %s11, 1
        %s187 = smul.addr %s186, 32
        %s188 = smul.addr %s187, 8
        %s189 = scalar_lea.vmem %s0, %s188
      $region28: #{basic_block2_forward.5} parent=23 // pred_fallthru
        _
      // Predicated region
      $region29: #{basic_block2_forward.5} parent=23 // pred_check
        %p190 = pneg %p99
      $region30: #{basic_block2_forward.5} parent=23 // pred_check_branch
        %192 = sbr.rel (%p190) target = $region32
      $region31: #{basic_block2_forward.5} parent=23 // pred_region
        %p193 = scmp.lt.s32.totalorder %s11, 1
        %s194 = scalar_select %p193, %s11, 1
        %s195 = scalar_lea.vmem %s3, %s194
      $region32: #{basic_block2_forward.5} parent=23 // pred_fallthru
        _
      // Predicated region
      $region33: #{basic_block2_forward.5} parent=23 // pred_check
        %p196 = pneg %p125
      $region34: #{basic_block2_forward.5} parent=23 // pred_check_branch
        %198 = sbr.rel (%p196) target = $region36
      $region35: #{basic_block2_forward.5} parent=23 // pred_region
        %p199 = scmp.lt.s32.totalorder %s11, 1
        %s200 = scalar_select %p199, %s11, 1
        %s201 = scalar_lea.vmem %s4, %s200
      $region36: #{basic_block2_forward.5} parent=23 // pred_fallthru
        _
    $region24: #{basic_block2_forward.5} parent=5 // pred_fallthru
      _
    %p202 = scmp.le.s32.totalorder 1, %s11
    %p203 = scmp.lt.s32.totalorder %s11, 3
    %p204 = pnand %p202, %p203
    %p205 = pneg %p204
    // Predicated region
    $region37: #{basic_block2_forward.5} parent=5 // pred_check
      _
    $region38: #{basic_block2_forward.5} parent=5 // pred_check_branch
      %207 = sbr.rel (%p204) target = $region40
    $region39: #{basic_block2_forward.5} parent=5 // pred_region
      %s208 = ssub.s32 %s11, 1
      %p209 = scmp.lt.s32.totalorder %s16, 1
      %s210 = scalar_select %p209, %s16, 1
      %s211 = smul.addr %s210, 32
      %s212 = smul.addr %s211, 8
      %s213 = scalar_lea.vmem %s0, %s212
      %p214 = pneg %p37
      %p215 = pneg %p34
      %p216 = pneg %p58
      %p217 = pneg %p55
      %p218 = pneg %p79
      %p219 = pneg %p76
      %p220 = scmp.lt.s32.totalorder %s16, 1
      %s221 = scalar_select %p220, %s16, 1
      %s222 = scalar_lea.vmem %s3, %s221
      %p223 = pneg %p105
      %p224 = pneg %p102
      %p225 = scmp.lt.s32.totalorder %s16, 1
      %s226 = scalar_select %p225, %s16, 1
      %s227 = scalar_lea.vmem %s4, %s226
      %p228 = pneg %p131
      %p229 = pneg %p128
      %p230 = pneg %p157
      %p231 = pneg %p154
      %p232 = scmp.lt.s32.totalorder %s16, 1
      %s233 = scalar_select %p232, %s16, 1
      %s234 = smul.addr %s233, 32
      %s235 = smul.addr %s234, 8
      %s236 = scalar_lea.vmem %s5, %s235
      %p237 = scmp.lt.s32.totalorder %s16, 1
      %s238 = scalar_select %p237, %s16, 1
      %s239 = smul.addr %s238, 32
      %s240 = smul.addr %s239, 8
      %s241 = scalar_lea.vmem %s0, %s240
      %p242 = scmp.lt.s32.totalorder %s16, 1
      %s243 = scalar_select %p242, %s16, 1
      %s244 = scalar_lea.vmem %s3, %s243
      %p245 = scmp.lt.s32.totalorder %s16, 1
      %s246 = scalar_select %p245, %s16, 1
      %s247 = scalar_lea.vmem %s4, %s246
      %p248 = scmp.lt.s32.totalorder %s16, 1
      %s249 = scalar_select %p248, %s16, 1
      %s250 = smul.addr %s249, 32
      %s251 = smul.addr %s250, 8
      %s252 = scalar_lea.vmem %s5, %s251
      %v253 = vld [vmem:[%s241] sm:$0xff]
      %v254 = vld [vmem:[%s241 + $0x8] sm:$0xff]
      %v255 = vld [vmem:[%s241 + $0x10] sm:$0xff]
      %v256 = vld [vmem:[%s241 + $0x18] sm:$0xff]
      %v257 = vld [vmem:[%s241 + $0x20] sm:$0xff]
      %v258 = vld [vmem:[%s241 + $0x28] sm:$0xff]
      %v259 = vld [vmem:[%s241 + $0x30] sm:$0xff]
      %v260 = vld [vmem:[%s241 + $0x38] sm:$0xff]
      %v261 = vld [vmem:[%s241 + $0x40] sm:$0xff]
      %v262 = vld [vmem:[%s241 + $0x48] sm:$0xff]
      %v263 = vld [vmem:[%s241 + $0x50] sm:$0xff]
      %v264 = vld [vmem:[%s241 + $0x58] sm:$0xff]
      %v265 = vld [vmem:[%s241 + $0x60] sm:$0xff]
      %v266 = vld [vmem:[%s241 + $0x68] sm:$0xff]
      %v267 = vld [vmem:[%s241 + $0x70] sm:$0xff]
      %v268 = vld [vmem:[%s241 + $0x78] sm:$0xff]
      %v269 = vld [vmem:[%s241 + $0x80] sm:$0xff]
      %v270 = vld [vmem:[%s241 + $0x88] sm:$0xff]
      %v271 = vld [vmem:[%s241 + $0x90] sm:$0xff]
      %v272 = vld [vmem:[%s241 + $0x98] sm:$0xff]
      %v273 = vld [vmem:[%s241 + $0xa0] sm:$0xff]
      %v274 = vld [vmem:[%s241 + $0xa8] sm:$0xff]
      %v275 = vld [vmem:[%s241 + $0xb0] sm:$0xff]
      %v276 = vld [vmem:[%s241 + $0xb8] sm:$0xff]
      %v277 = vld [vmem:[%s241 + $0xc0] sm:$0xff]
      %v278 = vld [vmem:[%s241 + $0xc8] sm:$0xff]
      %v279 = vld [vmem:[%s241 + $0xd0] sm:$0xff]
      %v280 = vld [vmem:[%s241 + $0xd8] sm:$0xff]
      %v281 = vld [vmem:[%s241 + $0xe0] sm:$0xff]
      %v282 = vld [vmem:[%s241 + $0xe8] sm:$0xff]
      %v283 = vld [vmem:[%s241 + $0xf0] sm:$0xff]
      %v284 = vld [vmem:[%s241 + $0xf8] sm:$0xff]
      %v285 = vld [vmem:[%s1] sm:$0x1]
      %v287 = vlaneseq
      %v288 = vshrl.u32 %v287, 7
      %v289 = vsub.s32 0, %v288
      %v290 = vrot.slane %v285, %v289
      %v292 = vmul.f32 %v253, %v290
      %v293 = vmul.f32 %v254, %v290
      %v294 = vmul.f32 %v255, %v290
      %v295 = vmul.f32 %v256, %v290
      %v296 = vmul.f32 %v257, %v290
      %v297 = vmul.f32 %v258, %v290
      %v298 = vmul.f32 %v259, %v290
      %v299 = vmul.f32 %v260, %v290
      %v300 = vmul.f32 %v261, %v290
      %v301 = vmul.f32 %v262, %v290
      %v302 = vmul.f32 %v263, %v290
      %v303 = vmul.f32 %v264, %v290
      %v304 = vmul.f32 %v265, %v290
      %v305 = vmul.f32 %v266, %v290
      %v306 = vmul.f32 %v267, %v290
      %v307 = vmul.f32 %v268, %v290
      %v308 = vmul.f32 %v269, %v290
      %v309 = vmul.f32 %v270, %v290
      %v310 = vmul.f32 %v271, %v290
      %v311 = vmul.f32 %v272, %v290
      %v312 = vmul.f32 %v273, %v290
      %v313 = vmul.f32 %v274, %v290
      %v314 = vmul.f32 %v275, %v290
      %v315 = vmul.f32 %v276, %v290
      %v316 = vmul.f32 %v277, %v290
      %v317 = vmul.f32 %v278, %v290
      %v318 = vmul.f32 %v279, %v290
      %v319 = vmul.f32 %v280, %v290
      %v320 = vmul.f32 %v281, %v290
      %v321 = vmul.f32 %v282, %v290
      %v322 = vmul.f32 %v283, %v290
      %v323 = vmul.f32 %v284, %v290
      %v324 = vld [vmem:[%s2] sm:$0x1]
      %v326 = vlaneseq
      %v327 = vshrl.u32 %v326, 7
      %v328 = vsub.s32 0, %v327
      %v329 = vrot.slane %v324, %v328
      %v331 = vadd.f32 %v292, %v329
      %v332 = vadd.f32 %v293, %v329
      %v333 = vadd.f32 %v294, %v329
      %v334 = vadd.f32 %v295, %v329
      %v335 = vadd.f32 %v296, %v329
      %v336 = vadd.f32 %v297, %v329
      %v337 = vadd.f32 %v298, %v329
      %v338 = vadd.f32 %v299, %v329
      %v339 = vadd.f32 %v300, %v329
      %v340 = vadd.f32 %v301, %v329
      %v341 = vadd.f32 %v302, %v329
      %v342 = vadd.f32 %v303, %v329
      %v343 = vadd.f32 %v304, %v329
      %v344 = vadd.f32 %v305, %v329
      %v345 = vadd.f32 %v306, %v329
      %v346 = vadd.f32 %v307, %v329
      %v347 = vadd.f32 %v308, %v329
      %v348 = vadd.f32 %v309, %v329
      %v349 = vadd.f32 %v310, %v329
      %v350 = vadd.f32 %v311, %v329
      %v351 = vadd.f32 %v312, %v329
      %v352 = vadd.f32 %v313, %v329
      %v353 = vadd.f32 %v314, %v329
      %v354 = vadd.f32 %v315, %v329
      %v355 = vadd.f32 %v316, %v329
      %v356 = vadd.f32 %v317, %v329
      %v357 = vadd.f32 %v318, %v329
      %v358 = vadd.f32 %v319, %v329
      %v359 = vadd.f32 %v320, %v329
      %v360 = vadd.f32 %v321, %v329
      %v361 = vadd.f32 %v322, %v329
      %v362 = vadd.f32 %v323, %v329
      %v363 = vmax.f32 %v331, 0.0
      %v364 = vmax.f32 %v332, 0.0
      %v365 = vmax.f32 %v333, 0.0
      %v366 = vmax.f32 %v334, 0.0
      %v367 = vmax.f32 %v335, 0.0
      %v368 = vmax.f32 %v336, 0.0
      %v369 = vmax.f32 %v337, 0.0
      %v370 = vmax.f32 %v338, 0.0
      %v371 = vmax.f32 %v339, 0.0
      %v372 = vmax.f32 %v340, 0.0
      %v373 = vmax.f32 %v341, 0.0
      %v374 = vmax.f32 %v342, 0.0
      %v375 = vmax.f32 %v343, 0.0
      %v376 = vmax.f32 %v344, 0.0
      %v377 = vmax.f32 %v345, 0.0
      %v378 = vmax.f32 %v346, 0.0
      %v379 = vmax.f32 %v347, 0.0
      %v380 = vmax.f32 %v348, 0.0
      %v381 = vmax.f32 %v349, 0.0
      %v382 = vmax.f32 %v350, 0.0
      %v383 = vmax.f32 %v351, 0.0
      %v384 = vmax.f32 %v352, 0.0
      %v385 = vmax.f32 %v353, 0.0
      %v386 = vmax.f32 %v354, 0.0
      %v387 = vmax.f32 %v355, 0.0
      %v388 = vmax.f32 %v356, 0.0
      %v389 = vmax.f32 %v357, 0.0
      %v390 = vmax.f32 %v358, 0.0
      %v391 = vmax.f32 %v359, 0.0
      %v392 = vmax.f32 %v360, 0.0
      %v393 = vmax.f32 %v361, 0.0
      %v394 = vmax.f32 %v362, 0.0
      %v395 = vld [vmem:[%s244] sm:$0x1]
      %v397 = vlaneseq
      %v398 = vshrl.u32 %v397, 7
      %v399 = vsub.s32 0, %v398
      %v400 = vrot.slane %v395, %v399
      %vm402 = vcmp.ge.f32.partialorder %v253, %v400
      %vm403 = vcmp.ge.f32.partialorder %v254, %v400
      %vm404 = vcmp.ge.f32.partialorder %v255, %v400
      %vm405 = vcmp.ge.f32.partialorder %v256, %v400
      %vm406 = vcmp.ge.f32.partialorder %v257, %v400
      %vm407 = vcmp.ge.f32.partialorder %v258, %v400
      %vm408 = vcmp.ge.f32.partialorder %v259, %v400
      %vm409 = vcmp.ge.f32.partialorder %v260, %v400
      %vm410 = vcmp.ge.f32.partialorder %v261, %v400
      %vm411 = vcmp.ge.f32.partialorder %v262, %v400
      %vm412 = vcmp.ge.f32.partialorder %v263, %v400
      %vm413 = vcmp.ge.f32.partialorder %v264, %v400
      %vm414 = vcmp.ge.f32.partialorder %v265, %v400
      %vm415 = vcmp.ge.f32.partialorder %v266, %v400
      %vm416 = vcmp.ge.f32.partialorder %v267, %v400
      %vm417 = vcmp.ge.f32.partialorder %v268, %v400
      %vm418 = vcmp.ge.f32.partialorder %v269, %v400
      %vm419 = vcmp.ge.f32.partialorder %v270, %v400
      %vm420 = vcmp.ge.f32.partialorder %v271, %v400
      %vm421 = vcmp.ge.f32.partialorder %v272, %v400
      %vm422 = vcmp.ge.f32.partialorder %v273, %v400
      %vm423 = vcmp.ge.f32.partialorder %v274, %v400
      %vm424 = vcmp.ge.f32.partialorder %v275, %v400
      %vm425 = vcmp.ge.f32.partialorder %v276, %v400
      %vm426 = vcmp.ge.f32.partialorder %v277, %v400
      %vm427 = vcmp.ge.f32.partialorder %v278, %v400
      %vm428 = vcmp.ge.f32.partialorder %v279, %v400
      %vm429 = vcmp.ge.f32.partialorder %v280, %v400
      %vm430 = vcmp.ge.f32.partialorder %v281, %v400
      %vm431 = vcmp.ge.f32.partialorder %v282, %v400
      %vm432 = vcmp.ge.f32.partialorder %v283, %v400
      %vm433 = vcmp.ge.f32.partialorder %v284, %v400
      %v434 = vld [vmem:[%s247] sm:$0x1]
      %v436 = vlaneseq
      %v437 = vshrl.u32 %v436, 7
      %v438 = vsub.s32 0, %v437
      %v439 = vrot.slane %v434, %v438
      %vm441 = vcmp.le.f32.partialorder %v253, %v439
      %vm442 = vcmp.le.f32.partialorder %v254, %v439
      %vm443 = vcmp.le.f32.partialorder %v255, %v439
      %vm444 = vcmp.le.f32.partialorder %v256, %v439
      %vm445 = vcmp.le.f32.partialorder %v257, %v439
      %vm446 = vcmp.le.f32.partialorder %v258, %v439
      %vm447 = vcmp.le.f32.partialorder %v259, %v439
      %vm448 = vcmp.le.f32.partialorder %v260, %v439
      %vm449 = vcmp.le.f32.partialorder %v261, %v439
      %vm450 = vcmp.le.f32.partialorder %v262, %v439
      %vm451 = vcmp.le.f32.partialorder %v263, %v439
      %vm452 = vcmp.le.f32.partialorder %v264, %v439
      %vm453 = vcmp.le.f32.partialorder %v265, %v439
      %vm454 = vcmp.le.f32.partialorder %v266, %v439
      %vm455 = vcmp.le.f32.partialorder %v267, %v439
      %vm456 = vcmp.le.f32.partialorder %v268, %v439
      %vm457 = vcmp.le.f32.partialorder %v269, %v439
      %vm458 = vcmp.le.f32.partialorder %v270, %v439
      %vm459 = vcmp.le.f32.partialorder %v271, %v439
      %vm460 = vcmp.le.f32.partialorder %v272, %v439
      %vm461 = vcmp.le.f32.partialorder %v273, %v439
      %vm462 = vcmp.le.f32.partialorder %v274, %v439
      %vm463 = vcmp.le.f32.partialorder %v275, %v439
      %vm464 = vcmp.le.f32.partialorder %v276, %v439
      %vm465 = vcmp.le.f32.partialorder %v277, %v439
      %vm466 = vcmp.le.f32.partialorder %v278, %v439
      %vm467 = vcmp.le.f32.partialorder %v279, %v439
      %vm468 = vcmp.le.f32.partialorder %v280, %v439
      %vm469 = vcmp.le.f32.partialorder %v281, %v439
      %vm470 = vcmp.le.f32.partialorder %v282, %v439
      %vm471 = vcmp.le.f32.partialorder %v283, %v439
      %vm472 = vcmp.le.f32.partialorder %v284, %v439
      %vm473 = vmand %vm402, %vm441
      %vm474 = vmand %vm403, %vm442
      %vm475 = vmand %vm404, %vm443
      %vm476 = vmand %vm405, %vm444
      %vm477 = vmand %vm406, %vm445
      %vm478 = vmand %vm407, %vm446
      %vm479 = vmand %vm408, %vm447
      %vm480 = vmand %vm409, %vm448
      %vm481 = vmand %vm410, %vm449
      %vm482 = vmand %vm411, %vm450
      %vm483 = vmand %vm412, %vm451
      %vm484 = vmand %vm413, %vm452
      %vm485 = vmand %vm414, %vm453
      %vm486 = vmand %vm415, %vm454
      %vm487 = vmand %vm416, %vm455
      %vm488 = vmand %vm417, %vm456
      %vm489 = vmand %vm418, %vm457
      %vm490 = vmand %vm419, %vm458
      %vm491 = vmand %vm420, %vm459
      %vm492 = vmand %vm421, %vm460
      %vm493 = vmand %vm422, %vm461
      %vm494 = vmand %vm423, %vm462
      %vm495 = vmand %vm424, %vm463
      %vm496 = vmand %vm425, %vm464
      %vm497 = vmand %vm426, %vm465
      %vm498 = vmand %vm427, %vm466
      %vm499 = vmand %vm428, %vm467
      %vm500 = vmand %vm429, %vm468
      %vm501 = vmand %vm430, %vm469
      %vm502 = vmand %vm431, %vm470
      %vm503 = vmand %vm432, %vm471
      %vm504 = vmand %vm433, %vm472
      %v505 = vsel %vm473, %v363, 0.0
      %v506 = vsel %vm474, %v364, 0.0
      %v507 = vsel %vm475, %v365, 0.0
      %v508 = vsel %vm476, %v366, 0.0
      %v509 = vsel %vm477, %v367, 0.0
      %v510 = vsel %vm478, %v368, 0.0
      %v511 = vsel %vm479, %v369, 0.0
      %v512 = vsel %vm480, %v370, 0.0
      %v513 = vsel %vm481, %v371, 0.0
      %v514 = vsel %vm482, %v372, 0.0
      %v515 = vsel %vm483, %v373, 0.0
      %v516 = vsel %vm484, %v374, 0.0
      %v517 = vsel %vm485, %v375, 0.0
      %v518 = vsel %vm486, %v376, 0.0
      %v519 = vsel %vm487, %v377, 0.0
      %v520 = vsel %vm488, %v378, 0.0
      %v521 = vsel %vm489, %v379, 0.0
      %v522 = vsel %vm490, %v380, 0.0
      %v523 = vsel %vm491, %v381, 0.0
      %v524 = vsel %vm492, %v382, 0.0
      %v525 = vsel %vm493, %v383, 0.0
      %v526 = vsel %vm494, %v384, 0.0
      %v527 = vsel %vm495, %v385, 0.0
      %v528 = vsel %vm496, %v386, 0.0
      %v529 = vsel %vm497, %v387, 0.0
      %v530 = vsel %vm498, %v388, 0.0
      %v531 = vsel %vm499, %v389, 0.0
      %v532 = vsel %vm500, %v390, 0.0
      %v533 = vsel %vm501, %v391, 0.0
      %v534 = vsel %vm502, %v392, 0.0
      %v535 = vsel %vm503, %v393, 0.0
      %v536 = vsel %vm504, %v394, 0.0
      %537 = vst [vmem:[%s252] sm:$0xff] %v505
      %538 = vst [vmem:[%s252 + $0x8] sm:$0xff] %v506
      %539 = vst [vmem:[%s252 + $0x10] sm:$0xff] %v507
      %540 = vst [vmem:[%s252 + $0x18] sm:$0xff] %v508
      %541 = vst [vmem:[%s252 + $0x20] sm:$0xff] %v509
      %542 = vst [vmem:[%s252 + $0x28] sm:$0xff] %v510
      %543 = vst [vmem:[%s252 + $0x30] sm:$0xff] %v511
      %544 = vst [vmem:[%s252 + $0x38] sm:$0xff] %v512
      %545 = vst [vmem:[%s252 + $0x40] sm:$0xff] %v513
      %546 = vst [vmem:[%s252 + $0x48] sm:$0xff] %v514
      %547 = vst [vmem:[%s252 + $0x50] sm:$0xff] %v515
      %548 = vst [vmem:[%s252 + $0x58] sm:$0xff] %v516
      %549 = vst [vmem:[%s252 + $0x60] sm:$0xff] %v517
      %550 = vst [vmem:[%s252 + $0x68] sm:$0xff] %v518
      %551 = vst [vmem:[%s252 + $0x70] sm:$0xff] %v519
      %552 = vst [vmem:[%s252 + $0x78] sm:$0xff] %v520
      %553 = vst [vmem:[%s252 + $0x80] sm:$0xff] %v521
      %554 = vst [vmem:[%s252 + $0x88] sm:$0xff] %v522
      %555 = vst [vmem:[%s252 + $0x90] sm:$0xff] %v523
      %556 = vst [vmem:[%s252 + $0x98] sm:$0xff] %v524
      %557 = vst [vmem:[%s252 + $0xa0] sm:$0xff] %v525
      %558 = vst [vmem:[%s252 + $0xa8] sm:$0xff] %v526
      %559 = vst [vmem:[%s252 + $0xb0] sm:$0xff] %v527
      %560 = vst [vmem:[%s252 + $0xb8] sm:$0xff] %v528
      %561 = vst [vmem:[%s252 + $0xc0] sm:$0xff] %v529
      %562 = vst [vmem:[%s252 + $0xc8] sm:$0xff] %v530
      %563 = vst [vmem:[%s252 + $0xd0] sm:$0xff] %v531
      %564 = vst [vmem:[%s252 + $0xd8] sm:$0xff] %v532
      %565 = vst [vmem:[%s252 + $0xe0] sm:$0xff] %v533
      %566 = vst [vmem:[%s252 + $0xe8] sm:$0xff] %v534
      %567 = vst [vmem:[%s252 + $0xf0] sm:$0xff] %v535
      %568 = vst [vmem:[%s252 + $0xf8] sm:$0xff] %v536
      %p569 = scmp.lt.s32.totalorder %s16, 1
      %s570 = scalar_select %p569, %s16, 1
      %s571 = smul.addr %s570, 32
      %s572 = smul.addr %s571, 8
      %s573 = scalar_lea.vmem %s5, %s572
      // Predicated region
      $region41: #{basic_block2_forward.5} parent=39 // pred_check
        %p574 = pneg %p154
      $region42: #{basic_block2_forward.5} parent=39 // pred_check_branch
        %576 = sbr.rel (%p574) target = $region44
      $region43: #{basic_block2_forward.5} parent=39 // pred_region
        _
      $region44: #{basic_block2_forward.5} parent=39 // pred_fallthru
        _
    $region40: #{basic_block2_forward.5} parent=5 // pred_fallthru
      _
    %p577 = scmp.le.s32.totalorder 2, %s11
    // Predicated region
    $region45: #{basic_block2_forward.5} parent=5 // pred_check
      %p578 = pneg %p577
    $region46: #{basic_block2_forward.5} parent=5 // pred_check_branch
      %580 = sbr.rel (%p578) target = $region48
    $region47: #{basic_block2_forward.5} parent=5 // pred_region
      %s581 = ssub.s32 %s11, 2
      // Predicated region
      $region49: #{basic_block2_forward.5} parent=47 // pred_check
        %p582 = pneg %p160
      $region50: #{basic_block2_forward.5} parent=47 // pred_check_branch
        %584 = sbr.rel (%p582) target = $region52
      $region51: #{basic_block2_forward.5} parent=47 // pred_region
        %p585 = scmp.lt.s32.totalorder %s17, 1
        %s586 = scalar_select %p585, %s17, 1
        %s587 = smul.addr %s586, 32
        %s588 = smul.addr %s587, 8
        %s589 = scalar_lea.vmem %s5, %s588
      $region52: #{basic_block2_forward.5} parent=47 // pred_fallthru
        _
    $region48: #{basic_block2_forward.5} parent=5 // pred_fallthru
      _
  $region6: #{basic_block2_forward.5} parent=0 // loop_footer
    %s15 = sadd.s32 1, %s11
  $region7: #{basic_block2_forward.5} parent=0 // loop_footer_branch
    %10 = sbr.rel target = $region3
  $region8: #{basic_block2_forward.5} parent=0 // loop_exit
    _

// kernel: basic_block2_forward.4
$region0: #{basic_block2_forward.4}
  #allocation0 [shape = 'u32[]', space=smem, size = 0x4, offset = 0x4, fixed_abs, tag = 'smem constant byte address 0x4 - core index']
  #allocation1 [shape = 'u32[144,128]{1,0:T(1,128)}', space=vmem, size = 0x12000, scoped, tag = 'internal scratch']
  #allocation2 [shape = 'f32[256,128]{1,0:T(8,128)}', space=vmem, size = 0x20000, scoped, tag = 'scratch operand']
  %s0 = inlined_call_operand.vmem [shape: bf16[2,18,18,128], index: 0, kind: input, shape index: {}]
  %s1 = inlined_call_operand.vmem [shape: bf16[3,3,128,128], index: 1, kind: input, shape index: {}]
  %s2 = inlined_call_operand.vmem [shape: f32[2,16,16,128], index: 2, kind: output, shape index: {0}]
  %s3 = inlined_call_operand.vmem [shape: f32[2,1,128], index: 3, kind: output, shape index: {1}]
  %s4 = inlined_call_operand.vmem [shape: f32[2,1,128], index: 4, kind: output, shape index: {2}]
  %5 = xla_tuple %s2, %s3, %s4
  %s6 = sld [smem:[#allocation0]]
  $region57: #{basic_block2_forward.4} parent=0
    _
  %s8 = ssub.s32 1, %s6
  %s9 = scalar_select 0, %s8, %s6
  loop: start=0, step=1, limit=4
  $region2: #{basic_block2_forward.4} parent=0 // loop_pre_header
    _
  $region3: #{basic_block2_forward.4} parent=0 // loop_header
    %s11 = sphi 0, %s15
    %p12 = scmp.ge.s32.totalorder %s11, 4
    %s21 = sphi 0, %s23
    %s24 = sphi 0, %s21
    %s25 = sphi 0, %s24
    %s41 = sphi 0, %s25
    %s45 = sphi 0, %s45
    %s47 = sphi 0, %s45
    %s48 = sphi 0, %s47
    %s62 = sphi 0, %s48
    %s68 = sphi 0, %s70
    %s71 = sphi 0, %s68
    %s72 = sphi 0, %s71
    %s88 = sphi 0, %s72
    %s94 = sphi 0, %s96
    %s97 = sphi 0, %s94
    %s98 = sphi 0, %s97
    %s114 = sphi 0, %s98
    %s120 = sphi 0, %s122
    %s123 = sphi 0, %s120
    %s124 = sphi 0, %s123
    %s140 = sphi 0, %s124
  $region4: #{basic_block2_forward.4} parent=0 // loop_header_branch
    %14 = sbr.rel (%p12) target = $region8
  $region5: #{basic_block2_forward.4} parent=0 // loop_body
    %s16 = ssub.s32 %s11, 1
    %s17 = ssub.s32 %s11, 2
    %s18 = sadd.s32 %s11, 1
    %s19 = ssub.s32 %s11, %s18
    %p20 = scmp.eq.s32.totalorder %s19, 0
    %s22 = sadd.s32 %s21, 1
    %s23 = scalar_select %p20, %s21, %s22
    %p26 = pneg %p20
    %p27 = scmp.eq.s32.totalorder %s11, 1
    %p28 = por %p26, %p27
    %p29 = scmp.ne.s32.totalorder %s21, %s24
    %p30 = scmp.eq.s32.totalorder %s11, 0
    %p31 = por %p29, %p30
    %p32 = scmp.ne.s32.totalorder %s21, %s24
    %p33 = scmp.eq.s32.totalorder %s16, 1
    %p34 = por %p32, %p33
    %p35 = scmp.ne.s32.totalorder %s24, %s25
    %p36 = scmp.eq.s32.totalorder %s16, 0
    %p37 = por %p35, %p36
    %p38 = scmp.ne.s32.totalorder %s24, %s25
    %p39 = scmp.eq.s32.totalorder %s17, 1
    %p40 = por %p38, %p39
    %p42 = scmp.ne.s32.totalorder %s25, %s41
    %p43 = scmp.eq.s32.totalorder %s17, 0
    %p44 = por %p42, %p43
    %s46 = sadd.s32 %s45, 1
    %p49 = scmp.eq.s32.totalorder %s11, 1
    %p50 = scmp.ne.s32.totalorder %s45, %s47
    %p51 = scmp.eq.s32.totalorder %s11, 0
    %p52 = por %p50, %p51
    %p53 = scmp.ne.s32.totalorder %s45, %s47
    %p54 = scmp.eq.s32.totalorder %s16, 1
    %p55 = por %p53, %p54
    %p56 = scmp.ne.s32.totalorder %s47, %s48
    %p57 = scmp.eq.s32.totalorder %s16, 0
    %p58 = por %p56, %p57
    %p59 = scmp.ne.s32.totalorder %s47, %s48
    %p60 = scmp.eq.s32.totalorder %s17, 1
    %p61 = por %p59, %p60
    %p63 = scmp.ne.s32.totalorder %s48, %s62
    %p64 = scmp.eq.s32.totalorder %s17, 0
    %p65 = por %p63, %p64
    %s66 = ssub.s32 %s11, %s18
    %p67 = scmp.eq.s32.totalorder %s66, 0
    %s69 = sadd.s32 %s68, 1
    %s70 = scalar_select %p67, %s68, %s69
    %p73 = pneg %p67
    %p74 = scmp.eq.s32.totalorder %s11, 1
    %p75 = por %p73, %p74
    %p76 = scmp.ne.s32.totalorder %s68, %s71
    %p77 = scmp.eq.s32.totalorder %s11, 0
    %p78 = por %p76, %p77
    %p79 = scmp.ne.s32.totalorder %s68, %s71
    %p80 = scmp.eq.s32.totalorder %s16, 1
    %p81 = por %p79, %p80
    %p82 = scmp.ne.s32.totalorder %s71, %s72
    %p83 = scmp.eq.s32.totalorder %s16, 0
    %p84 = por %p82, %p83
    %p85 = scmp.ne.s32.totalorder %s71, %s72
    %p86 = scmp.eq.s32.totalorder %s17, 1
    %p87 = por %p85, %p86
    %p89 = scmp.ne.s32.totalorder %s72, %s88
    %p90 = scmp.eq.s32.totalorder %s17, 0
    %p91 = por %p89, %p90
    %s92 = ssub.s32 %s11, %s18
    %p93 = scmp.eq.s32.totalorder %s92, 0
    %s95 = sadd.s32 %s94, 1
    %s96 = scalar_select %p93, %s94, %s95
    %p99 = pneg %p93
    %p100 = scmp.eq.s32.totalorder %s11, 1
    %p101 = por %p99, %p100
    %p102 = scmp.ne.s32.totalorder %s94, %s97
    %p103 = scmp.eq.s32.totalorder %s11, 0
    %p104 = por %p102, %p103
    %p105 = scmp.ne.s32.totalorder %s94, %s97
    %p106 = scmp.eq.s32.totalorder %s16, 1
    %p107 = por %p105, %p106
    %p108 = scmp.ne.s32.totalorder %s97, %s98
    %p109 = scmp.eq.s32.totalorder %s16, 0
    %p110 = por %p108, %p109
    %p111 = scmp.ne.s32.totalorder %s97, %s98
    %p112 = scmp.eq.s32.totalorder %s17, 1
    %p113 = por %p111, %p112
    %p115 = scmp.ne.s32.totalorder %s98, %s114
    %p116 = scmp.eq.s32.totalorder %s17, 0
    %p117 = por %p115, %p116
    %s118 = ssub.s32 %s11, %s18
    %p119 = scmp.eq.s32.totalorder %s118, 0
    %s121 = sadd.s32 %s120, 1
    %s122 = scalar_select %p119, %s120, %s121
    %p125 = pneg %p119
    %p126 = scmp.eq.s32.totalorder %s11, 1
    %p127 = por %p125, %p126
    %p128 = scmp.ne.s32.totalorder %s120, %s123
    %p129 = scmp.eq.s32.totalorder %s11, 0
    %p130 = por %p128, %p129
    %p131 = scmp.ne.s32.totalorder %s120, %s123
    %p132 = scmp.eq.s32.totalorder %s16, 1
    %p133 = por %p131, %p132
    %p134 = scmp.ne.s32.totalorder %s123, %s124
    %p135 = scmp.eq.s32.totalorder %s16, 0
    %p136 = por %p134, %p135
    %p137 = scmp.ne.s32.totalorder %s123, %s124
    %p138 = scmp.eq.s32.totalorder %s17, 1
    %p139 = por %p137, %p138
    %p141 = scmp.ne.s32.totalorder %s124, %s140
    %p142 = scmp.eq.s32.totalorder %s17, 0
    %p143 = por %p141, %p142
    %p144 = scmp.le.s32.totalorder 1, %s11
    %p145 = scmp.lt.s32.totalorder %s11, 3
    %p146 = pnand %p144, %p145
    %p147 = pneg %p146
    // Predicated region
    $region9: #{basic_block2_forward.4} parent=5 // pred_check
      _
    $region10: #{basic_block2_forward.4} parent=5 // pred_check_branch
      %149 = sbr.rel (%p146) target = $region12
    $region11: #{basic_block2_forward.4} parent=5 // pred_region
      %s150 = ssub.s32 %s11, 1
      // Predicated region
      $region13: #{basic_block2_forward.4} parent=11 // pred_check
        %p151 = pneg %p58
      $region14: #{basic_block2_forward.4} parent=11 // pred_check_branch
        %153 = sbr.rel (%p151) target = $region16
      $region15: #{basic_block2_forward.4} parent=11 // pred_region
        _
      $region16: #{basic_block2_forward.4} parent=11 // pred_fallthru
        _
    $region12: #{basic_block2_forward.4} parent=5 // pred_fallthru
      _
    %p154 = scmp.lt.s32.totalorder %s11, 2
    // Predicated region
    $region17: #{basic_block2_forward.4} parent=5 // pred_check
      %p155 = pneg %p154
    $region18: #{basic_block2_forward.4} parent=5 // pred_check_branch
      %157 = sbr.rel (%p155) target = $region20
    $region19: #{basic_block2_forward.4} parent=5 // pred_region
      // Predicated region
      $region21: #{basic_block2_forward.4} parent=19 // pred_check
        %p158 = pneg %p31
      $region22: #{basic_block2_forward.4} parent=19 // pred_check_branch
        %160 = sbr.rel (%p158) target = $region24
      $region23: #{basic_block2_forward.4} parent=19 // pred_region
        %p161 = scmp.lt.s32.totalorder %s11, 1
        %s162 = scalar_select %p161, %s11, 1
        %s163 = smul.addr %s162, 54
        %s164 = smul.addr %s163, 4
        %s165 = scalar_lea.vmem %s0, %s164
      $region24: #{basic_block2_forward.4} parent=19 // pred_fallthru
        _
    $region20: #{basic_block2_forward.4} parent=5 // pred_fallthru
      _
    %p166 = scmp.le.s32.totalorder 1, %s11
    %p167 = scmp.lt.s32.totalorder %s11, 3
    %p168 = pnand %p166, %p167
    %p169 = pneg %p168
    // Predicated region
    $region25: #{basic_block2_forward.4} parent=5 // pred_check
      _
    $region26: #{basic_block2_forward.4} parent=5 // pred_check_branch
      %171 = sbr.rel (%p168) target = $region28
    $region27: #{basic_block2_forward.4} parent=5 // pred_region
      %s172 = ssub.s32 %s11, 1
      %p173 = scmp.lt.s32.totalorder %s16, 1
      %s174 = scalar_select %p173, %s16, 1
      %s175 = smul.addr %s174, 54
      %s176 = smul.addr %s175, 4
      %s177 = scalar_lea.vmem %s0, %s176
      %p178 = pneg %p37
      %p179 = pneg %p34
      %p180 = pneg %p58
      %p181 = pneg %p55
      %p182 = pneg %p84
      %p183 = pneg %p81
      %p184 = scmp.lt.s32.totalorder %s16, 1
      %s185 = scalar_select %p184, %s16, 1
      %s186 = smul.addr %s185, 32
      %s187 = smul.addr %s186, 8
      %s188 = scalar_lea.vmem %s2, %s187
      %p189 = pneg %p110
      %p190 = pneg %p107
      %p191 = scmp.lt.s32.totalorder %s16, 1
      %s192 = scalar_select %p191, %s16, 1
      %s193 = scalar_lea.vmem %s3, %s192
      %p194 = pneg %p136
      %p195 = pneg %p133
      %p196 = scmp.lt.s32.totalorder %s16, 1
      %s197 = scalar_select %p196, %s16, 1
      %s198 = scalar_lea.vmem %s4, %s197
      %p199 = scmp.lt.s32.totalorder %s16, 1
      %s200 = scalar_select %p199, %s16, 1
      %s201 = smul.addr %s200, 54
      %s202 = smul.addr %s201, 4
      %s203 = scalar_lea.vmem %s0, %s202
      %p204 = scmp.lt.s32.totalorder %s16, 1
      %s205 = scalar_select %p204, %s16, 1
      %s206 = smul.addr %s205, 32
      %s207 = smul.addr %s206, 8
      %s208 = scalar_lea.vmem %s2, %s207
      %p209 = scmp.lt.s32.totalorder %s16, 1
      %s210 = scalar_select %p209, %s16, 1
      %s211 = scalar_lea.vmem %s3, %s210
      %p212 = scmp.lt.s32.totalorder %s16, 1
      %s213 = scalar_select %p212, %s16, 1
      %s214 = scalar_lea.vmem %s4, %s213
      %v216 = vld [vmem:[%s203] sm:$0xf]
      %v217 = vld [vmem:[%s203 + $0x4] sm:$0xf]
      %v218 = vld [vmem:[%s203 + $0x8] sm:$0x1]
      %v219 = vld [vmem:[%s203 + $0xc] sm:$0xf]
      %v220 = vld [vmem:[%s203 + $0x10] sm:$0xf]
      %v221 = vld [vmem:[%s203 + $0x14] sm:$0x1]
      %v222 = vld [vmem:[%s203 + $0x18] sm:$0xf]
      %v223 = vld [vmem:[%s203 + $0x1c] sm:$0xf]
      %v224 = vld [vmem:[%s203 + $0x20] sm:$0x1]
      %v225 = vld [vmem:[%s203 + $0x24] sm:$0xf]
      %v226 = vld [vmem:[%s203 + $0x28] sm:$0xf]
      %v227 = vld [vmem:[%s203 + $0x2c] sm:$0x1]
      %v228 = vld [vmem:[%s203 + $0x30] sm:$0xf]
      %v229 = vld [vmem:[%s203 + $0x34] sm:$0xf]
      %v230 = vld [vmem:[%s203 + $0x38] sm:$0x1]
      %v231 = vld [vmem:[%s203 + $0x3c] sm:$0xf]
      %v232 = vld [vmem:[%s203 + $0x40] sm:$0xf]
      %v233 = vld [vmem:[%s203 + $0x44] sm:$0x1]
      %v234 = vld [vmem:[%s203 + $0x48] sm:$0xf]
      %v235 = vld [vmem:[%s203 + $0x4c] sm:$0xf]
      %v236 = vld [vmem:[%s203 + $0x50] sm:$0x1]
      %v237 = vld [vmem:[%s203 + $0x54] sm:$0xf]
      %v238 = vld [vmem:[%s203 + $0x58] sm:$0xf]
      %v239 = vld [vmem:[%s203 + $0x5c] sm:$0x1]
      %v240 = vld [vmem:[%s203 + $0x60] sm:$0xf]
      %v241 = vld [vmem:[%s203 + $0x64] sm:$0xf]
      %v242 = vld [vmem:[%s203 + $0x68] sm:$0x1]
      %v243 = vld [vmem:[%s203 + $0x6c] sm:$0xf]
      %v244 = vld [vmem:[%s203 + $0x70] sm:$0xf]
      %v245 = vld [vmem:[%s203 + $0x74] sm:$0x1]
      %v246 = vld [vmem:[%s203 + $0x78] sm:$0xf]
      %v247 = vld [vmem:[%s203 + $0x7c] sm:$0xf]
      %v248 = vld [vmem:[%s203 + $0x80] sm:$0x1]
      %v249 = vld [vmem:[%s203 + $0x84] sm:$0xf]
      %v250 = vld [vmem:[%s203 + $0x88] sm:$0xf]
      %v251 = vld [vmem:[%s203 + $0x8c] sm:$0x1]
      %v252 = vld [vmem:[%s203 + $0x90] sm:$0xf]
      %v253 = vld [vmem:[%s203 + $0x94] sm:$0xf]
      %v254 = vld [vmem:[%s203 + $0x98] sm:$0x1]
      %v255 = vld [vmem:[%s203 + $0x9c] sm:$0xf]
      %v256 = vld [vmem:[%s203 + $0xa0] sm:$0xf]
      %v257 = vld [vmem:[%s203 + $0xa4] sm:$0x1]
      %v258 = vld [vmem:[%s203 + $0xa8] sm:$0xf]
      %v259 = vld [vmem:[%s203 + $0xac] sm:$0xf]
      %v260 = vld [vmem:[%s203 + $0xb0] sm:$0x1]
      %v261 = vld [vmem:[%s203 + $0xb4] sm:$0xf]
      %v262 = vld [vmem:[%s203 + $0xb8] sm:$0xf]
      %v263 = vld [vmem:[%s203 + $0xbc] sm:$0x1]
      %v264 = vld [vmem:[%s203 + $0xc0] sm:$0xf]
      %v265 = vld [vmem:[%s203 + $0xc4] sm:$0xf]
      %v266 = vld [vmem:[%s203 + $0xc8] sm:$0x1]
      %v267 = vld [vmem:[%s203 + $0xcc] sm:$0xf]
      %v268 = vld [vmem:[%s203 + $0xd0] sm:$0xf]
      %v269 = vld [vmem:[%s203 + $0xd4] sm:$0x1]
      %270 = vst [vmem:[#allocation2] sm:$0xff] 0.0
      %271 = vst [vmem:[#allocation2 + $0x8] sm:$0xff] 0.0
      %272 = vst [vmem:[#allocation2 + $0x10] sm:$0xff] 0.0
      %273 = vst [vmem:[#allocation2 + $0x18] sm:$0xff] 0.0
      %274 = vst [vmem:[#allocation2 + $0x20] sm:$0xff] 0.0
      %275 = vst [vmem:[#allocation2 + $0x28] sm:$0xff] 0.0
      %276 = vst [vmem:[#allocation2 + $0x30] sm:$0xff] 0.0
      %277 = vst [vmem:[#allocation2 + $0x38] sm:$0xff] 0.0
      %278 = vst [vmem:[#allocation2 + $0x40] sm:$0xff] 0.0
      %279 = vst [vmem:[#allocation2 + $0x48] sm:$0xff] 0.0
      %280 = vst [vmem:[#allocation2 + $0x50] sm:$0xff] 0.0
      %281 = vst [vmem:[#allocation2 + $0x58] sm:$0xff] 0.0
      %282 = vst [vmem:[#allocation2 + $0x60] sm:$0xff] 0.0
      %283 = vst [vmem:[#allocation2 + $0x68] sm:$0xff] 0.0
      %284 = vst [vmem:[#allocation2 + $0x70] sm:$0xff] 0.0
      %285 = vst [vmem:[#allocation2 + $0x78] sm:$0xff] 0.0
      %286 = vst [vmem:[#allocation2 + $0x80] sm:$0xff] 0.0
      %287 = vst [vmem:[#allocation2 + $0x88] sm:$0xff] 0.0
      %288 = vst [vmem:[#allocation2 + $0x90] sm:$0xff] 0.0
      %289 = vst [vmem:[#allocation2 + $0x98] sm:$0xff] 0.0
      %290 = vst [vmem:[#allocation2 + $0xa0] sm:$0xff] 0.0
      %291 = vst [vmem:[#allocation2 + $0xa8] sm:$0xff] 0.0
      %292 = vst [vmem:[#allocation2 + $0xb0] sm:$0xff] 0.0
      %293 = vst [vmem:[#allocation2 + $0xb8] sm:$0xff] 0.0
      %294 = vst [vmem:[#allocation2 + $0xc0] sm:$0xff] 0.0
      %295 = vst [vmem:[#allocation2 + $0xc8] sm:$0xff] 0.0
      %296 = vst [vmem:[#allocation2 + $0xd0] sm:$0xff] 0.0
      %297 = vst [vmem:[#allocation2 + $0xd8] sm:$0xff] 0.0
      %298 = vst [vmem:[#allocation2 + $0xe0] sm:$0xff] 0.0
      %299 = vst [vmem:[#allocation2 + $0xe8] sm:$0xff] 0.0
      %300 = vst [vmem:[#allocation2 + $0xf0] sm:$0xff] 0.0
      %301 = vst [vmem:[#allocation2 + $0xf8] sm:$0xff] 0.0
      %v302 = vld [vmem:[#allocation2] sm:$0xff]
      %v303 = vld [vmem:[#allocation2 + $0x8] sm:$0xff]
      %v304 = vld [vmem:[#allocation2 + $0x10] sm:$0xff]
      %v305 = vld [vmem:[#allocation2 + $0x18] sm:$0xff]
      %v306 = vld [vmem:[#allocation2 + $0x20] sm:$0xff]
      %v307 = vld [vmem:[#allocation2 + $0x28] sm:$0xff]
      %v308 = vld [vmem:[#allocation2 + $0x30] sm:$0xff]
      %v309 = vld [vmem:[#allocation2 + $0x38] sm:$0xff]
      %v310 = vld [vmem:[#allocation2 + $0x40] sm:$0xff]
      %v311 = vld [vmem:[#allocation2 + $0x48] sm:$0xff]
      %v312 = vld [vmem:[#allocation2 + $0x50] sm:$0xff]
      %v313 = vld [vmem:[#allocation2 + $0x58] sm:$0xff]
      %v314 = vld [vmem:[#allocation2 + $0x60] sm:$0xff]
      %v315 = vld [vmem:[#allocation2 + $0x68] sm:$0xff]
      %v316 = vld [vmem:[#allocation2 + $0x70] sm:$0xff]
      %v317 = vld [vmem:[#allocation2 + $0x78] sm:$0xff]
      %v318 = vld [vmem:[#allocation2 + $0x80] sm:$0xff]
      %v319 = vld [vmem:[#allocation2 + $0x88] sm:$0xff]
      %v320 = vld [vmem:[#allocation2 + $0x90] sm:$0xff]
      %v321 = vld [vmem:[#allocation2 + $0x98] sm:$0xff]
      %v322 = vld [vmem:[#allocation2 + $0xa0] sm:$0xff]
      %v323 = vld [vmem:[#allocation2 + $0xa8] sm:$0xff]
      %v324 = vld [vmem:[#allocation2 + $0xb0] sm:$0xff]
      %v325 = vld [vmem:[#allocation2 + $0xb8] sm:$0xff]
      %v326 = vld [vmem:[#allocation2 + $0xc0] sm:$0xff]
      %v327 = vld [vmem:[#allocation2 + $0xc8] sm:$0xff]
      %v328 = vld [vmem:[#allocation2 + $0xd0] sm:$0xff]
      %v329 = vld [vmem:[#allocation2 + $0xd8] sm:$0xff]
      %v330 = vld [vmem:[#allocation2 + $0xe0] sm:$0xff]
      %v331 = vld [vmem:[#allocation2 + $0xe8] sm:$0xff]
      %v332 = vld [vmem:[#allocation2 + $0xf0] sm:$0xff]
      %v333 = vld [vmem:[#allocation2 + $0xf8] sm:$0xff]
      %v334 = vld [vmem:[%s1] sm:$0xf]
      %v335 = vld [vmem:[%s1 + $0x4] sm:$0xf]
      %v336 = vld [vmem:[%s1 + $0x8] sm:$0xf]
      %v337 = vld [vmem:[%s1 + $0xc] sm:$0xf]
      %v338 = vld [vmem:[%s1 + $0x10] sm:$0xf]
      %v339 = vld [vmem:[%s1 + $0x14] sm:$0xf]
      %v340 = vld [vmem:[%s1 + $0x18] sm:$0xf]
      %v341 = vld [vmem:[%s1 + $0x1c] sm:$0xf]
      %v342 = vld [vmem:[%s1 + $0x20] sm:$0xf]
      %v343 = vld [vmem:[%s1 + $0x24] sm:$0xf]
      %v344 = vld [vmem:[%s1 + $0x28] sm:$0xf]
      %v345 = vld [vmem:[%s1 + $0x2c] sm:$0xf]
      %v346 = vld [vmem:[%s1 + $0x30] sm:$0xf]
      %v347 = vld [vmem:[%s1 + $0x34] sm:$0xf]
      %v348 = vld [vmem:[%s1 + $0x38] sm:$0xf]
      %v349 = vld [vmem:[%s1 + $0x3c] sm:$0xf]
      %v382 = vunpack.c.l.b16 %v216
      %v383 = vunpack.c.l.b16 %v217
      %v384 = vunpack.c.l.b16 %v219
      %v385 = vunpack.c.l.b16 %v220
      %v386 = vunpack.c.l.b16 %v222
      %v387 = vunpack.c.l.b16 %v223
      %v388 = vunpack.c.l.b16 %v225
      %v389 = vunpack.c.l.b16 %v226
      %v390 = vunpack.c.l.b16 %v228
      %v391 = vunpack.c.l.b16 %v229
      %v392 = vunpack.c.l.b16 %v231
      %v393 = vunpack.c.l.b16 %v232
      %v394 = vunpack.c.l.b16 %v234
      %v395 = vunpack.c.l.b16 %v235
      %v396 = vunpack.c.l.b16 %v237
      %v397 = vunpack.c.l.b16 %v238
      %v398 = vunpack.c.l.b16 %v240
      %v399 = vunpack.c.l.b16 %v241
      %v400 = vunpack.c.l.b16 %v243
      %v401 = vunpack.c.l.b16 %v244
      %v402 = vunpack.c.l.b16 %v246
      %v403 = vunpack.c.l.b16 %v247
      %v404 = vunpack.c.l.b16 %v249
      %v405 = vunpack.c.l.b16 %v250
      %v406 = vunpack.c.l.b16 %v252
      %v407 = vunpack.c.l.b16 %v253
      %v408 = vunpack.c.l.b16 %v255
      %v409 = vunpack.c.l.b16 %v256
      %v410 = vunpack.c.l.b16 %v258
      %v411 = vunpack.c.l.b16 %v259
      %v412 = vunpack.c.l.b16 %v261
      %v413 = vunpack.c.l.b16 %v262
      %v414 = vpack.c.b16 %v383, %v382
      %v415 = vpack.c.b16 %v385, %v384
      %v416 = vpack.c.b16 %v387, %v386
      %v417 = vpack.c.b16 %v389, %v388
      %v418 = vpack.c.b16 %v391, %v390
      %v419 = vpack.c.b16 %v393, %v392
      %v420 = vpack.c.b16 %v395, %v394
      %v421 = vpack.c.b16 %v397, %v396
      %v422 = vpack.c.b16 %v399, %v398
      %v423 = vpack.c.b16 %v401, %v400
      %v424 = vpack.c.b16 %v403, %v402
      %v425 = vpack.c.b16 %v405, %v404
      %v426 = vpack.c.b16 %v407, %v406
      %v427 = vpack.c.b16 %v409, %v408
      %v428 = vpack.c.b16 %v411, %v410
      %v429 = vpack.c.b16 %v413, %v412
      %v462 = vunpack.c.l.b16 %v334
      %v463 = vunpack.c.l.b16 %v335
      %v464 = vunpack.c.l.b16 %v336
      %v465 = vunpack.c.l.b16 %v337
      %v466 = vunpack.c.l.b16 %v338
      %v467 = vunpack.c.l.b16 %v339
      %v468 = vunpack.c.l.b16 %v340
      %v469 = vunpack.c.l.b16 %v341
      %v470 = vunpack.c.l.b16 %v342
      %v471 = vunpack.c.l.b16 %v343
      %v472 = vunpack.c.l.b16 %v344
      %v473 = vunpack.c.l.b16 %v345
      %v474 = vunpack.c.l.b16 %v346
      %v475 = vunpack.c.l.b16 %v347
      %v476 = vunpack.c.l.b16 %v348
      %v477 = vunpack.c.l.b16 %v349
      %v478 = vpack.c.b16 %v463, %v462
      %v479 = vpack.c.b16 %v465, %v464
      %v480 = vpack.c.b16 %v467, %v466
      %v481 = vpack.c.b16 %v469, %v468
      %v482 = vpack.c.b16 %v471, %v470
      %v483 = vpack.c.b16 %v473, %v472
      %v484 = vpack.c.b16 %v475, %v474
      %v485 = vpack.c.b16 %v477, %v476
      %494 = vmatprep.subr.bf16.mxu0 0
      %495 = vmatpush1.bf16.msra.mxu0 %v478
      %496 = vmatprep.subr.bf16.mxu0 0
      %497 = vmatpush1.bf16.msra.mxu0 %v479
      %498 = vmatprep.subr.bf16.mxu0 0
      %499 = vmatpush1.bf16.msra.mxu0 %v480
      %500 = vmatprep.subr.bf16.mxu0 0
      %501 = vmatpush1.bf16.msra.mxu0 %v481
      %502 = vmatprep.subr.bf16.mxu0 0
      %503 = vmatpush1.bf16.msra.mxu0 %v482
      %504 = vmatprep.subr.bf16.mxu0 0
      %505 = vmatpush1.bf16.msra.mxu0 %v483
      %506 = vmatprep.subr.bf16.mxu0 0
      %507 = vmatpush1.bf16.msra.mxu0 %v484
      %508 = vmatprep.subr.bf16.mxu0 0
      %509 = vmatpush1.bf16.msra.mxu0 %v485
      %510 = vmatprep.subr.bf16.mxu0 0
      %511 = vmatpush1.bf16.msra.mxu0 0
      %512 = vmatprep.subr.bf16.mxu0 0
      %513 = vmatpush1.bf16.msra.mxu0 0
      %514 = vmatprep.subr.bf16.mxu0 0
      %515 = vmatpush1.bf16.msra.mxu0 0
      %516 = vmatprep.subr.bf16.mxu0 0
      %517 = vmatpush1.bf16.msra.mxu0 0
      %518 = vmatprep.subr.bf16.mxu0 0
      %519 = vmatpush1.bf16.msra.mxu0 0
      %520 = vmatprep.subr.bf16.mxu0 0
      %521 = vmatpush1.bf16.msra.mxu0 0
      %522 = vmatprep.subr.bf16.mxu0 0
      %523 = vmatpush1.bf16.msra.mxu0 0
      %524 = vmatprep.subr.bf16.mxu0 0
      %525 = vmatpush1.bf16.msra.mxu0 0
      %526 = vmatprep.mubr.bf16.mxu0 0
      %527 = vmatmul.mubr.bf16.gmra.mrb[0].mxu0 %v414
      %v528 = vpop.f32.mrb[0].mxu0
      %v529 = vadd.f32 0.0, %v528
      %v530 = vpop.f32.mrb[0].mxu0
      %v531 = vpop.f32.mrb[0].mxu0
      %v532 = vadd.f32 0.0, %v531
      %v533 = vpop.f32.mrb[0].mxu0
      %534 = vmatprep.mubr.bf16.mxu0 0
      %535 = vmatmul.mubr.bf16.gmra.mrb[0].mxu0 %v415
      %v536 = vpop.f32.mrb[0].mxu0
      %v537 = vadd.f32 0.0, %v536
      %v538 = vpop.f32.mrb[0].mxu0
      %v539 = vpop.f32.mrb[0].mxu0
      %v540 = vadd.f32 0.0, %v539
      %v541 = vpop.f32.mrb[0].mxu0
      %542 = vmatprep.mubr.bf16.mxu0 0
      %543 = vmatmul.mubr.bf16.gmra.mrb[0].mxu0 %v416
      %v544 = vpop.f32.mrb[0].mxu0
      %v545 = vadd.f32 0.0, %v544
      %v546 = vpop.f32.mrb[0].mxu0
      %v547 = vpop.f32.mrb[0].mxu0
      %v548 = vadd.f32 0.0, %v547
      %v549 = vpop.f32.mrb[0].mxu0
      %550 = vmatprep.mubr.bf16.mxu0 0
      %551 = vmatmul.mubr.bf16.gmra.mrb[0].mxu0 %v417
      %v552 = vpop.f32.mrb[0].mxu0
      %v553 = vadd.f32 0.0, %v552
      %v554 = vpop.f32.mrb[0].mxu0
      %v555 = vpop.f32.mrb[0].mxu0
      %v556 = vadd.f32 0.0, %v555
      %v557 = vpop.f32.mrb[0].mxu0
      %558 = vmatprep.mubr.bf16.mxu0 0
      %559 = vmatmul.mubr.bf16.gmra.mrb[0].mxu0 %v418
      %v560 = vpop.f32.mrb[0].mxu0
      %v561 = vadd.f32 0.0, %v560
      %v562 = vpop.f32.mrb[0].mxu0
      %v563 = vpop.f32.mrb[0].mxu0
      %v564 = vadd.f32 0.0, %v563
      %v565 = vpop.f32.mrb[0].mxu0
      %566 = vmatprep.mubr.bf16.mxu0 0
      %567 = vmatmul.mubr.bf16.gmra.mrb[0].mxu0 %v419
      %v568 = vpop.f32.mrb[0].mxu0
      %v569 = vadd.f32 0.0, %v568
      %v570 = vpop.f32.mrb[0].mxu0
      %v571 = vpop.f32.mrb[0].mxu0
      %v572 = vadd.f32 0.0, %v571
      %v573 = vpop.f32.mrb[0].mxu0
      %574 = vmatprep.mubr.bf16.mxu0 0
      %575 = vmatmul.mubr.bf16.gmra.mrb[0].mxu0 %v420
      %v576 = vpop.f32.mrb[0].mxu0
      %v577 = vadd.f32 0.0, %v576
      %v578 = vpop.f32.mrb[0].mxu0
      %v579 = vpop.f32.mrb[0].mxu0
      %v580 = vadd.f32 0.0, %v579
      %v581 = vpop.f32.mrb[0].mxu0
      %582 = vmatprep.mubr.bf16.mxu0 0
      %583 = vmatmul.mubr.bf16.gmra.mrb[0].mxu0 %v421
      %v584 = vpop.f32.mrb[0].mxu0
      %v585 = vadd.f32 0.0, %v584
      %v586 = vpop.f32.mrb[0].mxu0
      %v587 = vpop.f32.mrb[0].mxu0
      %v588 = vadd.f32 0.0, %v587
      %v589 = vpop.f32.mrb[0].mxu0
      %590 = vmatprep.mubr.bf16.mxu0 0
      %591 = vmatmul.mubr.bf16.gmra.mrb[0].mxu0 %v422
      %v592 = vpop.f32.mrb[0].mxu0
      %v593 = vadd.f32 0.0, %v592
      %v594 = vpop.f32.mrb[0].mxu0
      %v595 = vpop.f32.mrb[0].mxu0
      %v596 = vadd.f32 0.0, %v595
      %v597 = vpop.f32.mrb[0].mxu0
      %598 = vmatprep.mubr.bf16.mxu0 0
      %599 = vmatmul.mubr.bf16.gmra.mrb[0].mxu0 %v423
      %v600 = vpop.f32.mrb[0].mxu0
      %v601 = vadd.f32 0.0, %v600
      %v602 = vpop.f32.mrb[0].mxu0
      %v603 = vpop.f32.mrb[0].mxu0
      %v604 = vadd.f32 0.0, %v603
      %v605 = vpop.f32.mrb[0].mxu0
      %606 = vmatprep.mubr.bf16.mxu0 0
      %607 = vmatmul.mubr.bf16.gmra.mrb[0].mxu0 %v424
      %v608 = vpop.f32.mrb[0].mxu0
      %v609 = vadd.f32 0.0, %v608
      %v610 = vpop.f32.mrb[0].mxu0
      %v611 = vpop.f32.mrb[0].mxu0
      %v612 = vadd.f32 0.0, %v611
      %v613 = vpop.f32.mrb[0].mxu0
      %614 = vmatprep.mubr.bf16.mxu0 0
      %615 = vmatmul.mubr.bf16.gmra.mrb[0].mxu0 %v425
      %v616 = vpop.f32.mrb[0].mxu0
      %v617 = vadd.f32 0.0, %v616
      %v618 = vpop.f32.mrb[0].mxu0
      %v619 = vpop.f32.mrb[0].mxu0
      %v620 = vadd.f32 0.0, %v619
      %v621 = vpop.f32.mrb[0].mxu0
      %622 = vmatprep.mubr.bf16.mxu0 0
      %623 = vmatmul.mubr.bf16.gmra.mrb[0].mxu0 %v426
      %v624 = vpop.f32.mrb[0].mxu0
      %v625 = vadd.f32 0.0, %v624
      %v626 = vpop.f32.mrb[0].mxu0
      %v627 = vpop.f32.mrb[0].mxu0
      %v628 = vadd.f32 0.0, %v627
      %v629 = vpop.f32.mrb[0].mxu0
      %630 = vmatprep.mubr.bf16.mxu0 0
      %631 = vmatmul.mubr.bf16.gmra.mrb[0].mxu0 %v427
      %v632 = vpop.f32.mrb[0].mxu0
      %v633 = vadd.f32 0.0, %v632
      %v634 = vpop.f32.mrb[0].mxu0
      %v635 = vpop.f32.mrb[0].mxu0
      %v636 = vadd.f32 0.0, %v635
      %v637 = vpop.f32.mrb[0].mxu0
      %638 = vmatprep.mubr.bf16.mxu0 0
      %639 = vmatmul.mubr.bf16.gmra.mrb[0].mxu0 %v428
      %v640 = vpop.f32.mrb[0].mxu0
      %v641 = vadd.f32 0.0, %v640
      %v642 = vpop.f32.mrb[0].mxu0
      %v643 = vpop.f32.mrb[0].mxu0
      %v644 = vadd.f32 0.0, %v643
      %v645 = vpop.f32.mrb[0].mxu0
      %646 = vmatprep.mubr.bf16.mxu0 0
      %647 = vmatmul.mubr.bf16.gmra.mrb[0].mxu0 %v429
      %v648 = vpop.f32.mrb[0].mxu0
      %v649 = vadd.f32 0.0, %v648
      %v650 = vpop.f32.mrb[0].mxu0
      %v651 = vpop.f32.mrb[0].mxu0
      %v652 = vadd.f32 0.0, %v651
      %v653 = vpop.f32.mrb[0].mxu0
      %654 = vdwg.mxu0
      %v655 = vadd.f32 %v302, %v529
      %v656 = vadd.f32 %v303, %v532
      %v657 = vadd.f32 %v304, %v537
      %v658 = vadd.f32 %v305, %v540
      %v659 = vadd.f32 %v306, %v545
      %v660 = vadd.f32 %v307, %v548
      %v661 = vadd.f32 %v308, %v553
      %v662 = vadd.f32 %v309, %v556
      %v663 = vadd.f32 %v310, %v561
      %v664 = vadd.f32 %v311, %v564
      %v665 = vadd.f32 %v312, %v569
      %v666 = vadd.f32 %v313, %v572
      %v667 = vadd.f32 %v314, %v577
      %v668 = vadd.f32 %v315, %v580
      %v669 = vadd.f32 %v316, %v585
      %v670 = vadd.f32 %v317, %v588
      %v671 = vadd.f32 %v318, %v593
      %v672 = vadd.f32 %v319, %v596
      %v673 = vadd.f32 %v320, %v601
      %v674 = vadd.f32 %v321, %v604
      %v675 = vadd.f32 %v322, %v609
      %v676 = vadd.f32 %v323, %v612
      %v677 = vadd.f32 %v324, %v617
      %v678 = vadd.f32 %v325, %v620
      %v679 = vadd.f32 %v326, %v625
      %v680 = vadd.f32 %v327, %v628
      %v681 = vadd.f32 %v328, %v633
      %v682 = vadd.f32 %v329, %v636
      %v683 = vadd.f32 %v330, %v641
      %v684 = vadd.f32 %v331, %v644
      %v685 = vadd.f32 %v332, %v649
      %v686 = vadd.f32 %v333, %v652
      %687 = vst [vmem:[#allocation2] sm:$0xff] %v655
      %688 = vst [vmem:[#allocation2 + $0x8] sm:$0xff] %v656
      %689 = vst [vmem:[#allocation2 + $0x10] sm:$0xff] %v657
      %690 = vst [vmem:[#allocation2 + $0x18] sm:$0xff] %v658
      %691 = vst [vmem:[#allocation2 + $0x20] sm:$0xff] %v659
      %692 = vst [vmem:[#allocation2 + $0x28] sm:$0xff] %v660
      %693 = vst [vmem:[#allocation2 + $0x30] sm:$0xff] %v661
      %694 = vst [vmem:[#allocation2 + $0x38] sm:$0xff] %v662
      %695 = vst [vmem:[#allocation2 + $0x40] sm:$0xff] %v663
      %696 = vst [vmem:[#allocation2 + $0x48] sm:$0xff] %v664
      %697 = vst [vmem:[#allocation2 + $0x50] sm:$0xff] %v665
      %698 = vst [vmem:[#allocation2 + $0x58] sm:$0xff] %v666
      %699 = vst [vmem:[#allocation2 + $0x60] sm:$0xff] %v667
      %700 = vst [vmem:[#allocation2 + $0x68] sm:$0xff] %v668
      %701 = vst [vmem:[#allocation2 + $0x70] sm:$0xff] %v669
      %702 = vst [vmem:[#allocation2 + $0x78] sm:$0xff] %v670
      %703 = vst [vmem:[#allocation2 + $0x80] sm:$0xff] %v671
      %704 = vst [vmem:[#allocation2 + $0x88] sm:$0xff] %v672
      %705 = vst [vmem:[#allocation2 + $0x90] sm:$0xff] %v673
      %706 = vst [vmem:[#allocation2 + $0x98] sm:$0xff] %v674
      %707 = vst [vmem:[#allocation2 + $0xa0] sm:$0xff] %v675
      %708 = vst [vmem:[#allocation2 + $0xa8] sm:$0xff] %v676
      %709 = vst [vmem:[#allocation2 + $0xb0] sm:$0xff] %v677
      %710 = vst [vmem:[#allocation2 + $0xb8] sm:$0xff] %v678
      %711 = vst [vmem:[#allocation2 + $0xc0] sm:$0xff] %v679
      %712 = vst [vmem:[#allocation2 + $0xc8] sm:$0xff] %v680
      %713 = vst [vmem:[#allocation2 + $0xd0] sm:$0xff] %v681
      %714 = vst [vmem:[#allocation2 + $0xd8] sm:$0xff] %v682
      %715 = vst [vmem:[#allocation2 + $0xe0] sm:$0xff] %v683
      %716 = vst [vmem:[#allocation2 + $0xe8] sm:$0xff] %v684
      %717 = vst [vmem:[#allocation2 + $0xf0] sm:$0xff] %v685
      %718 = vst [vmem:[#allocation2 + $0xf8] sm:$0xff] %v686
      %vm719 = vsmask.f32 3328
      %vm720 = vsmask.f32 7440
      %vm721 = vmor %vm719, %vm720
      %v723 = vshrl.u32 %v216, 16
      %v725 = vrot.slane %v723, 4
      %v726 = vshll.u32 %v216, 16
      %v728 = vrot.slane %v726, 5
      %v729 = vor.u32 %v725, %v728
      %v730 = vrot.slane %v729, 4
      %v732 = vshll.u32 %v217, 16
      %v734 = vrot.slane %v732, 5
      %v735 = vsel %vm721, %v730, %v734
      %v736 = vshrl.u32 %v217, 16
      %v738 = vrot.slane %v736, 4
      %v739 = vor.u32 %v738, %v734
      %v740 = vrot.slane %v739, 4
      %v742 = vshll.u32 %v218, 16
      %v744 = vrot.slane %v742, 5
      %v745 = vsel %vm721, %v740, %v744
      %v747 = vshrl.u32 %v219, 16
      %v749 = vrot.slane %v747, 4
      %v750 = vshll.u32 %v219, 16
      %v752 = vrot.slane %v750, 5
      %v753 = vor.u32 %v749, %v752
      %v754 = vrot.slane %v753, 4
      %v756 = vshll.u32 %v220, 16
      %v758 = vrot.slane %v756, 5
      %v759 = vsel %vm721, %v754, %v758
      %v760 = vshrl.u32 %v220, 16
      %v762 = vrot.slane %v760, 4
      %v763 = vor.u32 %v762, %v758
      %v764 = vrot.slane %v763, 4
      %v766 = vshll.u32 %v221, 16
      %v768 = vrot.slane %v766, 5
      %v769 = vsel %vm721, %v764, %v768
      %v771 = vshrl.u32 %v222, 16
      %v773 = vrot.slane %v771, 4
      %v774 = vshll.u32 %v222, 16
      %v776 = vrot.slane %v774, 5
      %v777 = vor.u32 %v773, %v776
      %v778 = vrot.slane %v777, 4
      %v780 = vshll.u32 %v223, 16
      %v782 = vrot.slane %v780, 5
      %v783 = vsel %vm721, %v778, %v782
      %v784 = vshrl.u32 %v223, 16
      %v786 = vrot.slane %v784, 4
      %v787 = vor.u32 %v786, %v782
      %v788 = vrot.slane %v787, 4
      %v790 = vshll.u32 %v224, 16
      %v792 = vrot.slane %v790, 5
      %v793 = vsel %vm721, %v788, %v792
      %v795 = vshrl.u32 %v225, 16
      %v797 = vrot.slane %v795, 4
      %v798 = vshll.u32 %v225, 16
      %v800 = vrot.slane %v798, 5
      %v801 = vor.u32 %v797, %v800
      %v802 = vrot.slane %v801, 4
      %v804 = vshll.u32 %v226, 16
      %v806 = vrot.slane %v804, 5
      %v807 = vsel %vm721, %v802, %v806
      %v808 = vshrl.u32 %v226, 16
      %v810 = vrot.slane %v808, 4
      %v811 = vor.u32 %v810, %v806
      %v812 = vrot.slane %v811, 4
      %v814 = vshll.u32 %v227, 16
      %v816 = vrot.slane %v814, 5
      %v817 = vsel %vm721, %v812, %v816
      %v819 = vshrl.u32 %v228, 16
      %v821 = vrot.slane %v819, 4
      %v822 = vshll.u32 %v228, 16
      %v824 = vrot.slane %v822, 5
      %v825 = vor.u32 %v821, %v824
      %v826 = vrot.slane %v825, 4
      %v828 = vshll.u32 %v229, 16
      %v830 = vrot.slane %v828, 5
      %v831 = vsel %vm721, %v826, %v830
      %v832 = vshrl.u32 %v229, 16
      %v834 = vrot.slane %v832, 4
      %v835 = vor.u32 %v834, %v830
      %v836 = vrot.slane %v835, 4
      %v838 = vshll.u32 %v230, 16
      %v840 = vrot.slane %v838, 5
      %v841 = vsel %vm721, %v836, %v840
      %v843 = vshrl.u32 %v231, 16
      %v845 = vrot.slane %v843, 4
      %v846 = vshll.u32 %v231, 16
      %v848 = vrot.slane %v846, 5
      %v849 = vor.u32 %v845, %v848
      %v850 = vrot.slane %v849, 4
      %v852 = vshll.u32 %v232, 16
      %v854 = vrot.slane %v852, 5
      %v855 = vsel %vm721, %v850, %v854
      %v856 = vshrl.u32 %v232, 16
      %v858 = vrot.slane %v856, 4
      %v859 = vor.u32 %v858, %v854
      %v860 = vrot.slane %v859, 4
      %v862 = vshll.u32 %v233, 16
      %v864 = vrot.slane %v862, 5
      %v865 = vsel %vm721, %v860, %v864
      %v867 = vshrl.u32 %v234, 16
      %v869 = vrot.slane %v867, 4
      %v870 = vshll.u32 %v234, 16
      %v872 = vrot.slane %v870, 5
      %v873 = vor.u32 %v869, %v872
      %v874 = vrot.slane %v873, 4
      %v876 = vshll.u32 %v235, 16
      %v878 = vrot.slane %v876, 5
      %v879 = vsel %vm721, %v874, %v878
      %v880 = vshrl.u32 %v235, 16
      %v882 = vrot.slane %v880, 4
      %v883 = vor.u32 %v882, %v878
      %v884 = vrot.slane %v883, 4
      %v886 = vshll.u32 %v236, 16
      %v888 = vrot.slane %v886, 5
      %v889 = vsel %vm721, %v884, %v888
      %v891 = vshrl.u32 %v237, 16
      %v893 = vrot.slane %v891, 4
      %v894 = vshll.u32 %v237, 16
      %v896 = vrot.slane %v894, 5
      %v897 = vor.u32 %v893, %v896
      %v898 = vrot.slane %v897, 4
      %v900 = vshll.u32 %v238, 16
      %v902 = vrot.slane %v900, 5
      %v903 = vsel %vm721, %v898, %v902
      %v904 = vshrl.u32 %v238, 16
      %v906 = vrot.slane %v904, 4
      %v907 = vor.u32 %v906, %v902
      %v908 = vrot.slane %v907, 4
      %v910 = vshll.u32 %v239, 16
      %v912 = vrot.slane %v910, 5
      %v913 = vsel %vm721, %v908, %v912
      %v915 = vshrl.u32 %v240, 16
      %v917 = vrot.slane %v915, 4
      %v918 = vshll.u32 %v240, 16
      %v920 = vrot.slane %v918, 5
      %v921 = vor.u32 %v917, %v920
      %v922 = vrot.slane %v921, 4
      %v924 = vshll.u32 %v241, 16
      %v926 = vrot.slane %v924, 5
      %v927 = vsel %vm721, %v922, %v926
      %v928 = vshrl.u32 %v241, 16
      %v930 = vrot.slane %v928, 4
      %v931 = vor.u32 %v930, %v926
      %v932 = vrot.slane %v931, 4
      %v934 = vshll.u32 %v242, 16
      %v936 = vrot.slane %v934, 5
      %v937 = vsel %vm721, %v932, %v936
      %v939 = vshrl.u32 %v243, 16
      %v941 = vrot.slane %v939, 4
      %v942 = vshll.u32 %v243, 16
      %v944 = vrot.slane %v942, 5
      %v945 = vor.u32 %v941, %v944
      %v946 = vrot.slane %v945, 4
      %v948 = vshll.u32 %v244, 16
      %v950 = vrot.slane %v948, 5
      %v951 = vsel %vm721, %v946, %v950
      %v952 = vshrl.u32 %v244, 16
      %v954 = vrot.slane %v952, 4
      %v955 = vor.u32 %v954, %v950
      %v956 = vrot.slane %v955, 4
      %v958 = vshll.u32 %v245, 16
      %v960 = vrot.slane %v958, 5
      %v961 = vsel %vm721, %v956, %v960
      %v963 = vshrl.u32 %v246, 16
      %v965 = vrot.slane %v963, 4
      %v966 = vshll.u32 %v246, 16
      %v968 = vrot.slane %v966, 5
      %v969 = vor.u32 %v965, %v968
      %v970 = vrot.slane %v969, 4
      %v972 = vshll.u32 %v247, 16
      %v974 = vrot.slane %v972, 5
      %v975 = vsel %vm721, %v970, %v974
      %v976 = vshrl.u32 %v247, 16
      %v978 = vrot.slane %v976, 4
      %v979 = vor.u32 %v978, %v974
      %v980 = vrot.slane %v979, 4
      %v982 = vshll.u32 %v248, 16
      %v984 = vrot.slane %v982, 5
      %v985 = vsel %vm721, %v980, %v984
      %v987 = vshrl.u32 %v249, 16
      %v989 = vrot.slane %v987, 4
      %v990 = vshll.u32 %v249, 16
      %v992 = vrot.slane %v990, 5
      %v993 = vor.u32 %v989, %v992
      %v994 = vrot.slane %v993, 4
      %v996 = vshll.u32 %v250, 16
      %v998 = vrot.slane %v996, 5
      %v999 = vsel %vm721, %v994, %v998
      %v1000 = vshrl.u32 %v250, 16
      %v1002 = vrot.slane %v1000, 4
      %v1003 = vor.u32 %v1002, %v998
      %v1004 = vrot.slane %v1003, 4
      %v1006 = vshll.u32 %v251, 16
      %v1008 = vrot.slane %v1006, 5
      %v1009 = vsel %vm721, %v1004, %v1008
      %v1011 = vshrl.u32 %v252, 16
      %v1013 = vrot.slane %v1011, 4
      %v1014 = vshll.u32 %v252, 16
      %v1016 = vrot.slane %v1014, 5
      %v1017 = vor.u32 %v1013, %v1016
      %v1018 = vrot.slane %v1017, 4
      %v1020 = vshll.u32 %v253, 16
      %v1022 = vrot.slane %v1020, 5
      %v1023 = vsel %vm721, %v1018, %v1022
      %v1024 = vshrl.u32 %v253, 16
      %v1026 = vrot.slane %v1024, 4
      %v1027 = vor.u32 %v1026, %v1022
      %v1028 = vrot.slane %v1027, 4
      %v1030 = vshll.u32 %v254, 16
      %v1032 = vrot.slane %v1030, 5
      %v1033 = vsel %vm721, %v1028, %v1032
      %v1035 = vshrl.u32 %v255, 16
      %v1037 = vrot.slane %v1035, 4
      %v1038 = vshll.u32 %v255, 16
      %v1040 = vrot.slane %v1038, 5
      %v1041 = vor.u32 %v1037, %v1040
      %v1042 = vrot.slane %v1041, 4
      %v1044 = vshll.u32 %v256, 16
      %v1046 = vrot.slane %v1044, 5
      %v1047 = vsel %vm721, %v1042, %v1046
      %v1048 = vshrl.u32 %v256, 16
      %v1050 = vrot.slane %v1048, 4
      %v1051 = vor.u32 %v1050, %v1046
      %v1052 = vrot.slane %v1051, 4
      %v1054 = vshll.u32 %v257, 16
      %v1056 = vrot.slane %v1054, 5
      %v1057 = vsel %vm721, %v1052, %v1056
      %v1059 = vshrl.u32 %v258, 16
      %v1061 = vrot.slane %v1059, 4
      %v1062 = vshll.u32 %v258, 16
      %v1064 = vrot.slane %v1062, 5
      %v1065 = vor.u32 %v1061, %v1064
      %v1066 = vrot.slane %v1065, 4
      %v1068 = vshll.u32 %v259, 16
      %v1070 = vrot.slane %v1068, 5
      %v1071 = vsel %vm721, %v1066, %v1070
      %v1072 = vshrl.u32 %v259, 16
      %v1074 = vrot.slane %v1072, 4
      %v1075 = vor.u32 %v1074, %v1070
      %v1076 = vrot.slane %v1075, 4
      %v1078 = vshll.u32 %v260, 16
      %v1080 = vrot.slane %v1078, 5
      %v1081 = vsel %vm721, %v1076, %v1080
      %v1083 = vshrl.u32 %v261, 16
      %v1085 = vrot.slane %v1083, 4
      %v1086 = vshll.u32 %v261, 16
      %v1088 = vrot.slane %v1086, 5
      %v1089 = vor.u32 %v1085, %v1088
      %v1090 = vrot.slane %v1089, 4
      %v1092 = vshll.u32 %v262, 16
      %v1094 = vrot.slane %v1092, 5
      %v1095 = vsel %vm721, %v1090, %v1094
      %v1096 = vshrl.u32 %v262, 16
      %v1098 = vrot.slane %v1096, 4
      %v1099 = vor.u32 %v1098, %v1094
      %v1100 = vrot.slane %v1099, 4
      %v1102 = vshll.u32 %v263, 16
      %v1104 = vrot.slane %v1102, 5
      %v1105 = vsel %vm721, %v1100, %v1104
      %v1106 = vld [vmem:[#allocation2] sm:$0xff]
      %v1107 = vld [vmem:[#allocation2 + $0x8] sm:$0xff]
      %v1108 = vld [vmem:[#allocation2 + $0x10] sm:$0xff]
      %v1109 = vld [vmem:[#allocation2 + $0x18] sm:$0xff]
      %v1110 = vld [vmem:[#allocation2 + $0x20] sm:$0xff]
      %v1111 = vld [vmem:[#allocation2 + $0x28] sm:$0xff]
      %v1112 = vld [vmem:[#allocation2 + $0x30] sm:$0xff]
      %v1113 = vld [vmem:[#allocation2 + $0x38] sm:$0xff]
      %v1114 = vld [vmem:[#allocation2 + $0x40] sm:$0xff]
      %v1115 = vld [vmem:[#allocation2 + $0x48] sm:$0xff]
      %v1116 = vld [vmem:[#allocation2 + $0x50] sm:$0xff]
      %v1117 = vld [vmem:[#allocation2 + $0x58] sm:$0xff]
      %v1118 = vld [vmem:[#allocation2 + $0x60] sm:$0xff]
      %v1119 = vld [vmem:[#allocation2 + $0x68] sm:$0xff]
      %v1120 = vld [vmem:[#allocation2 + $0x70] sm:$0xff]
      %v1121 = vld [vmem:[#allocation2 + $0x78] sm:$0xff]
      %v1122 = vld [vmem:[#allocation2 + $0x80] sm:$0xff]
      %v1123 = vld [vmem:[#allocation2 + $0x88] sm:$0xff]
      %v1124 = vld [vmem:[#allocation2 + $0x90] sm:$0xff]
      %v1125 = vld [vmem:[#allocation2 + $0x98] sm:$0xff]
      %v1126 = vld [vmem:[#allocation2 + $0xa0] sm:$0xff]
      %v1127 = vld [vmem:[#allocation2 + $0xa8] sm:$0xff]
      %v1128 = vld [vmem:[#allocation2 + $0xb0] sm:$0xff]
      %v1129 = vld [vmem:[#allocation2 + $0xb8] sm:$0xff]
      %v1130 = vld [vmem:[#allocation2 + $0xc0] sm:$0xff]
      %v1131 = vld [vmem:[#allocation2 + $0xc8] sm:$0xff]
      %v1132 = vld [vmem:[#allocation2 + $0xd0] sm:$0xff]
      %v1133 = vld [vmem:[#allocation2 + $0xd8] sm:$0xff]
      %v1134 = vld [vmem:[#allocation2 + $0xe0] sm:$0xff]
      %v1135 = vld [vmem:[#allocation2 + $0xe8] sm:$0xff]
      %v1136 = vld [vmem:[#allocation2 + $0xf0] sm:$0xff]
      %v1137 = vld [vmem:[#allocation2 + $0xf8] sm:$0xff]
      %s1138 = scalar_lea.vmem %s1, 64
      %v1139 = vld [vmem:[%s1138] sm:$0xf]
      %v1140 = vld [vmem:[%s1138 + $0x4] sm:$0xf]
      %v1141 = vld [vmem:[%s1138 + $0x8] sm:$0xf]
      %v1142 = vld [vmem:[%s1138 + $0xc] sm:$0xf]
      %v1143 = vld [vmem:[%s1138 + $0x10] sm:$0xf]
      %v1144 = vld [vmem:[%s1138 + $0x14] sm:$0xf]
      %v1145 = vld [vmem:[%s1138 + $0x18] sm:$0xf]
      %v1146 = vld [vmem:[%s1138 + $0x1c] sm:$0xf]
      %v1147 = vld [vmem:[%s1138 + $0x20] sm:$0xf]
      %v1148 = vld [vmem:[%s1138 + $0x24] sm:$0xf]
      %v1149 = vld [vmem:[%s1138 + $0x28] sm:$0xf]
      %v1150 = vld [vmem:[%s1138 + $0x2c] sm:$0xf]
      %v1151 = vld [vmem:[%s1138 + $0x30] sm:$0xf]
      %v1152 = vld [vmem:[%s1138 + $0x34] sm:$0xf]
      %v1153 = vld [vmem:[%s1138 + $0x38] sm:$0xf]
      %v1154 = vld [vmem:[%s1138 + $0x3c] sm:$0xf]
      %v1155 = vunpack.c.l.b16 %v735
      %v1156 = vunpack.c.l.b16 %v745
      %v1157 = vunpack.c.l.b16 %v759
      %v1158 = vunpack.c.l.b16 %v769
      %v1159 = vunpack.c.l.b16 %v783
      %v1160 = vunpack.c.l.b16 %v793
      %v1161 = vunpack.c.l.b16 %v807
      %v1162 = vunpack.c.l.b16 %v817
      %v1163 = vunpack.c.l.b16 %v831
      %v1164 = vunpack.c.l.b16 %v841
      %v1165 = vunpack.c.l.b16 %v855
      %v1166 = vunpack.c.l.b16 %v865
      %v1167 = vunpack.c.l.b16 %v879
      %v1168 = vunpack.c.l.b16 %v889
      %v1169 = vunpack.c.l.b16 %v903
      %v1170 = vunpack.c.l.b16 %v913
      %v1171 = vunpack.c.l.b16 %v927
      %v1172 = vunpack.c.l.b16 %v937
      %v1173 = vunpack.c.l.b16 %v951
      %v1174 = vunpack.c.l.b16 %v961
      %v1175 = vunpack.c.l.b16 %v975
      %v1176 = vunpack.c.l.b16 %v985
      %v1177 = vunpack.c.l.b16 %v999
      %v1178 = vunpack.c.l.b16 %v1009
      %v1179 = vunpack.c.l.b16 %v1023
      %v1180 = vunpack.c.l.b16 %v1033
      %v1181 = vunpack.c.l.b16 %v1047
      %v1182 = vunpack.c.l.b16 %v1057
      %v1183 = vunpack.c.l.b16 %v1071
      %v1184 = vunpack.c.l.b16 %v1081
      %v1185 = vunpack.c.l.b16 %v1095
      %v1186 = vunpack.c.l.b16 %v1105
      %v1187 = vpack.c.b16 %v1156, %v1155
      %v1188 = vpack.c.b16 %v1158, %v1157
      %v1189 = vpack.c.b16 %v1160, %v1159
      %v1190 = vpack.c.b16 %v1162, %v1161
      %v1191 = vpack.c.b16 %v1164, %v1163
      %v1192 = vpack.c.b16 %v1166, %v1165
      %v1193 = vpack.c.b16 %v1168, %v1167
      %v1194 = vpack.c.b16 %v1170, %v1169
      %v1195 = vpack.c.b16 %v1172, %v1171
      %v1196 = vpack.c.b16 %v1174, %v1173
      %v1197 = vpack.c.b16 %v1176, %v1175
      %v1198 = vpack.c.b16 %v1178, %v1177
      %v1199 = vpack.c.b16 %v1180, %v1179
      %v1200 = vpack.c.b16 %v1182, %v1181
      %v1201 = vpack.c.b16 %v1184, %v1183
      %v1202 = vpack.c.b16 %v1186, %v1185
      %v1235 = vunpack.c.l.b16 %v1139
      %v1236 = vunpack.c.l.b16 %v1140
      %v1237 = vunpack.c.l.b16 %v1141
      %v1238 = vunpack.c.l.b16 %v1142
      %v1239 = vunpack.c.l.b16 %v1143
      %v1240 = vunpack.c.l.b16 %v1144
      %v1241 = vunpack.c.l.b16 %v1145
      %v1242 = vunpack.c.l.b16 %v1146
      %v1243 = vunpack.c.l.b16 %v1147
      %v1244 = vunpack.c.l.b16 %v1148
      %v1245 = vunpack.c.l.b16 %v1149
      %v1246 = vunpack.c.l.b16 %v1150
      %v1247 = vunpack.c.l.b16 %v1151
      %v1248 = vunpack.c.l.b16 %v1152
      %v1249 = vunpack.c.l.b16 %v1153
      %v1250 = vunpack.c.l.b16 %v1154
      %v1251 = vpack.c.b16 %v1236, %v1235
      %v1252 = vpack.c.b16 %v1238, %v1237
      %v1253 = vpack.c.b16 %v1240, %v1239
      %v1254 = vpack.c.b16 %v1242, %v1241
      %v1255 = vpack.c.b16 %v1244, %v1243
      %v1256 = vpack.c.b16 %v1246, %v1245
      %v1257 = vpack.c.b16 %v1248, %v1247
      %v1258 = vpack.c.b16 %v1250, %v1249
      %1267 = vmatprep.subr.bf16.mxu0 0
      %1268 = vmatpush1.bf16.msra.mxu0 %v1251
      %1269 = vmatprep.subr.bf16.mxu0 0
      %1270 = vmatpush1.bf16.msra.mxu0 %v1252
      %1271 = vmatprep.subr.bf16.mxu0 0
      %1272 = vmatpush1.bf16.msra.mxu0 %v1253
      %1273 = vmatprep.subr.bf16.mxu0 0
      %1274 = vmatpush1.bf16.msra.mxu0 %v1254
      %1275 = vmatprep.subr.bf16.mxu0 0
      %1276 = vmatpush1.bf16.msra.mxu0 %v1255
      %1277 = vmatprep.subr.bf16.mxu0 0
      %1278 = vmatpush1.bf16.msra.mxu0 %v1256
      %1279 = vmatprep.subr.bf16.mxu0 0
      %1280 = vmatpush1.bf16.msra.mxu0 %v1257
      %1281 = vmatprep.subr.bf16.mxu0 0
      %1282 = vmatpush1.bf16.msra.mxu0 %v1258
      %1283 = vmatprep.subr.bf16.mxu0 0
      %1284 = vmatpush1.bf16.msra.mxu0 0
      %1285 = vmatprep.subr.bf16.mxu0 0
      %1286 = vmatpush1.bf16.msra.mxu0 0
      %1287 = vmatprep.subr.bf16.mxu0 0
      %1288 = vmatpush1.bf16.msra.mxu0 0
      %1289 = vmatprep.subr.bf16.mxu0 0
      %1290 = vmatpush1.bf16.msra.mxu0 0
      %1291 = vmatprep.subr.bf16.mxu0 0
      %1292 = vmatpush1.bf16.msra.mxu0 0
      %1293 = vmatprep.subr.bf16.mxu0 0
      %1294 = vmatpush1.bf16.msra.mxu0 0
      %1295 = vmatprep.subr.bf16.mxu0 0
      %1296 = vmatpush1.bf16.msra.mxu0 0
      %1297 = vmatprep.subr.bf16.mxu0 0
      %1298 = vmatpush1.bf16.msra.mxu0 0
      %1299 = vmatprep.mubr.bf16.mxu0 0
      %1300 = vmatmul.mubr.bf16.gmra.mrb[0].mxu0 %v1187
      %v1301 = vpop.f32.mrb[0].mxu0
      %v1302 = vadd.f32 0.0, %v1301
      %v1303 = vpop.f32.mrb[0].mxu0
      %v1304 = vpop.f32.mrb[0].mxu0
      %v1305 = vadd.f32 0.0, %v1304
      %v1306 = vpop.f32.mrb[0].mxu0
      %1307 = vmatprep.mubr.bf16.mxu0 0
      %1308 = vmatmul.mubr.bf16.gmra.mrb[0].mxu0 %v1188
      %v1309 = vpop.f32.mrb[0].mxu0
      %v1310 = vadd.f32 0.0, %v1309
      %v1311 = vpop.f32.mrb[0].mxu0
      %v1312 = vpop.f32.mrb[0].mxu0
      %v1313 = vadd.f32 0.0, %v1312
      %v1314 = vpop.f32.mrb[0].mxu0
      %1315 = vmatprep.mubr.bf16.mxu0 0
      %1316 = vmatmul.mubr.bf16.gmra.mrb[0].mxu0 %v1189
      %v1317 = vpop.f32.mrb[0].mxu0
      %v1318 = vadd.f32 0.0, %v1317
      %v1319 = vpop.f32.mrb[0].mxu0
      %v1320 = vpop.f32.mrb[0].mxu0
      %v1321 = vadd.f32 0.0, %v1320
      %v1322 = vpop.f32.mrb[0].mxu0
      %1323 = vmatprep.mubr.bf16.mxu0 0
      %1324 = vmatmul.mubr.bf16.gmra.mrb[0].mxu0 %v1190
      %v1325 = vpop.f32.mrb[0].mxu0
      %v1326 = vadd.f32 0.0, %v1325
      %v1327 = vpop.f32.mrb[0].mxu0
      %v1328 = vpop.f32.mrb[0].mxu0
      %v1329 = vadd.f32 0.0, %v1328
      %v1330 = vpop.f32.mrb[0].mxu0
      %1331 = vmatprep.mubr.bf16.mxu0 0
      %1332 = vmatmul.mubr.bf16.gmra.mrb[0].mxu0 %v1191
      %v1333 = vpop.f32.mrb[0].mxu0
      %v1334 = vadd.f32 0.0, %v1333
      %v1335 = vpop.f32.mrb[0].mxu0
      %v1336 = vpop.f32.mrb[0].mxu0
      %v1337 = vadd.f32 0.0, %v1336
      %v1338 = vpop.f32.mrb[0].mxu0
      %1339 = vmatprep.mubr.bf16.mxu0 0
      %1340 = vmatmul.mubr.bf16.gmra.mrb[0].mxu0 %v1192
      %v1341 = vpop.f32.mrb[0].mxu0
      %v1342 = vadd.f32 0.0, %v1341
      %v1343 = vpop.f32.mrb[0].mxu0
      %v1344 = vpop.f32.mrb[0].mxu0
      %v1345 = vadd.f32 0.0, %v1344
      %v1346 = vpop.f32.mrb[0].mxu0
      %1347 = vmatprep.mubr.bf16.mxu0 0
      %1348 = vmatmul.mubr.bf16.gmra.mrb[0].mxu0 %v1193
      %v1349 = vpop.f32.mrb[0].mxu0
      %v1350 = vadd.f32 0.0, %v1349
      %v1351 = vpop.f32.mrb[0].mxu0
      %v1352 = vpop.f32.mrb[0].mxu0
      %v1353 = vadd.f32 0.0, %v1352
      %v1354 = vpop.f32.mrb[0].mxu0
      %1355 = vmatprep.mubr.bf16.mxu0 0
      %1356 = vmatmul.mubr.bf16.gmra.mrb[0].mxu0 %v1194
      %v1357 = vpop.f32.mrb[0].mxu0
      %v1358 = vadd.f32 0.0, %v1357
      %v1359 = vpop.f32.mrb[0].mxu0
      %v1360 = vpop.f32.mrb[0].mxu0
      %v1361 = vadd.f32 0.0, %v1360
      %v1362 = vpop.f32.mrb[0].mxu0
      %1363 = vmatprep.mubr.bf16.mxu0 0
      %1364 = vmatmul.mubr.bf16.gmra.mrb[0].mxu0 %v1195
      %v1365 = vpop.f32.mrb[0].mxu0
      %v1366 = vadd.f32 0.0, %v1365
      %v1367 = vpop.f32.mrb[0].mxu0
      %v1368 = vpop.f32.mrb[0].mxu0
      %v1369 = vadd.f32 0.0, %v1368
      %v1370 = vpop.f32.mrb[0].mxu0
      %1371 = vmatprep.mubr.bf16.mxu0 0
      %1372 = vmatmul.mubr.bf16.gmra.mrb[0].mxu0 %v1196
      %v1373 = vpop.f32.mrb[0].mxu0
      %v1374 = vadd.f32 0.0, %v1373
      %v1375 = vpop.f32.mrb[0].mxu0
      %v1376 = vpop.f32.mrb[0].mxu0
      %v1377 = vadd.f32 0.0, %v1376
      %v1378 = vpop.f32.mrb[0].mxu0
      %1379 = vmatprep.mubr.bf16.mxu0 0
      %1380 = vmatmul.mubr.bf16.gmra.mrb[0].mxu0 %v1197
      %v1381 = vpop.f32.mrb[0].mxu0
      %v1382 = vadd.f32 0.0, %v1381
      %v1383 = vpop.f32.mrb[0].mxu0
      %v1384 = vpop.f32.mrb[0].mxu0
      %v1385 = vadd.f32 0.0, %v1384
      %v1386 = vpop.f32.mrb[0].mxu0
      %1387 = vmatprep.mubr.bf16.mxu0 0
      %1388 = vmatmul.mubr.bf16.gmra.mrb[0].mxu0 %v1198
      %v1389 = vpop.f32.mrb[0].mxu0
      %v1390 = vadd.f32 0.0, %v1389
      %v1391 = vpop.f32.mrb[0].mxu0
      %v1392 = vpop.f32.mrb[0].mxu0
      %v1393 = vadd.f32 0.0, %v1392
      %v1394 = vpop.f32.mrb[0].mxu0
      %1395 = vmatprep.mubr.bf16.mxu0 0
      %1396 = vmatmul.mubr.bf16.gmra.mrb[0].mxu0 %v1199
      %v1397 = vpop.f32.mrb[0].mxu0
      %v1398 = vadd.f32 0.0, %v1397
      %v1399 = vpop.f32.mrb[0].mxu0
      %v1400 = vpop.f32.mrb[0].mxu0
      %v1401 = vadd.f32 0.0, %v1400
      %v1402 = vpop.f32.mrb[0].mxu0
      %1403 = vmatprep.mubr.bf16.mxu0 0
      %1404 = vmatmul.mubr.bf16.gmra.mrb[0].mxu0 %v1200
      %v1405 = vpop.f32.mrb[0].mxu0
      %v1406 = vadd.f32 0.0, %v1405
      %v1407 = vpop.f32.mrb[0].mxu0
      %v1408 = vpop.f32.mrb[0].mxu0
      %v1409 = vadd.f32 0.0, %v1408
      %v1410 = vpop.f32.mrb[0].mxu0
      %1411 = vmatprep.mubr.bf16.mxu0 0
      %1412 = vmatmul.mubr.bf16.gmra.mrb[0].mxu0 %v1201
      %v1413 = vpop.f32.mrb[0].mxu0
      %v1414 = vadd.f32 0.0, %v1413
      %v1415 = vpop.f32.mrb[0].mxu0
      %v1416 = vpop.f32.mrb[0].mxu0
      %v1417 = vadd.f32 0.0, %v1416
      %v1418 = vpop.f32.mrb[0].mxu0
      %1419 = vmatprep.mubr.bf16.mxu0 0
      %1420 = vmatmul.mubr.bf16.gmra.mrb[0].mxu0 %v1202
      %v1421 = vpop.f32.mrb[0].mxu0
      %v1422 = vadd.f32 0.0, %v1421
      %v1423 = vpop.f32.mrb[0].mxu0
      %v1424 = vpop.f32.mrb[0].mxu0
      %v1425 = vadd.f32 0.0, %v1424
      %v1426 = vpop.f32.mrb[0].mxu0
      %1427 = vdwg.mxu0
      %v1428 = vadd.f32 %v1106, %v1302
      %v1429 = vadd.f32 %v1107, %v1305
      %v1430 = vadd.f32 %v1108, %v1310
      %v1431 = vadd.f32 %v1109, %v1313
      %v1432 = vadd.f32 %v1110, %v1318
      %v1433 = vadd.f32 %v1111, %v1321
      %v1434 = vadd.f32 %v1112, %v1326
      %v1435 = vadd.f32 %v1113, %v1329
      %v1436 = vadd.f32 %v1114, %v1334
      %v1437 = vadd.f32 %v1115, %v1337
      %v1438 = vadd.f32 %v1116, %v1342
      %v1439 = vadd.f32 %v1117, %v1345
      %v1440 = vadd.f32 %v1118, %v1350
      %v1441 = vadd.f32 %v1119, %v1353
      %v1442 = vadd.f32 %v1120, %v1358
      %v1443 = vadd.f32 %v1121, %v1361
      %v1444 = vadd.f32 %v1122, %v1366
      %v1445 = vadd.f32 %v1123, %v1369
      %v1446 = vadd.f32 %v1124, %v1374
      %v1447 = vadd.f32 %v1125, %v1377
      %v1448 = vadd.f32 %v1126, %v1382
      %v1449 = vadd.f32 %v1127, %v1385
      %v1450 = vadd.f32 %v1128, %v1390
      %v1451 = vadd.f32 %v1129, %v1393
      %v1452 = vadd.f32 %v1130, %v1398
      %v1453 = vadd.f32 %v1131, %v1401
      %v1454 = vadd.f32 %v1132, %v1406
      %v1455 = vadd.f32 %v1133, %v1409
      %v1456 = vadd.f32 %v1134, %v1414
      %v1457 = vadd.f32 %v1135, %v1417
      %v1458 = vadd.f32 %v1136, %v1422
      %v1459 = vadd.f32 %v1137, %v1425
      %1460 = vst [vmem:[#allocation2] sm:$0xff] %v1428
      %1461 = vst [vmem:[#allocation2 + $0x8] sm:$0xff] %v1429
      %1462 = vst [vmem:[#allocation2 + $0x10] sm:$0xff] %v1430
      %1463 = vst [vmem:[#allocation2 + $0x18] sm:$0xff] %v1431
      %1464 = vst [vmem:[#allocation2 + $0x20] sm:$0xff] %v1432
      %1465 = vst [vmem:[#allocation2 + $0x28] sm:$0xff] %v1433
      %1466 = vst [vmem:[#allocation2 + $0x30] sm:$0xff] %v1434
      %1467 = vst [vmem:[#allocation2 + $0x38] sm:$0xff] %v1435
      %1468 = vst [vmem:[#allocation2 + $0x40] sm:$0xff] %v1436
      %1469 = vst [vmem:[#allocation2 + $0x48] sm:$0xff] %v1437
      %1470 = vst [vmem:[#allocation2 + $0x50] sm:$0xff] %v1438
      %1471 = vst [vmem:[#allocation2 + $0x58] sm:$0xff] %v1439
      %1472 = vst [vmem:[#allocation2 + $0x60] sm:$0xff] %v1440
      %1473 = vst [vmem:[#allocation2 + $0x68] sm:$0xff] %v1441
      %1474 = vst [vmem:[#allocation2 + $0x70] sm:$0xff] %v1442
      %1475 = vst [vmem:[#allocation2 + $0x78] sm:$0xff] %v1443
      %1476 = vst [vmem:[#allocation2 + $0x80] sm:$0xff] %v1444
      %1477 = vst [vmem:[#allocation2 + $0x88] sm:$0xff] %v1445
      %1478 = vst [vmem:[#allocation2 + $0x90] sm:$0xff] %v1446
      %1479 = vst [vmem:[#allocation2 + $0x98] sm:$0xff] %v1447
      %1480 = vst [vmem:[#allocation2 + $0xa0] sm:$0xff] %v1448
      %1481 = vst [vmem:[#allocation2 + $0xa8] sm:$0xff] %v1449
      %1482 = vst [vmem:[#allocation2 + $0xb0] sm:$0xff] %v1450
      %1483 = vst [vmem:[#allocation2 + $0xb8] sm:$0xff] %v1451
      %1484 = vst [vmem:[#allocation2 + $0xc0] sm:$0xff] %v1452
      %1485 = vst [vmem:[#allocation2 + $0xc8] sm:$0xff] %v1453
      %1486 = vst [vmem:[#allocation2 + $0xd0] sm:$0xff] %v1454
      %1487 = vst [vmem:[#allocation2 + $0xd8] sm:$0xff] %v1455
      %1488 = vst [vmem:[#allocation2 + $0xe0] sm:$0xff] %v1456
      %1489 = vst [vmem:[#allocation2 + $0xe8] sm:$0xff] %v1457
      %1490 = vst [vmem:[#allocation2 + $0xf0] sm:$0xff] %v1458
      %1491 = vst [vmem:[#allocation2 + $0xf8] sm:$0xff] %v1459
      %vm1508 = vcmask 1042432
      %vm1509 = vcmask 1046532
      %vm1510 = vmor %vm1508, %vm1509
      %v1511 = vrot.slane %v216, 5
      %v1512 = vrot.slane %v1511, 4
      %v1513 = vrot.slane %v217, 5
      %v1514 = vsel %vm1510, %v1512, %v1513
      %v1515 = vrot.slane %v1513, 4
      %v1516 = vrot.slane %v218, 5
      %v1517 = vsel %vm1510, %v1515, %v1516
      %v1518 = vrot.slane %v219, 5
      %v1519 = vrot.slane %v1518, 4
      %v1520 = vrot.slane %v220, 5
      %v1521 = vsel %vm1510, %v1519, %v1520
      %v1522 = vrot.slane %v1520, 4
      %v1523 = vrot.slane %v221, 5
      %v1524 = vsel %vm1510, %v1522, %v1523
      %v1525 = vrot.slane %v222, 5
      %v1526 = vrot.slane %v1525, 4
      %v1527 = vrot.slane %v223, 5
      %v1528 = vsel %vm1510, %v1526, %v1527
      %v1529 = vrot.slane %v1527, 4
      %v1530 = vrot.slane %v224, 5
      %v1531 = vsel %vm1510, %v1529, %v1530
      %v1532 = vrot.slane %v225, 5
      %v1533 = vrot.slane %v1532, 4
      %v1534 = vrot.slane %v226, 5
      %v1535 = vsel %vm1510, %v1533, %v1534
      %v1536 = vrot.slane %v1534, 4
      %v1537 = vrot.slane %v227, 5
      %v1538 = vsel %vm1510, %v1536, %v1537
      %v1539 = vrot.slane %v228, 5
      %v1540 = vrot.slane %v1539, 4
      %v1541 = vrot.slane %v229, 5
      %v1542 = vsel %vm1510, %v1540, %v1541
      %v1543 = vrot.slane %v1541, 4
      %v1544 = vrot.slane %v230, 5
      %v1545 = vsel %vm1510, %v1543, %v1544
      %v1546 = vrot.slane %v231, 5
      %v1547 = vrot.slane %v1546, 4
      %v1548 = vrot.slane %v232, 5
      %v1549 = vsel %vm1510, %v1547, %v1548
      %v1550 = vrot.slane %v1548, 4
      %v1551 = vrot.slane %v233, 5
      %v1552 = vsel %vm1510, %v1550, %v1551
      %v1553 = vrot.slane %v234, 5
      %v1554 = vrot.slane %v1553, 4
      %v1555 = vrot.slane %v235, 5
      %v1556 = vsel %vm1510, %v1554, %v1555
      %v1557 = vrot.slane %v1555, 4
      %v1558 = vrot.slane %v236, 5
      %v1559 = vsel %vm1510, %v1557, %v1558
      %v1560 = vrot.slane %v237, 5
      %v1561 = vrot.slane %v1560, 4
      %v1562 = vrot.slane %v238, 5
      %v1563 = vsel %vm1510, %v1561, %v1562
      %v1564 = vrot.slane %v1562, 4
      %v1565 = vrot.slane %v239, 5
      %v1566 = vsel %vm1510, %v1564, %v1565
      %v1567 = vrot.slane %v240, 5
      %v1568 = vrot.slane %v1567, 4
      %v1569 = vrot.slane %v241, 5
      %v1570 = vsel %vm1510, %v1568, %v1569
      %v1571 = vrot.slane %v1569, 4
      %v1572 = vrot.slane %v242, 5
      %v1573 = vsel %vm1510, %v1571, %v1572
      %v1574 = vrot.slane %v243, 5
      %v1575 = vrot.slane %v1574, 4
      %v1576 = vrot.slane %v244, 5
      %v1577 = vsel %vm1510, %v1575, %v1576
      %v1578 = vrot.slane %v1576, 4
      %v1579 = vrot.slane %v245, 5
      %v1580 = vsel %vm1510, %v1578, %v1579
      %v1581 = vrot.slane %v246, 5
      %v1582 = vrot.slane %v1581, 4
      %v1583 = vrot.slane %v247, 5
      %v1584 = vsel %vm1510, %v1582, %v1583
      %v1585 = vrot.slane %v1583, 4
      %v1586 = vrot.slane %v248, 5
      %v1587 = vsel %vm1510, %v1585, %v1586
      %v1588 = vrot.slane %v249, 5
      %v1589 = vrot.slane %v1588, 4
      %v1590 = vrot.slane %v250, 5
      %v1591 = vsel %vm1510, %v1589, %v1590
      %v1592 = vrot.slane %v1590, 4
      %v1593 = vrot.slane %v251, 5
      %v1594 = vsel %vm1510, %v1592, %v1593
      %v1595 = vrot.slane %v252, 5
      %v1596 = vrot.slane %v1595, 4
      %v1597 = vrot.slane %v253, 5
      %v1598 = vsel %vm1510, %v1596, %v1597
      %v1599 = vrot.slane %v1597, 4
      %v1600 = vrot.slane %v254, 5
      %v1601 = vsel %vm1510, %v1599, %v1600
      %v1602 = vrot.slane %v255, 5
      %v1603 = vrot.slane %v1602, 4
      %v1604 = vrot.slane %v256, 5
      %v1605 = vsel %vm1510, %v1603, %v1604
      %v1606 = vrot.slane %v1604, 4
      %v1607 = vrot.slane %v257, 5
      %v1608 = vsel %vm1510, %v1606, %v1607
      %v1609 = vrot.slane %v258, 5
      %v1610 = vrot.slane %v1609, 4
      %v1611 = vrot.slane %v259, 5
      %v1612 = vsel %vm1510, %v1610, %v1611
      %v1613 = vrot.slane %v1611, 4
      %v1614 = vrot.slane %v260, 5
      %v1615 = vsel %vm1510, %v1613, %v1614
      %v1616 = vrot.slane %v261, 5
      %v1617 = vrot.slane %v1616, 4
      %v1618 = vrot.slane %v262, 5
      %v1619 = vsel %vm1510, %v1617, %v1618
      %v1620 = vrot.slane %v1618, 4
      %v1621 = vrot.slane %v263, 5
      %v1622 = vsel %vm1510, %v1620, %v1621
      %v1623 = vld [vmem:[#allocation2] sm:$0xff]
      %v1624 = vld [vmem:[#allocation2 + $0x8] sm:$0xff]
      %v1625 = vld [vmem:[#allocation2 + $0x10] sm:$0xff]
      %v1626 = vld [vmem:[#allocation2 + $0x18] sm:$0xff]
      %v1627 = vld [vmem:[#allocation2 + $0x20] sm:$0xff]
      %v1628 = vld [vmem:[#allocation2 + $0x28] sm:$0xff]
      %v1629 = vld [vmem:[#allocation2 + $0x30] sm:$0xff]
      %v1630 = vld [vmem:[#allocation2 + $0x38] sm:$0xff]
      %v1631 = vld [vmem:[#allocation2 + $0x40] sm:$0xff]
      %v1632 = vld [vmem:[#allocation2 + $0x48] sm:$0xff]
      %v1633 = vld [vmem:[#allocation2 + $0x50] sm:$0xff]
      %v1634 = vld [vmem:[#allocation2 + $0x58] sm:$0xff]
      %v1635 = vld [vmem:[#allocation2 + $0x60] sm:$0xff]
      %v1636 = vld [vmem:[#allocation2 + $0x68] sm:$0xff]
      %v1637 = vld [vmem:[#allocation2 + $0x70] sm:$0xff]
      %v1638 = vld [vmem:[#allocation2 + $0x78] sm:$0xff]
      %v1639 = vld [vmem:[#allocation2 + $0x80] sm:$0xff]
      %v1640 = vld [vmem:[#allocation2 + $0x88] sm:$0xff]
      %v1641 = vld [vmem:[#allocation2 + $0x90] sm:$0xff]
      %v1642 = vld [vmem:[#allocation2 + $0x98] sm:$0xff]
      %v1643 = vld [vmem:[#allocation2 + $0xa0] sm:$0xff]
      %v1644 = vld [vmem:[#allocation2 + $0xa8] sm:$0xff]
      %v1645 = vld [vmem:[#allocation2 + $0xb0] sm:$0xff]
      %v1646 = vld [vmem:[#allocation2 + $0xb8] sm:$0xff]
      %v1647 = vld [vmem:[#allocation2 + $0xc0] sm:$0xff]
      %v1648 = vld [vmem:[#allocation2 + $0xc8] sm:$0xff]
      %v1649 = vld [vmem:[#allocation2 + $0xd0] sm:$0xff]
      %v1650 = vld [vmem:[#allocation2 + $0xd8] sm:$0xff]
      %v1651 = vld [vmem:[#allocation2 + $0xe0] sm:$0xff]
      %v1652 = vld [vmem:[#allocation2 + $0xe8] sm:$0xff]
      %v1653 = vld [vmem:[#allocation2 + $0xf0] sm:$0xff]
      %v1654 = vld [vmem:[#allocation2 + $0xf8] sm:$0xff]
      %s1655 = scalar_lea.vmem %s1, 128
      %v1656 = vld [vmem:[%s1655] sm:$0xf]
      %v1657 = vld [vmem:[%s1655 + $0x4] sm:$0xf]
      %v1658 = vld [vmem:[%s1655 + $0x8] sm:$0xf]
      %v1659 = vld [vmem:[%s1655 + $0xc] sm:$0xf]
      %v1660 = vld [vmem:[%s1655 + $0x10] sm:$0xf]
      %v1661 = vld [vmem:[%s1655 + $0x14] sm:$0xf]
      %v1662 = vld [vmem:[%s1655 + $0x18] sm:$0xf]
      %v1663 = vld [vmem:[%s1655 + $0x1c] sm:$0xf]
      %v1664 = vld [vmem:[%s1655 + $0x20] sm:$0xf]
      %v1665 = vld [vmem:[%s1655 + $0x24] sm:$0xf]
      %v1666 = vld [vmem:[%s1655 + $0x28] sm:$0xf]
      %v1667 = vld [vmem:[%s1655 + $0x2c] sm:$0xf]
      %v1668 = vld [vmem:[%s1655 + $0x30] sm:$0xf]
      %v1669 = vld [vmem:[%s1655 + $0x34] sm:$0xf]
      %v1670 = vld [vmem:[%s1655 + $0x38] sm:$0xf]
      %v1671 = vld [vmem:[%s1655 + $0x3c] sm:$0xf]
      %v1672 = vunpack.c.l.b16 %v1514
      %v1673 = vunpack.c.l.b16 %v1517
      %v1674 = vunpack.c.l.b16 %v1521
      %v1675 = vunpack.c.l.b16 %v1524
      %v1676 = vunpack.c.l.b16 %v1528
      %v1677 = vunpack.c.l.b16 %v1531
      %v1678 = vunpack.c.l.b16 %v1535
      %v1679 = vunpack.c.l.b16 %v1538
      %v1680 = vunpack.c.l.b16 %v1542
      %v1681 = vunpack.c.l.b16 %v1545
      %v1682 = vunpack.c.l.b16 %v1549
      %v1683 = vunpack.c.l.b16 %v1552
      %v1684 = vunpack.c.l.b16 %v1556
      %v1685 = vunpack.c.l.b16 %v1559
      %v1686 = vunpack.c.l.b16 %v1563
      %v1687 = vunpack.c.l.b16 %v1566
      %v1688 = vunpack.c.l.b16 %v1570
      %v1689 = vunpack.c.l.b16 %v1573
      %v1690 = vunpack.c.l.b16 %v1577
      %v1691 = vunpack.c.l.b16 %v1580
      %v1692 = vunpack.c.l.b16 %v1584
      %v1693 = vunpack.c.l.b16 %v1587
      %v1694 = vunpack.c.l.b16 %v1591
      %v1695 = vunpack.c.l.b16 %v1594
      %v1696 = vunpack.c.l.b16 %v1598
      %v1697 = vunpack.c.l.b16 %v1601
      %v1698 = vunpack.c.l.b16 %v1605
      %v1699 = vunpack.c.l.b16 %v1608
      %v1700 = vunpack.c.l.b16 %v1612
      %v1701 = vunpack.c.l.b16 %v1615
      %v1702 = vunpack.c.l.b16 %v1619
      %v1703 = vunpack.c.l.b16 %v1622
      %v1704 = vpack.c.b16 %v1673, %v1672
      %v1705 = vpack.c.b16 %v1675, %v1674
      %v1706 = vpack.c.b16 %v1677, %v1676
      %v1707 = vpack.c.b16 %v1679, %v1678
      %v1708 = vpack.c.b16 %v1681, %v1680
      %v1709 = vpack.c.b16 %v1683, %v1682
      %v1710 = vpack.c.b16 %v1685, %v1684
      %v1711 = vpack.c.b16 %v1687, %v1686
      %v1712 = vpack.c.b16 %v1689, %v1688
      %v1713 = vpack.c.b16 %v1691, %v1690
      %v1714 = vpack.c.b16 %v1693, %v1692
      %v1715 = vpack.c.b16 %v1695, %v1694
      %v1716 = vpack.c.b16 %v1697, %v1696
      %v1717 = vpack.c.b16 %v1699, %v1698
      %v1718 = vpack.c.b16 %v1701, %v1700
      %v1719 = vpack.c.b16 %v1703, %v1702
      %v1752 = vunpack.c.l.b16 %v1656
      %v1753 = vunpack.c.l.b16 %v1657
      %v1754 = vunpack.c.l.b16 %v1658
      %v1755 = vunpack.c.l.b16 %v1659
      %v1756 = vunpack.c.l.b16 %v1660
      %v1757 = vunpack.c.l.b16 %v1661
      %v1758 = vunpack.c.l.b16 %v1662
      %v1759 = vunpack.c.l.b16 %v1663
      %v1760 = vunpack.c.l.b16 %v1664
      %v1761 = vunpack.c.l.b16 %v1665
      %v1762 = vunpack.c.l.b16 %v1666
      %v1763 = vunpack.c.l.b16 %v1667
      %v1764 = vunpack.c.l.b16 %v1668
      %v1765 = vunpack.c.l.b16 %v1669
      %v1766 = vunpack.c.l.b16 %v1670
      %v1767 = vunpack.c.l.b16 %v1671
      %v1768 = vpack.c.b16 %v1753, %v1752
      %v1769 = vpack.c.b16 %v1755, %v1754
      %v1770 = vpack.c.b16 %v1757, %v1756
      %v1771 = vpack.c.b16 %v1759, %v1758
      %v1772 = vpack.c.b16 %v1761, %v1760
      %v1773 = vpack.c.b16 %v1763, %v1762
      %v1774 = vpack.c.b16 %v1765, %v1764
      %v1775 = vpack.c.b16 %v1767, %v1766
      %1784 = vmatprep.subr.bf16.mxu0 0
      %1785 = vmatpush1.bf16.msra.mxu0 %v1768
      %1786 = vmatprep.subr.bf16.mxu0 0
      %1787 = vmatpush1.bf16.msra.mxu0 %v1769
      %1788 = vmatprep.subr.bf16.mxu0 0
      %1789 = vmatpush1.bf16.msra.mxu0 %v1770
      %1790 = vmatprep.subr.bf16.mxu0 0
      %1791 = vmatpush1.bf16.msra.mxu0 %v1771
      %1792 = vmatprep.subr.bf16.mxu0 0
      %1793 = vmatpush1.bf16.msra.mxu0 %v1772
      %1794 = vmatprep.subr.bf16.mxu0 0
      %1795 = vmatpush1.bf16.msra.mxu0 %v1773
      %1796 = vmatprep.subr.bf16.mxu0 0
      %1797 = vmatpush1.bf16.msra.mxu0 %v1774
      %1798 = vmatprep.subr.bf16.mxu0 0
      %1799 = vmatpush1.bf16.msra.mxu0 %v1775
      %1800 = vmatprep.subr.bf16.mxu0 0
      %1801 = vmatpush1.bf16.msra.mxu0 0
      %1802 = vmatprep.subr.bf16.mxu0 0
      %1803 = vmatpush1.bf16.msra.mxu0 0
      %1804 = vmatprep.subr.bf16.mxu0 0
      %1805 = vmatpush1.bf16.msra.mxu0 0
      %1806 = vmatprep.subr.bf16.mxu0 0
      %1807 = vmatpush1.bf16.msra.mxu0 0
      %1808 = vmatprep.subr.bf16.mxu0 0
      %1809 = vmatpush1.bf16.msra.mxu0 0
      %1810 = vmatprep.subr.bf16.mxu0 0
      %1811 = vmatpush1.bf16.msra.mxu0 0
      %1812 = vmatprep.subr.bf16.mxu0 0
      %1813 = vmatpush1.bf16.msra.mxu0 0
      %1814 = vmatprep.subr.bf16.mxu0 0
      %1815 = vmatpush1.bf16.msra.mxu0 0
      %1816 = vmatprep.mubr.bf16.mxu0 0
      %1817 = vmatmul.mubr.bf16.gmra.mrb[0].mxu0 %v1704
      %v1818 = vpop.f32.mrb[0].mxu0
      %v1819 = vadd.f32 0.0, %v1818
      %v1820 = vpop.f32.mrb[0].mxu0
      %v1821 = vpop.f32.mrb[0].mxu0
      %v1822 = vadd.f32 0.0, %v1821
      %v1823 = vpop.f32.mrb[0].mxu0
      %1824 = vmatprep.mubr.bf16.mxu0 0
      %1825 = vmatmul.mubr.bf16.gmra.mrb[0].mxu0 %v1705
      %v1826 = vpop.f32.mrb[0].mxu0
      %v1827 = vadd.f32 0.0, %v1826
      %v1828 = vpop.f32.mrb[0].mxu0
      %v1829 = vpop.f32.mrb[0].mxu0
      %v1830 = vadd.f32 0.0, %v1829
      %v1831 = vpop.f32.mrb[0].mxu0
      %1832 = vmatprep.mubr.bf16.mxu0 0
      %1833 = vmatmul.mubr.bf16.gmra.mrb[0].mxu0 %v1706
      %v1834 = vpop.f32.mrb[0].mxu0
      %v1835 = vadd.f32 0.0, %v1834
      %v1836 = vpop.f32.mrb[0].mxu0
      %v1837 = vpop.f32.mrb[0].mxu0
      %v1838 = vadd.f32 0.0, %v1837
      %v1839 = vpop.f32.mrb[0].mxu0
      %1840 = vmatprep.mubr.bf16.mxu0 0
      %1841 = vmatmul.mubr.bf16.gmra.mrb[0].mxu0 %v1707
      %v1842 = vpop.f32.mrb[0].mxu0
      %v1843 = vadd.f32 0.0, %v1842
      %v1844 = vpop.f32.mrb[0].mxu0
      %v1845 = vpop.f32.mrb[0].mxu0
      %v1846 = vadd.f32 0.0, %v1845
      %v1847 = vpop.f32.mrb[0].mxu0
      %1848 = vmatprep.mubr.bf16.mxu0 0
      %1849 = vmatmul.mubr.bf16.gmra.mrb[0].mxu0 %v1708
      %v1850 = vpop.f32.mrb[0].mxu0
      %v1851 = vadd.f32 0.0, %v1850
      %v1852 = vpop.f32.mrb[0].mxu0
      %v1853 = vpop.f32.mrb[0].mxu0
      %v1854 = vadd.f32 0.0, %v1853
      %v1855 = vpop.f32.mrb[0].mxu0
      %1856 = vmatprep.mubr.bf16.mxu0 0
      %1857 = vmatmul.mubr.bf16.gmra.mrb[0].mxu0 %v1709
      %v1858 = vpop.f32.mrb[0].mxu0
      %v1859 = vadd.f32 0.0, %v1858
      %v1860 = vpop.f32.mrb[0].mxu0
      %v1861 = vpop.f32.mrb[0].mxu0
      %v1862 = vadd.f32 0.0, %v1861
      %v1863 = vpop.f32.mrb[0].mxu0
      %1864 = vmatprep.mubr.bf16.mxu0 0
      %1865 = vmatmul.mubr.bf16.gmra.mrb[0].mxu0 %v1710
      %v1866 = vpop.f32.mrb[0].mxu0
      %v1867 = vadd.f32 0.0, %v1866
      %v1868 = vpop.f32.mrb[0].mxu0
      %v1869 = vpop.f32.mrb[0].mxu0
      %v1870 = vadd.f32 0.0, %v1869
      %v1871 = vpop.f32.mrb[0].mxu0
      %1872 = vmatprep.mubr.bf16.mxu0 0
      %1873 = vmatmul.mubr.bf16.gmra.mrb[0].mxu0 %v1711
      %v1874 = vpop.f32.mrb[0].mxu0
      %v1875 = vadd.f32 0.0, %v1874
      %v1876 = vpop.f32.mrb[0].mxu0
      %v1877 = vpop.f32.mrb[0].mxu0
      %v1878 = vadd.f32 0.0, %v1877
      %v1879 = vpop.f32.mrb[0].mxu0
      %1880 = vmatprep.mubr.bf16.mxu0 0
      %1881 = vmatmul.mubr.bf16.gmra.mrb[0].mxu0 %v1712
      %v1882 = vpop.f32.mrb[0].mxu0
      %v1883 = vadd.f32 0.0, %v1882
      %v1884 = vpop.f32.mrb[0].mxu0
      %v1885 = vpop.f32.mrb[0].mxu0
      %v1886 = vadd.f32 0.0, %v1885
      %v1887 = vpop.f32.mrb[0].mxu0
      %1888 = vmatprep.mubr.bf16.mxu0 0
      %1889 = vmatmul.mubr.bf16.gmra.mrb[0].mxu0 %v1713
      %v1890 = vpop.f32.mrb[0].mxu0
      %v1891 = vadd.f32 0.0, %v1890
      %v1892 = vpop.f32.mrb[0].mxu0
      %v1893 = vpop.f32.mrb[0].mxu0
      %v1894 = vadd.f32 0.0, %v1893
      %v1895 = vpop.f32.mrb[0].mxu0
      %1896 = vmatprep.mubr.bf16.mxu0 0
      %1897 = vmatmul.mubr.bf16.gmra.mrb[0].mxu0 %v1714
      %v1898 = vpop.f32.mrb[0].mxu0
      %v1899 = vadd.f32 0.0, %v1898
      %v1900 = vpop.f32.mrb[0].mxu0
      %v1901 = vpop.f32.mrb[0].mxu0
      %v1902 = vadd.f32 0.0, %v1901
      %v1903 = vpop.f32.mrb[0].mxu0
      %1904 = vmatprep.mubr.bf16.mxu0 0
      %1905 = vmatmul.mubr.bf16.gmra.mrb[0].mxu0 %v1715
      %v1906 = vpop.f32.mrb[0].mxu0
      %v1907 = vadd.f32 0.0, %v1906
      %v1908 = vpop.f32.mrb[0].mxu0
      %v1909 = vpop.f32.mrb[0].mxu0
      %v1910 = vadd.f32 0.0, %v1909
      %v1911 = vpop.f32.mrb[0].mxu0
      %1912 = vmatprep.mubr.bf16.mxu0 0
      %1913 = vmatmul.mubr.bf16.gmra.mrb[0].mxu0 %v1716
      %v1914 = vpop.f32.mrb[0].mxu0
      %v1915 = vadd.f32 0.0, %v1914
      %v1916 = vpop.f32.mrb[0].mxu0
      %v1917 = vpop.f32.mrb[0].mxu0
      %v1918 = vadd.f32 0.0, %v1917
      %v1919 = vpop.f32.mrb[0].mxu0
      %1920 = vmatprep.mubr.bf16.mxu0 0
      %1921 = vmatmul.mubr.bf16.gmra.mrb[0].mxu0 %v1717
      %v1922 = vpop.f32.mrb[0].mxu0
      %v1923 = vadd.f32 0.0, %v1922
      %v1924 = vpop.f32.mrb[0].mxu0
      %v1925 = vpop.f32.mrb[0].mxu0
      %v1926 = vadd.f32 0.0, %v1925
      %v1927 = vpop.f32.mrb[0].mxu0
      %1928 = vmatprep.mubr.bf16.mxu0 0
      %1929 = vmatmul.mubr.bf16.gmra.mrb[0].mxu0 %v1718
      %v1930 = vpop.f32.mrb[0].mxu0
      %v1931 = vadd.f32 0.0, %v1930
      %v1932 = vpop.f32.mrb[0].mxu0
      %v1933 = vpop.f32.mrb[0].mxu0
      %v1934 = vadd.f32 0.0, %v1933
      %v1935 = vpop.f32.mrb[0].mxu0
      %1936 = vmatprep.mubr.bf16.mxu0 0
      %1937 = vmatmul.mubr.bf16.gmra.mrb[0].mxu0 %v1719
      %v1938 = vpop.f32.mrb[0].mxu0
      %v1939 = vadd.f32 0.0, %v1938
      %v1940 = vpop.f32.mrb[0].mxu0
      %v1941 = vpop.f32.mrb[0].mxu0
      %v1942 = vadd.f32 0.0, %v1941
      %v1943 = vpop.f32.mrb[0].mxu0
      %1944 = vdwg.mxu0
      %v1945 = vadd.f32 %v1623, %v1819
      %v1946 = vadd.f32 %v1624, %v1822
      %v1947 = vadd.f32 %v1625, %v1827
      %v1948 = vadd.f32 %v1626, %v1830
      %v1949 = vadd.f32 %v1627, %v1835
      %v1950 = vadd.f32 %v1628, %v1838
      %v1951 = vadd.f32 %v1629, %v1843
      %v1952 = vadd.f32 %v1630, %v1846
      %v1953 = vadd.f32 %v1631, %v1851
      %v1954 = vadd.f32 %v1632, %v1854
      %v1955 = vadd.f32 %v1633, %v1859
      %v1956 = vadd.f32 %v1634, %v1862
      %v1957 = vadd.f32 %v1635, %v1867
      %v1958 = vadd.f32 %v1636, %v1870
      %v1959 = vadd.f32 %v1637, %v1875
      %v1960 = vadd.f32 %v1638, %v1878
      %v1961 = vadd.f32 %v1639, %v1883
      %v1962 = vadd.f32 %v1640, %v1886
      %v1963 = vadd.f32 %v1641, %v1891
      %v1964 = vadd.f32 %v1642, %v1894
      %v1965 = vadd.f32 %v1643, %v1899
      %v1966 = vadd.f32 %v1644, %v1902
      %v1967 = vadd.f32 %v1645, %v1907
      %v1968 = vadd.f32 %v1646, %v1910
      %v1969 = vadd.f32 %v1647, %v1915
      %v1970 = vadd.f32 %v1648, %v1918
      %v1971 = vadd.f32 %v1649, %v1923
      %v1972 = vadd.f32 %v1650, %v1926
      %v1973 = vadd.f32 %v1651, %v1931
      %v1974 = vadd.f32 %v1652, %v1934
      %v1975 = vadd.f32 %v1653, %v1939
      %v1976 = vadd.f32 %v1654, %v1942
      %1977 = vst [vmem:[#allocation2] sm:$0xff] %v1945
      %1978 = vst [vmem:[#allocation2 + $0x8] sm:$0xff] %v1946
      %1979 = vst [vmem:[#allocation2 + $0x10] sm:$0xff] %v1947
      %1980 = vst [vmem:[#allocation2 + $0x18] sm:$0xff] %v1948
      %1981 = vst [vmem:[#allocation2 + $0x20] sm:$0xff] %v1949
      %1982 = vst [vmem:[#allocation2 + $0x28] sm:$0xff] %v1950
      %1983 = vst [vmem:[#allocation2 + $0x30] sm:$0xff] %v1951
      %1984 = vst [vmem:[#allocation2 + $0x38] sm:$0xff] %v1952
      %1985 = vst [vmem:[#allocation2 + $0x40] sm:$0xff] %v1953
      %1986 = vst [vmem:[#allocation2 + $0x48] sm:$0xff] %v1954
      %1987 = vst [vmem:[#allocation2 + $0x50] sm:$0xff] %v1955
      %1988 = vst [vmem:[#allocation2 + $0x58] sm:$0xff] %v1956
      %1989 = vst [vmem:[#allocation2 + $0x60] sm:$0xff] %v1957
      %1990 = vst [vmem:[#allocation2 + $0x68] sm:$0xff] %v1958
      %1991 = vst [vmem:[#allocation2 + $0x70] sm:$0xff] %v1959
      %1992 = vst [vmem:[#allocation2 + $0x78] sm:$0xff] %v1960
      %1993 = vst [vmem:[#allocation2 + $0x80] sm:$0xff] %v1961
      %1994 = vst [vmem:[#allocation2 + $0x88] sm:$0xff] %v1962
      %1995 = vst [vmem:[#allocation2 + $0x90] sm:$0xff] %v1963
      %1996 = vst [vmem:[#allocation2 + $0x98] sm:$0xff] %v1964
      %1997 = vst [vmem:[#allocation2 + $0xa0] sm:$0xff] %v1965
      %1998 = vst [vmem:[#allocation2 + $0xa8] sm:$0xff] %v1966
      %1999 = vst [vmem:[#allocation2 + $0xb0] sm:$0xff] %v1967
      %2000 = vst [vmem:[#allocation2 + $0xb8] sm:$0xff] %v1968
      %2001 = vst [vmem:[#allocation2 + $0xc0] sm:$0xff] %v1969
      %2002 = vst [vmem:[#allocation2 + $0xc8] sm:$0xff] %v1970
      %2003 = vst [vmem:[#allocation2 + $0xd0] sm:$0xff] %v1971
      %2004 = vst [vmem:[#allocation2 + $0xd8] sm:$0xff] %v1972
      %2005 = vst [vmem:[#allocation2 + $0xe0] sm:$0xff] %v1973
      %2006 = vst [vmem:[#allocation2 + $0xe8] sm:$0xff] %v1974
      %2007 = vst [vmem:[#allocation2 + $0xf0] sm:$0xff] %v1975
      %2008 = vst [vmem:[#allocation2 + $0xf8] sm:$0xff] %v1976
      %v2009 = vld [vmem:[#allocation2] sm:$0xff]
      %v2010 = vld [vmem:[#allocation2 + $0x8] sm:$0xff]
      %v2011 = vld [vmem:[#allocation2 + $0x10] sm:$0xff]
      %v2012 = vld [vmem:[#allocation2 + $0x18] sm:$0xff]
      %v2013 = vld [vmem:[#allocation2 + $0x20] sm:$0xff]
      %v2014 = vld [vmem:[#allocation2 + $0x28] sm:$0xff]
      %v2015 = vld [vmem:[#allocation2 + $0x30] sm:$0xff]
      %v2016 = vld [vmem:[#allocation2 + $0x38] sm:$0xff]
      %v2017 = vld [vmem:[#allocation2 + $0x40] sm:$0xff]
      %v2018 = vld [vmem:[#allocation2 + $0x48] sm:$0xff]
      %v2019 = vld [vmem:[#allocation2 + $0x50] sm:$0xff]
      %v2020 = vld [vmem:[#allocation2 + $0x58] sm:$0xff]
      %v2021 = vld [vmem:[#allocation2 + $0x60] sm:$0xff]
      %v2022 = vld [vmem:[#allocation2 + $0x68] sm:$0xff]
      %v2023 = vld [vmem:[#allocation2 + $0x70] sm:$0xff]
      %v2024 = vld [vmem:[#allocation2 + $0x78] sm:$0xff]
      %v2025 = vld [vmem:[#allocation2 + $0x80] sm:$0xff]
      %v2026 = vld [vmem:[#allocation2 + $0x88] sm:$0xff]
      %v2027 = vld [vmem:[#allocation2 + $0x90] sm:$0xff]
      %v2028 = vld [vmem:[#allocation2 + $0x98] sm:$0xff]
      %v2029 = vld [vmem:[#allocation2 + $0xa0] sm:$0xff]
      %v2030 = vld [vmem:[#allocation2 + $0xa8] sm:$0xff]
      %v2031 = vld [vmem:[#allocation2 + $0xb0] sm:$0xff]
      %v2032 = vld [vmem:[#allocation2 + $0xb8] sm:$0xff]
      %v2033 = vld [vmem:[#allocation2 + $0xc0] sm:$0xff]
      %v2034 = vld [vmem:[#allocation2 + $0xc8] sm:$0xff]
      %v2035 = vld [vmem:[#allocation2 + $0xd0] sm:$0xff]
      %v2036 = vld [vmem:[#allocation2 + $0xd8] sm:$0xff]
      %v2037 = vld [vmem:[#allocation2 + $0xe0] sm:$0xff]
      %v2038 = vld [vmem:[#allocation2 + $0xe8] sm:$0xff]
      %v2039 = vld [vmem:[#allocation2 + $0xf0] sm:$0xff]
      %v2040 = vld [vmem:[#allocation2 + $0xf8] sm:$0xff]
      %s2041 = scalar_lea.vmem %s1, 192
      %v2042 = vld [vmem:[%s2041] sm:$0xf]
      %v2043 = vld [vmem:[%s2041 + $0x4] sm:$0xf]
      %v2044 = vld [vmem:[%s2041 + $0x8] sm:$0xf]
      %v2045 = vld [vmem:[%s2041 + $0xc] sm:$0xf]
      %v2046 = vld [vmem:[%s2041 + $0x10] sm:$0xf]
      %v2047 = vld [vmem:[%s2041 + $0x14] sm:$0xf]
      %v2048 = vld [vmem:[%s2041 + $0x18] sm:$0xf]
      %v2049 = vld [vmem:[%s2041 + $0x1c] sm:$0xf]
      %v2050 = vld [vmem:[%s2041 + $0x20] sm:$0xf]
      %v2051 = vld [vmem:[%s2041 + $0x24] sm:$0xf]
      %v2052 = vld [vmem:[%s2041 + $0x28] sm:$0xf]
      %v2053 = vld [vmem:[%s2041 + $0x2c] sm:$0xf]
      %v2054 = vld [vmem:[%s2041 + $0x30] sm:$0xf]
      %v2055 = vld [vmem:[%s2041 + $0x34] sm:$0xf]
      %v2056 = vld [vmem:[%s2041 + $0x38] sm:$0xf]
      %v2057 = vld [vmem:[%s2041 + $0x3c] sm:$0xf]
      %v2060 = vunpack.c.l.b16 %v264
      %v2061 = vunpack.c.l.b16 %v265
      %v2062 = vpack.c.b16 %v2061, %v2060
      %v2080 = vunpack.c.l.b16 %v2042
      %v2081 = vunpack.c.l.b16 %v2043
      %v2082 = vunpack.c.l.b16 %v2044
      %v2083 = vunpack.c.l.b16 %v2045
      %v2084 = vunpack.c.l.b16 %v2046
      %v2085 = vunpack.c.l.b16 %v2047
      %v2086 = vunpack.c.l.b16 %v2048
      %v2087 = vunpack.c.l.b16 %v2049
      %v2088 = vunpack.c.l.b16 %v2050
      %v2089 = vunpack.c.l.b16 %v2051
      %v2090 = vunpack.c.l.b16 %v2052
      %v2091 = vunpack.c.l.b16 %v2053
      %v2092 = vunpack.c.l.b16 %v2054
      %v2093 = vunpack.c.l.b16 %v2055
      %v2094 = vunpack.c.l.b16 %v2056
      %v2095 = vunpack.c.l.b16 %v2057
      %v2096 = vpack.c.b16 %v2081, %v2080
      %v2097 = vpack.c.b16 %v2083, %v2082
      %v2098 = vpack.c.b16 %v2085, %v2084
      %v2099 = vpack.c.b16 %v2087, %v2086
      %v2100 = vpack.c.b16 %v2089, %v2088
      %v2101 = vpack.c.b16 %v2091, %v2090
      %v2102 = vpack.c.b16 %v2093, %v2092
      %v2103 = vpack.c.b16 %v2095, %v2094
      %2112 = vmatprep.subr.bf16.mxu0 0
      %2113 = vmatpush1.bf16.msra.mxu0 %v2096
      %2114 = vmatprep.subr.bf16.mxu0 0
      %2115 = vmatpush1.bf16.msra.mxu0 %v2097
      %2116 = vmatprep.subr.bf16.mxu0 0
      %2117 = vmatpush1.bf16.msra.mxu0 %v2098
      %2118 = vmatprep.subr.bf16.mxu0 0
      %2119 = vmatpush1.bf16.msra.mxu0 %v2099
      %2120 = vmatprep.subr.bf16.mxu0 0
      %2121 = vmatpush1.bf16.msra.mxu0 %v2100
      %2122 = vmatprep.subr.bf16.mxu0 0
      %2123 = vmatpush1.bf16.msra.mxu0 %v2101
      %2124 = vmatprep.subr.bf16.mxu0 0
      %2125 = vmatpush1.bf16.msra.mxu0 %v2102
      %2126 = vmatprep.subr.bf16.mxu0 0
      %2127 = vmatpush1.bf16.msra.mxu0 %v2103
      %2128 = vmatprep.subr.bf16.mxu0 0
      %2129 = vmatpush1.bf16.msra.mxu0 0
      %2130 = vmatprep.subr.bf16.mxu0 0
      %2131 = vmatpush1.bf16.msra.mxu0 0
      %2132 = vmatprep.subr.bf16.mxu0 0
      %2133 = vmatpush1.bf16.msra.mxu0 0
      %2134 = vmatprep.subr.bf16.mxu0 0
      %2135 = vmatpush1.bf16.msra.mxu0 0
      %2136 = vmatprep.subr.bf16.mxu0 0
      %2137 = vmatpush1.bf16.msra.mxu0 0
      %2138 = vmatprep.subr.bf16.mxu0 0
      %2139 = vmatpush1.bf16.msra.mxu0 0
      %2140 = vmatprep.subr.bf16.mxu0 0
      %2141 = vmatpush1.bf16.msra.mxu0 0
      %2142 = vmatprep.subr.bf16.mxu0 0
      %2143 = vmatpush1.bf16.msra.mxu0 0
      %2144 = vmatprep.mubr.bf16.mxu0 0
      %2145 = vmatmul.mubr.bf16.gmra.mrb[0].mxu0 %v415
      %v2146 = vpop.f32.mrb[0].mxu0
      %v2147 = vadd.f32 0.0, %v2146
      %v2148 = vpop.f32.mrb[0].mxu0
      %v2149 = vpop.f32.mrb[0].mxu0
      %v2150 = vadd.f32 0.0, %v2149
      %v2151 = vpop.f32.mrb[0].mxu0
      %2152 = vmatprep.mubr.bf16.mxu0 0
      %2153 = vmatmul.mubr.bf16.gmra.mrb[0].mxu0 %v416
      %v2154 = vpop.f32.mrb[0].mxu0
      %v2155 = vadd.f32 0.0, %v2154
      %v2156 = vpop.f32.mrb[0].mxu0
      %v2157 = vpop.f32.mrb[0].mxu0
      %v2158 = vadd.f32 0.0, %v2157
      %v2159 = vpop.f32.mrb[0].mxu0
      %2160 = vmatprep.mubr.bf16.mxu0 0
      %2161 = vmatmul.mubr.bf16.gmra.mrb[0].mxu0 %v417
      %v2162 = vpop.f32.mrb[0].mxu0
      %v2163 = vadd.f32 0.0, %v2162
      %v2164 = vpop.f32.mrb[0].mxu0
      %v2165 = vpop.f32.mrb[0].mxu0
      %v2166 = vadd.f32 0.0, %v2165
      %v2167 = vpop.f32.mrb[0].mxu0
      %2168 = vmatprep.mubr.bf16.mxu0 0
      %2169 = vmatmul.mubr.bf16.gmra.mrb[0].mxu0 %v418
      %v2170 = vpop.f32.mrb[0].mxu0
      %v2171 = vadd.f32 0.0, %v2170
      %v2172 = vpop.f32.mrb[0].mxu0
      %v2173 = vpop.f32.mrb[0].mxu0
      %v2174 = vadd.f32 0.0, %v2173
      %v2175 = vpop.f32.mrb[0].mxu0
      %2176 = vmatprep.mubr.bf16.mxu0 0
      %2177 = vmatmul.mubr.bf16.gmra.mrb[0].mxu0 %v419
      %v2178 = vpop.f32.mrb[0].mxu0
      %v2179 = vadd.f32 0.0, %v2178
      %v2180 = vpop.f32.mrb[0].mxu0
      %v2181 = vpop.f32.mrb[0].mxu0
      %v2182 = vadd.f32 0.0, %v2181
      %v2183 = vpop.f32.mrb[0].mxu0
      %2184 = vmatprep.mubr.bf16.mxu0 0
      %2185 = vmatmul.mubr.bf16.gmra.mrb[0].mxu0 %v420
      %v2186 = vpop.f32.mrb[0].mxu0
      %v2187 = vadd.f32 0.0, %v2186
      %v2188 = vpop.f32.mrb[0].mxu0
      %v2189 = vpop.f32.mrb[0].mxu0
      %v2190 = vadd.f32 0.0, %v2189
      %v2191 = vpop.f32.mrb[0].mxu0
      %2192 = vmatprep.mubr.bf16.mxu0 0
      %2193 = vmatmul.mubr.bf16.gmra.mrb[0].mxu0 %v421
      %v2194 = vpop.f32.mrb[0].mxu0
      %v2195 = vadd.f32 0.0, %v2194
      %v2196 = vpop.f32.mrb[0].mxu0
      %v2197 = vpop.f32.mrb[0].mxu0
      %v2198 = vadd.f32 0.0, %v2197
      %v2199 = vpop.f32.mrb[0].mxu0
      %2200 = vmatprep.mubr.bf16.mxu0 0
      %2201 = vmatmul.mubr.bf16.gmra.mrb[0].mxu0 %v422
      %v2202 = vpop.f32.mrb[0].mxu0
      %v2203 = vadd.f32 0.0, %v2202
      %v2204 = vpop.f32.mrb[0].mxu0
      %v2205 = vpop.f32.mrb[0].mxu0
      %v2206 = vadd.f32 0.0, %v2205
      %v2207 = vpop.f32.mrb[0].mxu0
      %2208 = vmatprep.mubr.bf16.mxu0 0
      %2209 = vmatmul.mubr.bf16.gmra.mrb[0].mxu0 %v423
      %v2210 = vpop.f32.mrb[0].mxu0
      %v2211 = vadd.f32 0.0, %v2210
      %v2212 = vpop.f32.mrb[0].mxu0
      %v2213 = vpop.f32.mrb[0].mxu0
      %v2214 = vadd.f32 0.0, %v2213
      %v2215 = vpop.f32.mrb[0].mxu0
      %2216 = vmatprep.mubr.bf16.mxu0 0
      %2217 = vmatmul.mubr.bf16.gmra.mrb[0].mxu0 %v424
      %v2218 = vpop.f32.mrb[0].mxu0
      %v2219 = vadd.f32 0.0, %v2218
      %v2220 = vpop.f32.mrb[0].mxu0
      %v2221 = vpop.f32.mrb[0].mxu0
      %v2222 = vadd.f32 0.0, %v2221
      %v2223 = vpop.f32.mrb[0].mxu0
      %2224 = vmatprep.mubr.bf16.mxu0 0
      %2225 = vmatmul.mubr.bf16.gmra.mrb[0].mxu0 %v425
      %v2226 = vpop.f32.mrb[0].mxu0
      %v2227 = vadd.f32 0.0, %v2226
      %v2228 = vpop.f32.mrb[0].mxu0
      %v2229 = vpop.f32.mrb[0].mxu0
      %v2230 = vadd.f32 0.0, %v2229
      %v2231 = vpop.f32.mrb[0].mxu0
      %2232 = vmatprep.mubr.bf16.mxu0 0
      %2233 = vmatmul.mubr.bf16.gmra.mrb[0].mxu0 %v426
      %v2234 = vpop.f32.mrb[0].mxu0
      %v2235 = vadd.f32 0.0, %v2234
      %v2236 = vpop.f32.mrb[0].mxu0
      %v2237 = vpop.f32.mrb[0].mxu0
      %v2238 = vadd.f32 0.0, %v2237
      %v2239 = vpop.f32.mrb[0].mxu0
      %2240 = vmatprep.mubr.bf16.mxu0 0
      %2241 = vmatmul.mubr.bf16.gmra.mrb[0].mxu0 %v427
      %v2242 = vpop.f32.mrb[0].mxu0
      %v2243 = vadd.f32 0.0, %v2242
      %v2244 = vpop.f32.mrb[0].mxu0
      %v2245 = vpop.f32.mrb[0].mxu0
      %v2246 = vadd.f32 0.0, %v2245
      %v2247 = vpop.f32.mrb[0].mxu0
      %2248 = vmatprep.mubr.bf16.mxu0 0
      %2249 = vmatmul.mubr.bf16.gmra.mrb[0].mxu0 %v428
      %v2250 = vpop.f32.mrb[0].mxu0
      %v2251 = vadd.f32 0.0, %v2250
      %v2252 = vpop.f32.mrb[0].mxu0
      %v2253 = vpop.f32.mrb[0].mxu0
      %v2254 = vadd.f32 0.0, %v2253
      %v2255 = vpop.f32.mrb[0].mxu0
      %2256 = vmatprep.mubr.bf16.mxu0 0
      %2257 = vmatmul.mubr.bf16.gmra.mrb[0].mxu0 %v429
      %v2258 = vpop.f32.mrb[0].mxu0
      %v2259 = vadd.f32 0.0, %v2258
      %v2260 = vpop.f32.mrb[0].mxu0
      %v2261 = vpop.f32.mrb[0].mxu0
      %v2262 = vadd.f32 0.0, %v2261
      %v2263 = vpop.f32.mrb[0].mxu0
      %2264 = vmatprep.mubr.bf16.mxu0 0
      %2265 = vmatmul.mubr.bf16.gmra.mrb[0].mxu0 %v2062
      %v2266 = vpop.f32.mrb[0].mxu0
      %v2267 = vadd.f32 0.0, %v2266
      %v2268 = vpop.f32.mrb[0].mxu0
      %v2269 = vpop.f32.mrb[0].mxu0
      %v2270 = vadd.f32 0.0, %v2269
      %v2271 = vpop.f32.mrb[0].mxu0
      %2272 = vdwg.mxu0
      %v2273 = vadd.f32 %v2009, %v2147
      %v2274 = vadd.f32 %v2010, %v2150
      %v2275 = vadd.f32 %v2011, %v2155
      %v2276 = vadd.f32 %v2012, %v2158
      %v2277 = vadd.f32 %v2013, %v2163
      %v2278 = vadd.f32 %v2014, %v2166
      %v2279 = vadd.f32 %v2015, %v2171
      %v2280 = vadd.f32 %v2016, %v2174
      %v2281 = vadd.f32 %v2017, %v2179
      %v2282 = vadd.f32 %v2018, %v2182
      %v2283 = vadd.f32 %v2019, %v2187
      %v2284 = vadd.f32 %v2020, %v2190
      %v2285 = vadd.f32 %v2021, %v2195
      %v2286 = vadd.f32 %v2022, %v2198
      %v2287 = vadd.f32 %v2023, %v2203
      %v2288 = vadd.f32 %v2024, %v2206
      %v2289 = vadd.f32 %v2025, %v2211
      %v2290 = vadd.f32 %v2026, %v2214
      %v2291 = vadd.f32 %v2027, %v2219
      %v2292 = vadd.f32 %v2028, %v2222
      %v2293 = vadd.f32 %v2029, %v2227
      %v2294 = vadd.f32 %v2030, %v2230
      %v2295 = vadd.f32 %v2031, %v2235
      %v2296 = vadd.f32 %v2032, %v2238
      %v2297 = vadd.f32 %v2033, %v2243
      %v2298 = vadd.f32 %v2034, %v2246
      %v2299 = vadd.f32 %v2035, %v2251
      %v2300 = vadd.f32 %v2036, %v2254
      %v2301 = vadd.f32 %v2037, %v2259
      %v2302 = vadd.f32 %v2038, %v2262
      %v2303 = vadd.f32 %v2039, %v2267
      %v2304 = vadd.f32 %v2040, %v2270
      %2305 = vst [vmem:[#allocation2] sm:$0xff] %v2273
      %2306 = vst [vmem:[#allocation2 + $0x8] sm:$0xff] %v2274
      %2307 = vst [vmem:[#allocation2 + $0x10] sm:$0xff] %v2275
      %2308 = vst [vmem:[#allocation2 + $0x18] sm:$0xff] %v2276
      %2309 = vst [vmem:[#allocation2 + $0x20] sm:$0xff] %v2277
      %2310 = vst [vmem:[#allocation2 + $0x28] sm:$0xff] %v2278
      %2311 = vst [vmem:[#allocation2 + $0x30] sm:$0xff] %v2279
      %2312 = vst [vmem:[#allocation2 + $0x38] sm:$0xff] %v2280
      %2313 = vst [vmem:[#allocation2 + $0x40] sm:$0xff] %v2281
      %2314 = vst [vmem:[#allocation2 + $0x48] sm:$0xff] %v2282
      %2315 = vst [vmem:[#allocation2 + $0x50] sm:$0xff] %v2283
      %2316 = vst [vmem:[#allocation2 + $0x58] sm:$0xff] %v2284
      %2317 = vst [vmem:[#allocation2 + $0x60] sm:$0xff] %v2285
      %2318 = vst [vmem:[#allocation2 + $0x68] sm:$0xff] %v2286
      %2319 = vst [vmem:[#allocation2 + $0x70] sm:$0xff] %v2287
      %2320 = vst [vmem:[#allocation2 + $0x78] sm:$0xff] %v2288
      %2321 = vst [vmem:[#allocation2 + $0x80] sm:$0xff] %v2289
      %2322 = vst [vmem:[#allocation2 + $0x88] sm:$0xff] %v2290
      %2323 = vst [vmem:[#allocation2 + $0x90] sm:$0xff] %v2291
      %2324 = vst [vmem:[#allocation2 + $0x98] sm:$0xff] %v2292
      %2325 = vst [vmem:[#allocation2 + $0xa0] sm:$0xff] %v2293
      %2326 = vst [vmem:[#allocation2 + $0xa8] sm:$0xff] %v2294
      %2327 = vst [vmem:[#allocation2 + $0xb0] sm:$0xff] %v2295
      %2328 = vst [vmem:[#allocation2 + $0xb8] sm:$0xff] %v2296
      %2329 = vst [vmem:[#allocation2 + $0xc0] sm:$0xff] %v2297
      %2330 = vst [vmem:[#allocation2 + $0xc8] sm:$0xff] %v2298
      %2331 = vst [vmem:[#allocation2 + $0xd0] sm:$0xff] %v2299
      %2332 = vst [vmem:[#allocation2 + $0xd8] sm:$0xff] %v2300
      %2333 = vst [vmem:[#allocation2 + $0xe0] sm:$0xff] %v2301
      %2334 = vst [vmem:[#allocation2 + $0xe8] sm:$0xff] %v2302
      %2335 = vst [vmem:[#allocation2 + $0xf0] sm:$0xff] %v2303
      %2336 = vst [vmem:[#allocation2 + $0xf8] sm:$0xff] %v2304
      %v2338 = vshrl.u32 %v264, 16
      %v2340 = vrot.slane %v2338, 4
      %v2341 = vshll.u32 %v264, 16
      %v2343 = vrot.slane %v2341, 5
      %v2344 = vor.u32 %v2340, %v2343
      %v2345 = vrot.slane %v2344, 4
      %v2347 = vshll.u32 %v265, 16
      %v2349 = vrot.slane %v2347, 5
      %v2350 = vsel %vm721, %v2345, %v2349
      %v2351 = vshrl.u32 %v265, 16
      %v2353 = vrot.slane %v2351, 4
      %v2354 = vor.u32 %v2353, %v2349
      %v2355 = vrot.slane %v2354, 4
      %v2357 = vshll.u32 %v266, 16
      %v2359 = vrot.slane %v2357, 5
      %v2360 = vsel %vm721, %v2355, %v2359
      %v2361 = vld [vmem:[#allocation2] sm:$0xff]
      %v2362 = vld [vmem:[#allocation2 + $0x8] sm:$0xff]
      %v2363 = vld [vmem:[#allocation2 + $0x10] sm:$0xff]
      %v2364 = vld [vmem:[#allocation2 + $0x18] sm:$0xff]
      %v2365 = vld [vmem:[#allocation2 + $0x20] sm:$0xff]
      %v2366 = vld [vmem:[#allocation2 + $0x28] sm:$0xff]
      %v2367 = vld [vmem:[#allocation2 + $0x30] sm:$0xff]
      %v2368 = vld [vmem:[#allocation2 + $0x38] sm:$0xff]
      %v2369 = vld [vmem:[#allocation2 + $0x40] sm:$0xff]
      %v2370 = vld [vmem:[#allocation2 + $0x48] sm:$0xff]
      %v2371 = vld [vmem:[#allocation2 + $0x50] sm:$0xff]
      %v2372 = vld [vmem:[#allocation2 + $0x58] sm:$0xff]
      %v2373 = vld [vmem:[#allocation2 + $0x60] sm:$0xff]
      %v2374 = vld [vmem:[#allocation2 + $0x68] sm:$0xff]
      %v2375 = vld [vmem:[#allocation2 + $0x70] sm:$0xff]
      %v2376 = vld [vmem:[#allocation2 + $0x78] sm:$0xff]
      %v2377 = vld [vmem:[#allocation2 + $0x80] sm:$0xff]
      %v2378 = vld [vmem:[#allocation2 + $0x88] sm:$0xff]
      %v2379 = vld [vmem:[#allocation2 + $0x90] sm:$0xff]
      %v2380 = vld [vmem:[#allocation2 + $0x98] sm:$0xff]
      %v2381 = vld [vmem:[#allocation2 + $0xa0] sm:$0xff]
      %v2382 = vld [vmem:[#allocation2 + $0xa8] sm:$0xff]
      %v2383 = vld [vmem:[#allocation2 + $0xb0] sm:$0xff]
      %v2384 = vld [vmem:[#allocation2 + $0xb8] sm:$0xff]
      %v2385 = vld [vmem:[#allocation2 + $0xc0] sm:$0xff]
      %v2386 = vld [vmem:[#allocation2 + $0xc8] sm:$0xff]
      %v2387 = vld [vmem:[#allocation2 + $0xd0] sm:$0xff]
      %v2388 = vld [vmem:[#allocation2 + $0xd8] sm:$0xff]
      %v2389 = vld [vmem:[#allocation2 + $0xe0] sm:$0xff]
      %v2390 = vld [vmem:[#allocation2 + $0xe8] sm:$0xff]
      %v2391 = vld [vmem:[#allocation2 + $0xf0] sm:$0xff]
      %v2392 = vld [vmem:[#allocation2 + $0xf8] sm:$0xff]
      %s2393 = scalar_lea.vmem %s1, 256
      %v2394 = vld [vmem:[%s2393] sm:$0xf]
      %v2395 = vld [vmem:[%s2393 + $0x4] sm:$0xf]
      %v2396 = vld [vmem:[%s2393 + $0x8] sm:$0xf]
      %v2397 = vld [vmem:[%s2393 + $0xc] sm:$0xf]
      %v2398 = vld [vmem:[%s2393 + $0x10] sm:$0xf]
      %v2399 = vld [vmem:[%s2393 + $0x14] sm:$0xf]
      %v2400 = vld [vmem:[%s2393 + $0x18] sm:$0xf]
      %v2401 = vld [vmem:[%s2393 + $0x1c] sm:$0xf]
      %v2402 = vld [vmem:[%s2393 + $0x20] sm:$0xf]
      %v2403 = vld [vmem:[%s2393 + $0x24] sm:$0xf]
      %v2404 = vld [vmem:[%s2393 + $0x28] sm:$0xf]
      %v2405 = vld [vmem:[%s2393 + $0x2c] sm:$0xf]
      %v2406 = vld [vmem:[%s2393 + $0x30] sm:$0xf]
      %v2407 = vld [vmem:[%s2393 + $0x34] sm:$0xf]
      %v2408 = vld [vmem:[%s2393 + $0x38] sm:$0xf]
      %v2409 = vld [vmem:[%s2393 + $0x3c] sm:$0xf]
      %v2410 = vunpack.c.l.b16 %v2350
      %v2411 = vunpack.c.l.b16 %v2360
      %v2412 = vpack.c.b16 %v2411, %v2410
      %v2430 = vunpack.c.l.b16 %v2394
      %v2431 = vunpack.c.l.b16 %v2395
      %v2432 = vunpack.c.l.b16 %v2396
      %v2433 = vunpack.c.l.b16 %v2397
      %v2434 = vunpack.c.l.b16 %v2398
      %v2435 = vunpack.c.l.b16 %v2399
      %v2436 = vunpack.c.l.b16 %v2400
      %v2437 = vunpack.c.l.b16 %v2401
      %v2438 = vunpack.c.l.b16 %v2402
      %v2439 = vunpack.c.l.b16 %v2403
      %v2440 = vunpack.c.l.b16 %v2404
      %v2441 = vunpack.c.l.b16 %v2405
      %v2442 = vunpack.c.l.b16 %v2406
      %v2443 = vunpack.c.l.b16 %v2407
      %v2444 = vunpack.c.l.b16 %v2408
      %v2445 = vunpack.c.l.b16 %v2409
      %v2446 = vpack.c.b16 %v2431, %v2430
      %v2447 = vpack.c.b16 %v2433, %v2432
      %v2448 = vpack.c.b16 %v2435, %v2434
      %v2449 = vpack.c.b16 %v2437, %v2436
      %v2450 = vpack.c.b16 %v2439, %v2438
      %v2451 = vpack.c.b16 %v2441, %v2440
      %v2452 = vpack.c.b16 %v2443, %v2442
      %v2453 = vpack.c.b16 %v2445, %v2444
      %2462 = vmatprep.subr.bf16.mxu0 0
      %2463 = vmatpush1.bf16.msra.mxu0 %v2446
      %2464 = vmatprep.subr.bf16.mxu0 0
      %2465 = vmatpush1.bf16.msra.mxu0 %v2447
      %2466 = vmatprep.subr.bf16.mxu0 0
      %2467 = vmatpush1.bf16.msra.mxu0 %v2448
      %2468 = vmatprep.subr.bf16.mxu0 0
      %2469 = vmatpush1.bf16.msra.mxu0 %v2449
      %2470 = vmatprep.subr.bf16.mxu0 0
      %2471 = vmatpush1.bf16.msra.mxu0 %v2450
      %2472 = vmatprep.subr.bf16.mxu0 0
      %2473 = vmatpush1.bf16.msra.mxu0 %v2451
      %2474 = vmatprep.subr.bf16.mxu0 0
      %2475 = vmatpush1.bf16.msra.mxu0 %v2452
      %2476 = vmatprep.subr.bf16.mxu0 0
      %2477 = vmatpush1.bf16.msra.mxu0 %v2453
      %2478 = vmatprep.subr.bf16.mxu0 0
      %2479 = vmatpush1.bf16.msra.mxu0 0
      %2480 = vmatprep.subr.bf16.mxu0 0
      %2481 = vmatpush1.bf16.msra.mxu0 0
      %2482 = vmatprep.subr.bf16.mxu0 0
      %2483 = vmatpush1.bf16.msra.mxu0 0
      %2484 = vmatprep.subr.bf16.mxu0 0
      %2485 = vmatpush1.bf16.msra.mxu0 0
      %2486 = vmatprep.subr.bf16.mxu0 0
      %2487 = vmatpush1.bf16.msra.mxu0 0
      %2488 = vmatprep.subr.bf16.mxu0 0
      %2489 = vmatpush1.bf16.msra.mxu0 0
      %2490 = vmatprep.subr.bf16.mxu0 0
      %2491 = vmatpush1.bf16.msra.mxu0 0
      %2492 = vmatprep.subr.bf16.mxu0 0
      %2493 = vmatpush1.bf16.msra.mxu0 0
      %2494 = vmatprep.mubr.bf16.mxu0 0
      %2495 = vmatmul.mubr.bf16.gmra.mrb[0].mxu0 %v1188
      %v2496 = vpop.f32.mrb[0].mxu0
      %v2497 = vadd.f32 0.0, %v2496
      %v2498 = vpop.f32.mrb[0].mxu0
      %v2499 = vpop.f32.mrb[0].mxu0
      %v2500 = vadd.f32 0.0, %v2499
      %v2501 = vpop.f32.mrb[0].mxu0
      %2502 = vmatprep.mubr.bf16.mxu0 0
      %2503 = vmatmul.mubr.bf16.gmra.mrb[0].mxu0 %v1189
      %v2504 = vpop.f32.mrb[0].mxu0
      %v2505 = vadd.f32 0.0, %v2504
      %v2506 = vpop.f32.mrb[0].mxu0
      %v2507 = vpop.f32.mrb[0].mxu0
      %v2508 = vadd.f32 0.0, %v2507
      %v2509 = vpop.f32.mrb[0].mxu0
      %2510 = vmatprep.mubr.bf16.mxu0 0
      %2511 = vmatmul.mubr.bf16.gmra.mrb[0].mxu0 %v1190
      %v2512 = vpop.f32.mrb[0].mxu0
      %v2513 = vadd.f32 0.0, %v2512
      %v2514 = vpop.f32.mrb[0].mxu0
      %v2515 = vpop.f32.mrb[0].mxu0
      %v2516 = vadd.f32 0.0, %v2515
      %v2517 = vpop.f32.mrb[0].mxu0
      %2518 = vmatprep.mubr.bf16.mxu0 0
      %2519 = vmatmul.mubr.bf16.gmra.mrb[0].mxu0 %v1191
      %v2520 = vpop.f32.mrb[0].mxu0
      %v2521 = vadd.f32 0.0, %v2520
      %v2522 = vpop.f32.mrb[0].mxu0
      %v2523 = vpop.f32.mrb[0].mxu0
      %v2524 = vadd.f32 0.0, %v2523
      %v2525 = vpop.f32.mrb[0].mxu0
      %2526 = vmatprep.mubr.bf16.mxu0 0
      %2527 = vmatmul.mubr.bf16.gmra.mrb[0].mxu0 %v1192
      %v2528 = vpop.f32.mrb[0].mxu0
      %v2529 = vadd.f32 0.0, %v2528
      %v2530 = vpop.f32.mrb[0].mxu0
      %v2531 = vpop.f32.mrb[0].mxu0
      %v2532 = vadd.f32 0.0, %v2531
      %v2533 = vpop.f32.mrb[0].mxu0
      %2534 = vmatprep.mubr.bf16.mxu0 0
      %2535 = vmatmul.mubr.bf16.gmra.mrb[0].mxu0 %v1193
      %v2536 = vpop.f32.mrb[0].mxu0
      %v2537 = vadd.f32 0.0, %v2536
      %v2538 = vpop.f32.mrb[0].mxu0
      %v2539 = vpop.f32.mrb[0].mxu0
      %v2540 = vadd.f32 0.0, %v2539
      %v2541 = vpop.f32.mrb[0].mxu0
      %2542 = vmatprep.mubr.bf16.mxu0 0
      %2543 = vmatmul.mubr.bf16.gmra.mrb[0].mxu0 %v1194
      %v2544 = vpop.f32.mrb[0].mxu0
      %v2545 = vadd.f32 0.0, %v2544
      %v2546 = vpop.f32.mrb[0].mxu0
      %v2547 = vpop.f32.mrb[0].mxu0
      %v2548 = vadd.f32 0.0, %v2547
      %v2549 = vpop.f32.mrb[0].mxu0
      %2550 = vmatprep.mubr.bf16.mxu0 0
      %2551 = vmatmul.mubr.bf16.gmra.mrb[0].mxu0 %v1195
      %v2552 = vpop.f32.mrb[0].mxu0
      %v2553 = vadd.f32 0.0, %v2552
      %v2554 = vpop.f32.mrb[0].mxu0
      %v2555 = vpop.f32.mrb[0].mxu0
      %v2556 = vadd.f32 0.0, %v2555
      %v2557 = vpop.f32.mrb[0].mxu0
      %2558 = vmatprep.mubr.bf16.mxu0 0
      %2559 = vmatmul.mubr.bf16.gmra.mrb[0].mxu0 %v1196
      %v2560 = vpop.f32.mrb[0].mxu0
      %v2561 = vadd.f32 0.0, %v2560
      %v2562 = vpop.f32.mrb[0].mxu0
      %v2563 = vpop.f32.mrb[0].mxu0
      %v2564 = vadd.f32 0.0, %v2563
      %v2565 = vpop.f32.mrb[0].mxu0
      %2566 = vmatprep.mubr.bf16.mxu0 0
      %2567 = vmatmul.mubr.bf16.gmra.mrb[0].mxu0 %v1197
      %v2568 = vpop.f32.mrb[0].mxu0
      %v2569 = vadd.f32 0.0, %v2568
      %v2570 = vpop.f32.mrb[0].mxu0
      %v2571 = vpop.f32.mrb[0].mxu0
      %v2572 = vadd.f32 0.0, %v2571
      %v2573 = vpop.f32.mrb[0].mxu0
      %2574 = vmatprep.mubr.bf16.mxu0 0
      %2575 = vmatmul.mubr.bf16.gmra.mrb[0].mxu0 %v1198
      %v2576 = vpop.f32.mrb[0].mxu0
      %v2577 = vadd.f32 0.0, %v2576
      %v2578 = vpop.f32.mrb[0].mxu0
      %v2579 = vpop.f32.mrb[0].mxu0
      %v2580 = vadd.f32 0.0, %v2579
      %v2581 = vpop.f32.mrb[0].mxu0
      %2582 = vmatprep.mubr.bf16.mxu0 0
      %2583 = vmatmul.mubr.bf16.gmra.mrb[0].mxu0 %v1199
      %v2584 = vpop.f32.mrb[0].mxu0
      %v2585 = vadd.f32 0.0, %v2584
      %v2586 = vpop.f32.mrb[0].mxu0
      %v2587 = vpop.f32.mrb[0].mxu0
      %v2588 = vadd.f32 0.0, %v2587
      %v2589 = vpop.f32.mrb[0].mxu0
      %2590 = vmatprep.mubr.bf16.mxu0 0
      %2591 = vmatmul.mubr.bf16.gmra.mrb[0].mxu0 %v1200
      %v2592 = vpop.f32.mrb[0].mxu0
      %v2593 = vadd.f32 0.0, %v2592
      %v2594 = vpop.f32.mrb[0].mxu0
      %v2595 = vpop.f32.mrb[0].mxu0
      %v2596 = vadd.f32 0.0, %v2595
      %v2597 = vpop.f32.mrb[0].mxu0
      %2598 = vmatprep.mubr.bf16.mxu0 0
      %2599 = vmatmul.mubr.bf16.gmra.mrb[0].mxu0 %v1201
      %v2600 = vpop.f32.mrb[0].mxu0
      %v2601 = vadd.f32 0.0, %v2600
      %v2602 = vpop.f32.mrb[0].mxu0
      %v2603 = vpop.f32.mrb[0].mxu0
      %v2604 = vadd.f32 0.0, %v2603
      %v2605 = vpop.f32.mrb[0].mxu0
      %2606 = vmatprep.mubr.bf16.mxu0 0
      %2607 = vmatmul.mubr.bf16.gmra.mrb[0].mxu0 %v1202
      %v2608 = vpop.f32.mrb[0].mxu0
      %v2609 = vadd.f32 0.0, %v2608
      %v2610 = vpop.f32.mrb[0].mxu0
      %v2611 = vpop.f32.mrb[0].mxu0
      %v2612 = vadd.f32 0.0, %v2611
      %v2613 = vpop.f32.mrb[0].mxu0
      %2614 = vmatprep.mubr.bf16.mxu0 0
      %2615 = vmatmul.mubr.bf16.gmra.mrb[0].mxu0 %v2412
      %v2616 = vpop.f32.mrb[0].mxu0
      %v2617 = vadd.f32 0.0, %v2616
      %v2618 = vpop.f32.mrb[0].mxu0
      %v2619 = vpop.f32.mrb[0].mxu0
      %v2620 = vadd.f32 0.0, %v2619
      %v2621 = vpop.f32.mrb[0].mxu0
      %2622 = vdwg.mxu0
      %v2623 = vadd.f32 %v2361, %v2497
      %v2624 = vadd.f32 %v2362, %v2500
      %v2625 = vadd.f32 %v2363, %v2505
      %v2626 = vadd.f32 %v2364, %v2508
      %v2627 = vadd.f32 %v2365, %v2513
      %v2628 = vadd.f32 %v2366, %v2516
      %v2629 = vadd.f32 %v2367, %v2521
      %v2630 = vadd.f32 %v2368, %v2524
      %v2631 = vadd.f32 %v2369, %v2529
      %v2632 = vadd.f32 %v2370, %v2532
      %v2633 = vadd.f32 %v2371, %v2537
      %v2634 = vadd.f32 %v2372, %v2540
      %v2635 = vadd.f32 %v2373, %v2545
      %v2636 = vadd.f32 %v2374, %v2548
      %v2637 = vadd.f32 %v2375, %v2553
      %v2638 = vadd.f32 %v2376, %v2556
      %v2639 = vadd.f32 %v2377, %v2561
      %v2640 = vadd.f32 %v2378, %v2564
      %v2641 = vadd.f32 %v2379, %v2569
      %v2642 = vadd.f32 %v2380, %v2572
      %v2643 = vadd.f32 %v2381, %v2577
      %v2644 = vadd.f32 %v2382, %v2580
      %v2645 = vadd.f32 %v2383, %v2585
      %v2646 = vadd.f32 %v2384, %v2588
      %v2647 = vadd.f32 %v2385, %v2593
      %v2648 = vadd.f32 %v2386, %v2596
      %v2649 = vadd.f32 %v2387, %v2601
      %v2650 = vadd.f32 %v2388, %v2604
      %v2651 = vadd.f32 %v2389, %v2609
      %v2652 = vadd.f32 %v2390, %v2612
      %v2653 = vadd.f32 %v2391, %v2617
      %v2654 = vadd.f32 %v2392, %v2620
      %2655 = vst [vmem:[#allocation2] sm:$0xff] %v2623
      %2656 = vst [vmem:[#allocation2 + $0x8] sm:$0xff] %v2624
      %2657 = vst [vmem:[#allocation2 + $0x10] sm:$0xff] %v2625
      %2658 = vst [vmem:[#allocation2 + $0x18] sm:$0xff] %v2626
      %2659 = vst [vmem:[#allocation2 + $0x20] sm:$0xff] %v2627
      %2660 = vst [vmem:[#allocation2 + $0x28] sm:$0xff] %v2628
      %2661 = vst [vmem:[#allocation2 + $0x30] sm:$0xff] %v2629
      %2662 = vst [vmem:[#allocation2 + $0x38] sm:$0xff] %v2630
      %2663 = vst [vmem:[#allocation2 + $0x40] sm:$0xff] %v2631
      %2664 = vst [vmem:[#allocation2 + $0x48] sm:$0xff] %v2632
      %2665 = vst [vmem:[#allocation2 + $0x50] sm:$0xff] %v2633
      %2666 = vst [vmem:[#allocation2 + $0x58] sm:$0xff] %v2634
      %2667 = vst [vmem:[#allocation2 + $0x60] sm:$0xff] %v2635
      %2668 = vst [vmem:[#allocation2 + $0x68] sm:$0xff] %v2636
      %2669 = vst [vmem:[#allocation2 + $0x70] sm:$0xff] %v2637
      %2670 = vst [vmem:[#allocation2 + $0x78] sm:$0xff] %v2638
      %2671 = vst [vmem:[#allocation2 + $0x80] sm:$0xff] %v2639
      %2672 = vst [vmem:[#allocation2 + $0x88] sm:$0xff] %v2640
      %2673 = vst [vmem:[#allocation2 + $0x90] sm:$0xff] %v2641
      %2674 = vst [vmem:[#allocation2 + $0x98] sm:$0xff] %v2642
      %2675 = vst [vmem:[#allocation2 + $0xa0] sm:$0xff] %v2643
      %2676 = vst [vmem:[#allocation2 + $0xa8] sm:$0xff] %v2644
      %2677 = vst [vmem:[#allocation2 + $0xb0] sm:$0xff] %v2645
      %2678 = vst [vmem:[#allocation2 + $0xb8] sm:$0xff] %v2646
      %2679 = vst [vmem:[#allocation2 + $0xc0] sm:$0xff] %v2647
      %2680 = vst [vmem:[#allocation2 + $0xc8] sm:$0xff] %v2648
      %2681 = vst [vmem:[#allocation2 + $0xd0] sm:$0xff] %v2649
      %2682 = vst [vmem:[#allocation2 + $0xd8] sm:$0xff] %v2650
      %2683 = vst [vmem:[#allocation2 + $0xe0] sm:$0xff] %v2651
      %2684 = vst [vmem:[#allocation2 + $0xe8] sm:$0xff] %v2652
      %2685 = vst [vmem:[#allocation2 + $0xf0] sm:$0xff] %v2653
      %2686 = vst [vmem:[#allocation2 + $0xf8] sm:$0xff] %v2654
      %v2688 = vrot.slane %v264, 5
      %v2689 = vrot.slane %v2688, 4
      %v2690 = vrot.slane %v265, 5
      %v2691 = vsel %vm1510, %v2689, %v2690
      %v2692 = vrot.slane %v2690, 4
      %v2693 = vrot.slane %v266, 5
      %v2694 = vsel %vm1510, %v2692, %v2693
      %v2695 = vld [vmem:[#allocation2] sm:$0xff]
      %v2696 = vld [vmem:[#allocation2 + $0x8] sm:$0xff]
      %v2697 = vld [vmem:[#allocation2 + $0x10] sm:$0xff]
      %v2698 = vld [vmem:[#allocation2 + $0x18] sm:$0xff]
      %v2699 = vld [vmem:[#allocation2 + $0x20] sm:$0xff]
      %v2700 = vld [vmem:[#allocation2 + $0x28] sm:$0xff]
      %v2701 = vld [vmem:[#allocation2 + $0x30] sm:$0xff]
      %v2702 = vld [vmem:[#allocation2 + $0x38] sm:$0xff]
      %v2703 = vld [vmem:[#allocation2 + $0x40] sm:$0xff]
      %v2704 = vld [vmem:[#allocation2 + $0x48] sm:$0xff]
      %v2705 = vld [vmem:[#allocation2 + $0x50] sm:$0xff]
      %v2706 = vld [vmem:[#allocation2 + $0x58] sm:$0xff]
      %v2707 = vld [vmem:[#allocation2 + $0x60] sm:$0xff]
      %v2708 = vld [vmem:[#allocation2 + $0x68] sm:$0xff]
      %v2709 = vld [vmem:[#allocation2 + $0x70] sm:$0xff]
      %v2710 = vld [vmem:[#allocation2 + $0x78] sm:$0xff]
      %v2711 = vld [vmem:[#allocation2 + $0x80] sm:$0xff]
      %v2712 = vld [vmem:[#allocation2 + $0x88] sm:$0xff]
      %v2713 = vld [vmem:[#allocation2 + $0x90] sm:$0xff]
      %v2714 = vld [vmem:[#allocation2 + $0x98] sm:$0xff]
      %v2715 = vld [vmem:[#allocation2 + $0xa0] sm:$0xff]
      %v2716 = vld [vmem:[#allocation2 + $0xa8] sm:$0xff]
      %v2717 = vld [vmem:[#allocation2 + $0xb0] sm:$0xff]
      %v2718 = vld [vmem:[#allocation2 + $0xb8] sm:$0xff]
      %v2719 = vld [vmem:[#allocation2 + $0xc0] sm:$0xff]
      %v2720 = vld [vmem:[#allocation2 + $0xc8] sm:$0xff]
      %v2721 = vld [vmem:[#allocation2 + $0xd0] sm:$0xff]
      %v2722 = vld [vmem:[#allocation2 + $0xd8] sm:$0xff]
      %v2723 = vld [vmem:[#allocation2 + $0xe0] sm:$0xff]
      %v2724 = vld [vmem:[#allocation2 + $0xe8] sm:$0xff]
      %v2725 = vld [vmem:[#allocation2 + $0xf0] sm:$0xff]
      %v2726 = vld [vmem:[#allocation2 + $0xf8] sm:$0xff]
      %s2727 = scalar_lea.vmem %s1, 320
      %v2728 = vld [vmem:[%s2727] sm:$0xf]
      %v2729 = vld [vmem:[%s2727 + $0x4] sm:$0xf]
      %v2730 = vld [vmem:[%s2727 + $0x8] sm:$0xf]
      %v2731 = vld [vmem:[%s2727 + $0xc] sm:$0xf]
      %v2732 = vld [vmem:[%s2727 + $0x10] sm:$0xf]
      %v2733 = vld [vmem:[%s2727 + $0x14] sm:$0xf]
      %v2734 = vld [vmem:[%s2727 + $0x18] sm:$0xf]
      %v2735 = vld [vmem:[%s2727 + $0x1c] sm:$0xf]
      %v2736 = vld [vmem:[%s2727 + $0x20] sm:$0xf]
      %v2737 = vld [vmem:[%s2727 + $0x24] sm:$0xf]
      %v2738 = vld [vmem:[%s2727 + $0x28] sm:$0xf]
      %v2739 = vld [vmem:[%s2727 + $0x2c] sm:$0xf]
      %v2740 = vld [vmem:[%s2727 + $0x30] sm:$0xf]
      %v2741 = vld [vmem:[%s2727 + $0x34] sm:$0xf]
      %v2742 = vld [vmem:[%s2727 + $0x38] sm:$0xf]
      %v2743 = vld [vmem:[%s2727 + $0x3c] sm:$0xf]
      %v2744 = vunpack.c.l.b16 %v2691
      %v2745 = vunpack.c.l.b16 %v2694
      %v2746 = vpack.c.b16 %v2745, %v2744
      %v2764 = vunpack.c.l.b16 %v2728
      %v2765 = vunpack.c.l.b16 %v2729
      %v2766 = vunpack.c.l.b16 %v2730
      %v2767 = vunpack.c.l.b16 %v2731
      %v2768 = vunpack.c.l.b16 %v2732
      %v2769 = vunpack.c.l.b16 %v2733
      %v2770 = vunpack.c.l.b16 %v2734
      %v2771 = vunpack.c.l.b16 %v2735
      %v2772 = vunpack.c.l.b16 %v2736
      %v2773 = vunpack.c.l.b16 %v2737
      %v2774 = vunpack.c.l.b16 %v2738
      %v2775 = vunpack.c.l.b16 %v2739
      %v2776 = vunpack.c.l.b16 %v2740
      %v2777 = vunpack.c.l.b16 %v2741
      %v2778 = vunpack.c.l.b16 %v2742
      %v2779 = vunpack.c.l.b16 %v2743
      %v2780 = vpack.c.b16 %v2765, %v2764
      %v2781 = vpack.c.b16 %v2767, %v2766
      %v2782 = vpack.c.b16 %v2769, %v2768
      %v2783 = vpack.c.b16 %v2771, %v2770
      %v2784 = vpack.c.b16 %v2773, %v2772
      %v2785 = vpack.c.b16 %v2775, %v2774
      %v2786 = vpack.c.b16 %v2777, %v2776
      %v2787 = vpack.c.b16 %v2779, %v2778
      %2796 = vmatprep.subr.bf16.mxu0 0
      %2797 = vmatpush1.bf16.msra.mxu0 %v2780
      %2798 = vmatprep.subr.bf16.mxu0 0
      %2799 = vmatpush1.bf16.msra.mxu0 %v2781
      %2800 = vmatprep.subr.bf16.mxu0 0
      %2801 = vmatpush1.bf16.msra.mxu0 %v2782
      %2802 = vmatprep.subr.bf16.mxu0 0
      %2803 = vmatpush1.bf16.msra.mxu0 %v2783
      %2804 = vmatprep.subr.bf16.mxu0 0
      %2805 = vmatpush1.bf16.msra.mxu0 %v2784
      %2806 = vmatprep.subr.bf16.mxu0 0
      %2807 = vmatpush1.bf16.msra.mxu0 %v2785
      %2808 = vmatprep.subr.bf16.mxu0 0
      %2809 = vmatpush1.bf16.msra.mxu0 %v2786
      %2810 = vmatprep.subr.bf16.mxu0 0
      %2811 = vmatpush1.bf16.msra.mxu0 %v2787
      %2812 = vmatprep.subr.bf16.mxu0 0
      %2813 = vmatpush1.bf16.msra.mxu0 0
      %2814 = vmatprep.subr.bf16.mxu0 0
      %2815 = vmatpush1.bf16.msra.mxu0 0
      %2816 = vmatprep.subr.bf16.mxu0 0
      %2817 = vmatpush1.bf16.msra.mxu0 0
      %2818 = vmatprep.subr.bf16.mxu0 0
      %2819 = vmatpush1.bf16.msra.mxu0 0
      %2820 = vmatprep.subr.bf16.mxu0 0
      %2821 = vmatpush1.bf16.msra.mxu0 0
      %2822 = vmatprep.subr.bf16.mxu0 0
      %2823 = vmatpush1.bf16.msra.mxu0 0
      %2824 = vmatprep.subr.bf16.mxu0 0
      %2825 = vmatpush1.bf16.msra.mxu0 0
      %2826 = vmatprep.subr.bf16.mxu0 0
      %2827 = vmatpush1.bf16.msra.mxu0 0
      %2828 = vmatprep.mubr.bf16.mxu0 0
      %2829 = vmatmul.mubr.bf16.gmra.mrb[0].mxu0 %v1705
      %v2830 = vpop.f32.mrb[0].mxu0
      %v2831 = vadd.f32 0.0, %v2830
      %v2832 = vpop.f32.mrb[0].mxu0
      %v2833 = vpop.f32.mrb[0].mxu0
      %v2834 = vadd.f32 0.0, %v2833
      %v2835 = vpop.f32.mrb[0].mxu0
      %2836 = vmatprep.mubr.bf16.mxu0 0
      %2837 = vmatmul.mubr.bf16.gmra.mrb[0].mxu0 %v1706
      %v2838 = vpop.f32.mrb[0].mxu0
      %v2839 = vadd.f32 0.0, %v2838
      %v2840 = vpop.f32.mrb[0].mxu0
      %v2841 = vpop.f32.mrb[0].mxu0
      %v2842 = vadd.f32 0.0, %v2841
      %v2843 = vpop.f32.mrb[0].mxu0
      %2844 = vmatprep.mubr.bf16.mxu0 0
      %2845 = vmatmul.mubr.bf16.gmra.mrb[0].mxu0 %v1707
      %v2846 = vpop.f32.mrb[0].mxu0
      %v2847 = vadd.f32 0.0, %v2846
      %v2848 = vpop.f32.mrb[0].mxu0
      %v2849 = vpop.f32.mrb[0].mxu0
      %v2850 = vadd.f32 0.0, %v2849
      %v2851 = vpop.f32.mrb[0].mxu0
      %2852 = vmatprep.mubr.bf16.mxu0 0
      %2853 = vmatmul.mubr.bf16.gmra.mrb[0].mxu0 %v1708
      %v2854 = vpop.f32.mrb[0].mxu0
      %v2855 = vadd.f32 0.0, %v2854
      %v2856 = vpop.f32.mrb[0].mxu0
      %v2857 = vpop.f32.mrb[0].mxu0
      %v2858 = vadd.f32 0.0, %v2857
      %v2859 = vpop.f32.mrb[0].mxu0
      %2860 = vmatprep.mubr.bf16.mxu0 0
      %2861 = vmatmul.mubr.bf16.gmra.mrb[0].mxu0 %v1709
      %v2862 = vpop.f32.mrb[0].mxu0
      %v2863 = vadd.f32 0.0, %v2862
      %v2864 = vpop.f32.mrb[0].mxu0
      %v2865 = vpop.f32.mrb[0].mxu0
      %v2866 = vadd.f32 0.0, %v2865
      %v2867 = vpop.f32.mrb[0].mxu0
      %2868 = vmatprep.mubr.bf16.mxu0 0
      %2869 = vmatmul.mubr.bf16.gmra.mrb[0].mxu0 %v1710
      %v2870 = vpop.f32.mrb[0].mxu0
      %v2871 = vadd.f32 0.0, %v2870
      %v2872 = vpop.f32.mrb[0].mxu0
      %v2873 = vpop.f32.mrb[0].mxu0
      %v2874 = vadd.f32 0.0, %v2873
      %v2875 = vpop.f32.mrb[0].mxu0
      %2876 = vmatprep.mubr.bf16.mxu0 0
      %2877 = vmatmul.mubr.bf16.gmra.mrb[0].mxu0 %v1711
      %v2878 = vpop.f32.mrb[0].mxu0
      %v2879 = vadd.f32 0.0, %v2878
      %v2880 = vpop.f32.mrb[0].mxu0
      %v2881 = vpop.f32.mrb[0].mxu0
      %v2882 = vadd.f32 0.0, %v2881
      %v2883 = vpop.f32.mrb[0].mxu0
      %2884 = vmatprep.mubr.bf16.mxu0 0
      %2885 = vmatmul.mubr.bf16.gmra.mrb[0].mxu0 %v1712
      %v2886 = vpop.f32.mrb[0].mxu0
      %v2887 = vadd.f32 0.0, %v2886
      %v2888 = vpop.f32.mrb[0].mxu0
      %v2889 = vpop.f32.mrb[0].mxu0
      %v2890 = vadd.f32 0.0, %v2889
      %v2891 = vpop.f32.mrb[0].mxu0
      %2892 = vmatprep.mubr.bf16.mxu0 0
      %2893 = vmatmul.mubr.bf16.gmra.mrb[0].mxu0 %v1713
      %v2894 = vpop.f32.mrb[0].mxu0
      %v2895 = vadd.f32 0.0, %v2894
      %v2896 = vpop.f32.mrb[0].mxu0
      %v2897 = vpop.f32.mrb[0].mxu0
      %v2898 = vadd.f32 0.0, %v2897
      %v2899 = vpop.f32.mrb[0].mxu0
      %2900 = vmatprep.mubr.bf16.mxu0 0
      %2901 = vmatmul.mubr.bf16.gmra.mrb[0].mxu0 %v1714
      %v2902 = vpop.f32.mrb[0].mxu0
      %v2903 = vadd.f32 0.0, %v2902
      %v2904 = vpop.f32.mrb[0].mxu0
      %v2905 = vpop.f32.mrb[0].mxu0
      %v2906 = vadd.f32 0.0, %v2905
      %v2907 = vpop.f32.mrb[0].mxu0
      %2908 = vmatprep.mubr.bf16.mxu0 0
      %2909 = vmatmul.mubr.bf16.gmra.mrb[0].mxu0 %v1715
      %v2910 = vpop.f32.mrb[0].mxu0
      %v2911 = vadd.f32 0.0, %v2910
      %v2912 = vpop.f32.mrb[0].mxu0
      %v2913 = vpop.f32.mrb[0].mxu0
      %v2914 = vadd.f32 0.0, %v2913
      %v2915 = vpop.f32.mrb[0].mxu0
      %2916 = vmatprep.mubr.bf16.mxu0 0
      %2917 = vmatmul.mubr.bf16.gmra.mrb[0].mxu0 %v1716
      %v2918 = vpop.f32.mrb[0].mxu0
      %v2919 = vadd.f32 0.0, %v2918
      %v2920 = vpop.f32.mrb[0].mxu0
      %v2921 = vpop.f32.mrb[0].mxu0
      %v2922 = vadd.f32 0.0, %v2921
      %v2923 = vpop.f32.mrb[0].mxu0
      %2924 = vmatprep.mubr.bf16.mxu0 0
      %2925 = vmatmul.mubr.bf16.gmra.mrb[0].mxu0 %v1717
      %v2926 = vpop.f32.mrb[0].mxu0
      %v2927 = vadd.f32 0.0, %v2926
      %v2928 = vpop.f32.mrb[0].mxu0
      %v2929 = vpop.f32.mrb[0].mxu0
      %v2930 = vadd.f32 0.0, %v2929
      %v2931 = vpop.f32.mrb[0].mxu0
      %2932 = vmatprep.mubr.bf16.mxu0 0
      %2933 = vmatmul.mubr.bf16.gmra.mrb[0].mxu0 %v1718
      %v2934 = vpop.f32.mrb[0].mxu0
      %v2935 = vadd.f32 0.0, %v2934
      %v2936 = vpop.f32.mrb[0].mxu0
      %v2937 = vpop.f32.mrb[0].mxu0
      %v2938 = vadd.f32 0.0, %v2937
      %v2939 = vpop.f32.mrb[0].mxu0
      %2940 = vmatprep.mubr.bf16.mxu0 0
      %2941 = vmatmul.mubr.bf16.gmra.mrb[0].mxu0 %v1719
      %v2942 = vpop.f32.mrb[0].mxu0
      %v2943 = vadd.f32 0.0, %v2942
      %v2944 = vpop.f32.mrb[0].mxu0
      %v2945 = vpop.f32.mrb[0].mxu0
      %v2946 = vadd.f32 0.0, %v2945
      %v2947 = vpop.f32.mrb[0].mxu0
      %2948 = vmatprep.mubr.bf16.mxu0 0
      %2949 = vmatmul.mubr.bf16.gmra.mrb[0].mxu0 %v2746
      %v2950 = vpop.f32.mrb[0].mxu0
      %v2951 = vadd.f32 0.0, %v2950
      %v2952 = vpop.f32.mrb[0].mxu0
      %v2953 = vpop.f32.mrb[0].mxu0
      %v2954 = vadd.f32 0.0, %v2953
      %v2955 = vpop.f32.mrb[0].mxu0
      %2956 = vdwg.mxu0
      %v2957 = vadd.f32 %v2695, %v2831
      %v2958 = vadd.f32 %v2696, %v2834
      %v2959 = vadd.f32 %v2697, %v2839
      %v2960 = vadd.f32 %v2698, %v2842
      %v2961 = vadd.f32 %v2699, %v2847
      %v2962 = vadd.f32 %v2700, %v2850
      %v2963 = vadd.f32 %v2701, %v2855
      %v2964 = vadd.f32 %v2702, %v2858
      %v2965 = vadd.f32 %v2703, %v2863
      %v2966 = vadd.f32 %v2704, %v2866
      %v2967 = vadd.f32 %v2705, %v2871
      %v2968 = vadd.f32 %v2706, %v2874
      %v2969 = vadd.f32 %v2707, %v2879
      %v2970 = vadd.f32 %v2708, %v2882
      %v2971 = vadd.f32 %v2709, %v2887
      %v2972 = vadd.f32 %v2710, %v2890
      %v2973 = vadd.f32 %v2711, %v2895
      %v2974 = vadd.f32 %v2712, %v2898
      %v2975 = vadd.f32 %v2713, %v2903
      %v2976 = vadd.f32 %v2714, %v2906
      %v2977 = vadd.f32 %v2715, %v2911
      %v2978 = vadd.f32 %v2716, %v2914
      %v2979 = vadd.f32 %v2717, %v2919
      %v2980 = vadd.f32 %v2718, %v2922
      %v2981 = vadd.f32 %v2719, %v2927
      %v2982 = vadd.f32 %v2720, %v2930
      %v2983 = vadd.f32 %v2721, %v2935
      %v2984 = vadd.f32 %v2722, %v2938
      %v2985 = vadd.f32 %v2723, %v2943
      %v2986 = vadd.f32 %v2724, %v2946
      %v2987 = vadd.f32 %v2725, %v2951
      %v2988 = vadd.f32 %v2726, %v2954
      %2989 = vst [vmem:[#allocation2] sm:$0xff] %v2957
      %2990 = vst [vmem:[#allocation2 + $0x8] sm:$0xff] %v2958
      %2991 = vst [vmem:[#allocation2 + $0x10] sm:$0xff] %v2959
      %2992 = vst [vmem:[#allocation2 + $0x18] sm:$0xff] %v2960
      %2993 = vst [vmem:[#allocation2 + $0x20] sm:$0xff] %v2961
      %2994 = vst [vmem:[#allocation2 + $0x28] sm:$0xff] %v2962
      %2995 = vst [vmem:[#allocation2 + $0x30] sm:$0xff] %v2963
      %2996 = vst [vmem:[#allocation2 + $0x38] sm:$0xff] %v2964
      %2997 = vst [vmem:[#allocation2 + $0x40] sm:$0xff] %v2965
      %2998 = vst [vmem:[#allocation2 + $0x48] sm:$0xff] %v2966
      %2999 = vst [vmem:[#allocation2 + $0x50] sm:$0xff] %v2967
      %3000 = vst [vmem:[#allocation2 + $0x58] sm:$0xff] %v2968
      %3001 = vst [vmem:[#allocation2 + $0x60] sm:$0xff] %v2969
      %3002 = vst [vmem:[#allocation2 + $0x68] sm:$0xff] %v2970
      %3003 = vst [vmem:[#allocation2 + $0x70] sm:$0xff] %v2971
      %3004 = vst [vmem:[#allocation2 + $0x78] sm:$0xff] %v2972
      %3005 = vst [vmem:[#allocation2 + $0x80] sm:$0xff] %v2973
      %3006 = vst [vmem:[#allocation2 + $0x88] sm:$0xff] %v2974
      %3007 = vst [vmem:[#allocation2 + $0x90] sm:$0xff] %v2975
      %3008 = vst [vmem:[#allocation2 + $0x98] sm:$0xff] %v2976
      %3009 = vst [vmem:[#allocation2 + $0xa0] sm:$0xff] %v2977
      %3010 = vst [vmem:[#allocation2 + $0xa8] sm:$0xff] %v2978
      %3011 = vst [vmem:[#allocation2 + $0xb0] sm:$0xff] %v2979
      %3012 = vst [vmem:[#allocation2 + $0xb8] sm:$0xff] %v2980
      %3013 = vst [vmem:[#allocation2 + $0xc0] sm:$0xff] %v2981
      %3014 = vst [vmem:[#allocation2 + $0xc8] sm:$0xff] %v2982
      %3015 = vst [vmem:[#allocation2 + $0xd0] sm:$0xff] %v2983
      %3016 = vst [vmem:[#allocation2 + $0xd8] sm:$0xff] %v2984
      %3017 = vst [vmem:[#allocation2 + $0xe0] sm:$0xff] %v2985
      %3018 = vst [vmem:[#allocation2 + $0xe8] sm:$0xff] %v2986
      %3019 = vst [vmem:[#allocation2 + $0xf0] sm:$0xff] %v2987
      %3020 = vst [vmem:[#allocation2 + $0xf8] sm:$0xff] %v2988
      %v3021 = vld [vmem:[#allocation2] sm:$0xff]
      %v3022 = vld [vmem:[#allocation2 + $0x8] sm:$0xff]
      %v3023 = vld [vmem:[#allocation2 + $0x10] sm:$0xff]
      %v3024 = vld [vmem:[#allocation2 + $0x18] sm:$0xff]
      %v3025 = vld [vmem:[#allocation2 + $0x20] sm:$0xff]
      %v3026 = vld [vmem:[#allocation2 + $0x28] sm:$0xff]
      %v3027 = vld [vmem:[#allocation2 + $0x30] sm:$0xff]
      %v3028 = vld [vmem:[#allocation2 + $0x38] sm:$0xff]
      %v3029 = vld [vmem:[#allocation2 + $0x40] sm:$0xff]
      %v3030 = vld [vmem:[#allocation2 + $0x48] sm:$0xff]
      %v3031 = vld [vmem:[#allocation2 + $0x50] sm:$0xff]
      %v3032 = vld [vmem:[#allocation2 + $0x58] sm:$0xff]
      %v3033 = vld [vmem:[#allocation2 + $0x60] sm:$0xff]
      %v3034 = vld [vmem:[#allocation2 + $0x68] sm:$0xff]
      %v3035 = vld [vmem:[#allocation2 + $0x70] sm:$0xff]
      %v3036 = vld [vmem:[#allocation2 + $0x78] sm:$0xff]
      %v3037 = vld [vmem:[#allocation2 + $0x80] sm:$0xff]
      %v3038 = vld [vmem:[#allocation2 + $0x88] sm:$0xff]
      %v3039 = vld [vmem:[#allocation2 + $0x90] sm:$0xff]
      %v3040 = vld [vmem:[#allocation2 + $0x98] sm:$0xff]
      %v3041 = vld [vmem:[#allocation2 + $0xa0] sm:$0xff]
      %v3042 = vld [vmem:[#allocation2 + $0xa8] sm:$0xff]
      %v3043 = vld [vmem:[#allocation2 + $0xb0] sm:$0xff]
      %v3044 = vld [vmem:[#allocation2 + $0xb8] sm:$0xff]
      %v3045 = vld [vmem:[#allocation2 + $0xc0] sm:$0xff]
      %v3046 = vld [vmem:[#allocation2 + $0xc8] sm:$0xff]
      %v3047 = vld [vmem:[#allocation2 + $0xd0] sm:$0xff]
      %v3048 = vld [vmem:[#allocation2 + $0xd8] sm:$0xff]
      %v3049 = vld [vmem:[#allocation2 + $0xe0] sm:$0xff]
      %v3050 = vld [vmem:[#allocation2 + $0xe8] sm:$0xff]
      %v3051 = vld [vmem:[#allocation2 + $0xf0] sm:$0xff]
      %v3052 = vld [vmem:[#allocation2 + $0xf8] sm:$0xff]
      %s3053 = scalar_lea.vmem %s1, 384
      %v3054 = vld [vmem:[%s3053] sm:$0xf]
      %v3055 = vld [vmem:[%s3053 + $0x4] sm:$0xf]
      %v3056 = vld [vmem:[%s3053 + $0x8] sm:$0xf]
      %v3057 = vld [vmem:[%s3053 + $0xc] sm:$0xf]
      %v3058 = vld [vmem:[%s3053 + $0x10] sm:$0xf]
      %v3059 = vld [vmem:[%s3053 + $0x14] sm:$0xf]
      %v3060 = vld [vmem:[%s3053 + $0x18] sm:$0xf]
      %v3061 = vld [vmem:[%s3053 + $0x1c] sm:$0xf]
      %v3062 = vld [vmem:[%s3053 + $0x20] sm:$0xf]
      %v3063 = vld [vmem:[%s3053 + $0x24] sm:$0xf]
      %v3064 = vld [vmem:[%s3053 + $0x28] sm:$0xf]
      %v3065 = vld [vmem:[%s3053 + $0x2c] sm:$0xf]
      %v3066 = vld [vmem:[%s3053 + $0x30] sm:$0xf]
      %v3067 = vld [vmem:[%s3053 + $0x34] sm:$0xf]
      %v3068 = vld [vmem:[%s3053 + $0x38] sm:$0xf]
      %v3069 = vld [vmem:[%s3053 + $0x3c] sm:$0xf]
      %v3072 = vunpack.c.l.b16 %v267
      %v3073 = vunpack.c.l.b16 %v268
      %v3074 = vpack.c.b16 %v3073, %v3072
      %v3092 = vunpack.c.l.b16 %v3054
      %v3093 = vunpack.c.l.b16 %v3055
      %v3094 = vunpack.c.l.b16 %v3056
      %v3095 = vunpack.c.l.b16 %v3057
      %v3096 = vunpack.c.l.b16 %v3058
      %v3097 = vunpack.c.l.b16 %v3059
      %v3098 = vunpack.c.l.b16 %v3060
      %v3099 = vunpack.c.l.b16 %v3061
      %v3100 = vunpack.c.l.b16 %v3062
      %v3101 = vunpack.c.l.b16 %v3063
      %v3102 = vunpack.c.l.b16 %v3064
      %v3103 = vunpack.c.l.b16 %v3065
      %v3104 = vunpack.c.l.b16 %v3066
      %v3105 = vunpack.c.l.b16 %v3067
      %v3106 = vunpack.c.l.b16 %v3068
      %v3107 = vunpack.c.l.b16 %v3069
      %v3108 = vpack.c.b16 %v3093, %v3092
      %v3109 = vpack.c.b16 %v3095, %v3094
      %v3110 = vpack.c.b16 %v3097, %v3096
      %v3111 = vpack.c.b16 %v3099, %v3098
      %v3112 = vpack.c.b16 %v3101, %v3100
      %v3113 = vpack.c.b16 %v3103, %v3102
      %v3114 = vpack.c.b16 %v3105, %v3104
      %v3115 = vpack.c.b16 %v3107, %v3106
      %3124 = vmatprep.subr.bf16.mxu0 0
      %3125 = vmatpush1.bf16.msra.mxu0 %v3108
      %3126 = vmatprep.subr.bf16.mxu0 0
      %3127 = vmatpush1.bf16.msra.mxu0 %v3109
      %3128 = vmatprep.subr.bf16.mxu0 0
      %3129 = vmatpush1.bf16.msra.mxu0 %v3110
      %3130 = vmatprep.subr.bf16.mxu0 0
      %3131 = vmatpush1.bf16.msra.mxu0 %v3111
      %3132 = vmatprep.subr.bf16.mxu0 0
      %3133 = vmatpush1.bf16.msra.mxu0 %v3112
      %3134 = vmatprep.subr.bf16.mxu0 0
      %3135 = vmatpush1.bf16.msra.mxu0 %v3113
      %3136 = vmatprep.subr.bf16.mxu0 0
      %3137 = vmatpush1.bf16.msra.mxu0 %v3114
      %3138 = vmatprep.subr.bf16.mxu0 0
      %3139 = vmatpush1.bf16.msra.mxu0 %v3115
      %3140 = vmatprep.subr.bf16.mxu0 0
      %3141 = vmatpush1.bf16.msra.mxu0 0
      %3142 = vmatprep.subr.bf16.mxu0 0
      %3143 = vmatpush1.bf16.msra.mxu0 0
      %3144 = vmatprep.subr.bf16.mxu0 0
      %3145 = vmatpush1.bf16.msra.mxu0 0
      %3146 = vmatprep.subr.bf16.mxu0 0
      %3147 = vmatpush1.bf16.msra.mxu0 0
      %3148 = vmatprep.subr.bf16.mxu0 0
      %3149 = vmatpush1.bf16.msra.mxu0 0
      %3150 = vmatprep.subr.bf16.mxu0 0
      %3151 = vmatpush1.bf16.msra.mxu0 0
      %3152 = vmatprep.subr.bf16.mxu0 0
      %3153 = vmatpush1.bf16.msra.mxu0 0
      %3154 = vmatprep.subr.bf16.mxu0 0
      %3155 = vmatpush1.bf16.msra.mxu0 0
      %3156 = vmatprep.mubr.bf16.mxu0 0
      %3157 = vmatmul.mubr.bf16.gmra.mrb[0].mxu0 %v416
      %v3158 = vpop.f32.mrb[0].mxu0
      %v3159 = vadd.f32 0.0, %v3158
      %v3160 = vpop.f32.mrb[0].mxu0
      %v3161 = vpop.f32.mrb[0].mxu0
      %v3162 = vadd.f32 0.0, %v3161
      %v3163 = vpop.f32.mrb[0].mxu0
      %3164 = vmatprep.mubr.bf16.mxu0 0
      %3165 = vmatmul.mubr.bf16.gmra.mrb[0].mxu0 %v417
      %v3166 = vpop.f32.mrb[0].mxu0
      %v3167 = vadd.f32 0.0, %v3166
      %v3168 = vpop.f32.mrb[0].mxu0
      %v3169 = vpop.f32.mrb[0].mxu0
      %v3170 = vadd.f32 0.0, %v3169
      %v3171 = vpop.f32.mrb[0].mxu0
      %3172 = vmatprep.mubr.bf16.mxu0 0
      %3173 = vmatmul.mubr.bf16.gmra.mrb[0].mxu0 %v418
      %v3174 = vpop.f32.mrb[0].mxu0
      %v3175 = vadd.f32 0.0, %v3174
      %v3176 = vpop.f32.mrb[0].mxu0
      %v3177 = vpop.f32.mrb[0].mxu0
      %v3178 = vadd.f32 0.0, %v3177
      %v3179 = vpop.f32.mrb[0].mxu0
      %3180 = vmatprep.mubr.bf16.mxu0 0
      %3181 = vmatmul.mubr.bf16.gmra.mrb[0].mxu0 %v419
      %v3182 = vpop.f32.mrb[0].mxu0
      %v3183 = vadd.f32 0.0, %v3182
      %v3184 = vpop.f32.mrb[0].mxu0
      %v3185 = vpop.f32.mrb[0].mxu0
      %v3186 = vadd.f32 0.0, %v3185
      %v3187 = vpop.f32.mrb[0].mxu0
      %3188 = vmatprep.mubr.bf16.mxu0 0
      %3189 = vmatmul.mubr.bf16.gmra.mrb[0].mxu0 %v420
      %v3190 = vpop.f32.mrb[0].mxu0
      %v3191 = vadd.f32 0.0, %v3190
      %v3192 = vpop.f32.mrb[0].mxu0
      %v3193 = vpop.f32.mrb[0].mxu0
      %v3194 = vadd.f32 0.0, %v3193
      %v3195 = vpop.f32.mrb[0].mxu0
      %3196 = vmatprep.mubr.bf16.mxu0 0
      %3197 = vmatmul.mubr.bf16.gmra.mrb[0].mxu0 %v421
      %v3198 = vpop.f32.mrb[0].mxu0
      %v3199 = vadd.f32 0.0, %v3198
      %v3200 = vpop.f32.mrb[0].mxu0
      %v3201 = vpop.f32.mrb[0].mxu0
      %v3202 = vadd.f32 0.0, %v3201
      %v3203 = vpop.f32.mrb[0].mxu0
      %3204 = vmatprep.mubr.bf16.mxu0 0
      %3205 = vmatmul.mubr.bf16.gmra.mrb[0].mxu0 %v422
      %v3206 = vpop.f32.mrb[0].mxu0
      %v3207 = vadd.f32 0.0, %v3206
      %v3208 = vpop.f32.mrb[0].mxu0
      %v3209 = vpop.f32.mrb[0].mxu0
      %v3210 = vadd.f32 0.0, %v3209
      %v3211 = vpop.f32.mrb[0].mxu0
      %3212 = vmatprep.mubr.bf16.mxu0 0
      %3213 = vmatmul.mubr.bf16.gmra.mrb[0].mxu0 %v423
      %v3214 = vpop.f32.mrb[0].mxu0
      %v3215 = vadd.f32 0.0, %v3214
      %v3216 = vpop.f32.mrb[0].mxu0
      %v3217 = vpop.f32.mrb[0].mxu0
      %v3218 = vadd.f32 0.0, %v3217
      %v3219 = vpop.f32.mrb[0].mxu0
      %3220 = vmatprep.mubr.bf16.mxu0 0
      %3221 = vmatmul.mubr.bf16.gmra.mrb[0].mxu0 %v424
      %v3222 = vpop.f32.mrb[0].mxu0
      %v3223 = vadd.f32 0.0, %v3222
      %v3224 = vpop.f32.mrb[0].mxu0
      %v3225 = vpop.f32.mrb[0].mxu0
      %v3226 = vadd.f32 0.0, %v3225
      %v3227 = vpop.f32.mrb[0].mxu0
      %3228 = vmatprep.mubr.bf16.mxu0 0
      %3229 = vmatmul.mubr.bf16.gmra.mrb[0].mxu0 %v425
      %v3230 = vpop.f32.mrb[0].mxu0
      %v3231 = vadd.f32 0.0, %v3230
      %v3232 = vpop.f32.mrb[0].mxu0
      %v3233 = vpop.f32.mrb[0].mxu0
      %v3234 = vadd.f32 0.0, %v3233
      %v3235 = vpop.f32.mrb[0].mxu0
      %3236 = vmatprep.mubr.bf16.mxu0 0
      %3237 = vmatmul.mubr.bf16.gmra.mrb[0].mxu0 %v426
      %v3238 = vpop.f32.mrb[0].mxu0
      %v3239 = vadd.f32 0.0, %v3238
      %v3240 = vpop.f32.mrb[0].mxu0
      %v3241 = vpop.f32.mrb[0].mxu0
      %v3242 = vadd.f32 0.0, %v3241
      %v3243 = vpop.f32.mrb[0].mxu0
      %3244 = vmatprep.mubr.bf16.mxu0 0
      %3245 = vmatmul.mubr.bf16.gmra.mrb[0].mxu0 %v427
      %v3246 = vpop.f32.mrb[0].mxu0
      %v3247 = vadd.f32 0.0, %v3246
      %v3248 = vpop.f32.mrb[0].mxu0
      %v3249 = vpop.f32.mrb[0].mxu0
      %v3250 = vadd.f32 0.0, %v3249
      %v3251 = vpop.f32.mrb[0].mxu0
      %3252 = vmatprep.mubr.bf16.mxu0 0
      %3253 = vmatmul.mubr.bf16.gmra.mrb[0].mxu0 %v428
      %v3254 = vpop.f32.mrb[0].mxu0
      %v3255 = vadd.f32 0.0, %v3254
      %v3256 = vpop.f32.mrb[0].mxu0
      %v3257 = vpop.f32.mrb[0].mxu0
      %v3258 = vadd.f32 0.0, %v3257
      %v3259 = vpop.f32.mrb[0].mxu0
      %3260 = vmatprep.mubr.bf16.mxu0 0
      %3261 = vmatmul.mubr.bf16.gmra.mrb[0].mxu0 %v429
      %v3262 = vpop.f32.mrb[0].mxu0
      %v3263 = vadd.f32 0.0, %v3262
      %v3264 = vpop.f32.mrb[0].mxu0
      %v3265 = vpop.f32.mrb[0].mxu0
      %v3266 = vadd.f32 0.0, %v3265
      %v3267 = vpop.f32.mrb[0].mxu0
      %3268 = vmatprep.mubr.bf16.mxu0 0
      %3269 = vmatmul.mubr.bf16.gmra.mrb[0].mxu0 %v2062
      %v3270 = vpop.f32.mrb[0].mxu0
      %v3271 = vadd.f32 0.0, %v3270
      %v3272 = vpop.f32.mrb[0].mxu0
      %v3273 = vpop.f32.mrb[0].mxu0
      %v3274 = vadd.f32 0.0, %v3273
      %v3275 = vpop.f32.mrb[0].mxu0
      %3276 = vmatprep.mubr.bf16.mxu0 0
      %3277 = vmatmul.mubr.bf16.gmra.mrb[0].mxu0 %v3074
      %v3278 = vpop.f32.mrb[0].mxu0
      %v3279 = vadd.f32 0.0, %v3278
      %v3280 = vpop.f32.mrb[0].mxu0
      %v3281 = vpop.f32.mrb[0].mxu0
      %v3282 = vadd.f32 0.0, %v3281
      %v3283 = vpop.f32.mrb[0].mxu0
      %3284 = vdwg.mxu0
      %v3285 = vadd.f32 %v3021, %v3159
      %v3286 = vadd.f32 %v3022, %v3162
      %v3287 = vadd.f32 %v3023, %v3167
      %v3288 = vadd.f32 %v3024, %v3170
      %v3289 = vadd.f32 %v3025, %v3175
      %v3290 = vadd.f32 %v3026, %v3178
      %v3291 = vadd.f32 %v3027, %v3183
      %v3292 = vadd.f32 %v3028, %v3186
      %v3293 = vadd.f32 %v3029, %v3191
      %v3294 = vadd.f32 %v3030, %v3194
      %v3295 = vadd.f32 %v3031, %v3199
      %v3296 = vadd.f32 %v3032, %v3202
      %v3297 = vadd.f32 %v3033, %v3207
      %v3298 = vadd.f32 %v3034, %v3210
      %v3299 = vadd.f32 %v3035, %v3215
      %v3300 = vadd.f32 %v3036, %v3218
      %v3301 = vadd.f32 %v3037, %v3223
      %v3302 = vadd.f32 %v3038, %v3226
      %v3303 = vadd.f32 %v3039, %v3231
      %v3304 = vadd.f32 %v3040, %v3234
      %v3305 = vadd.f32 %v3041, %v3239
      %v3306 = vadd.f32 %v3042, %v3242
      %v3307 = vadd.f32 %v3043, %v3247
      %v3308 = vadd.f32 %v3044, %v3250
      %v3309 = vadd.f32 %v3045, %v3255
      %v3310 = vadd.f32 %v3046, %v3258
      %v3311 = vadd.f32 %v3047, %v3263
      %v3312 = vadd.f32 %v3048, %v3266
      %v3313 = vadd.f32 %v3049, %v3271
      %v3314 = vadd.f32 %v3050, %v3274
      %v3315 = vadd.f32 %v3051, %v3279
      %v3316 = vadd.f32 %v3052, %v3282
      %3317 = vst [vmem:[#allocation2] sm:$0xff] %v3285
      %3318 = vst [vmem:[#allocation2 + $0x8] sm:$0xff] %v3286
      %3319 = vst [vmem:[#allocation2 + $0x10] sm:$0xff] %v3287
      %3320 = vst [vmem:[#allocation2 + $0x18] sm:$0xff] %v3288
      %3321 = vst [vmem:[#allocation2 + $0x20] sm:$0xff] %v3289
      %3322 = vst [vmem:[#allocation2 + $0x28] sm:$0xff] %v3290
      %3323 = vst [vmem:[#allocation2 + $0x30] sm:$0xff] %v3291
      %3324 = vst [vmem:[#allocation2 + $0x38] sm:$0xff] %v3292
      %3325 = vst [vmem:[#allocation2 + $0x40] sm:$0xff] %v3293
      %3326 = vst [vmem:[#allocation2 + $0x48] sm:$0xff] %v3294
      %3327 = vst [vmem:[#allocation2 + $0x50] sm:$0xff] %v3295
      %3328 = vst [vmem:[#allocation2 + $0x58] sm:$0xff] %v3296
      %3329 = vst [vmem:[#allocation2 + $0x60] sm:$0xff] %v3297
      %3330 = vst [vmem:[#allocation2 + $0x68] sm:$0xff] %v3298
      %3331 = vst [vmem:[#allocation2 + $0x70] sm:$0xff] %v3299
      %3332 = vst [vmem:[#allocation2 + $0x78] sm:$0xff] %v3300
      %3333 = vst [vmem:[#allocation2 + $0x80] sm:$0xff] %v3301
      %3334 = vst [vmem:[#allocation2 + $0x88] sm:$0xff] %v3302
      %3335 = vst [vmem:[#allocation2 + $0x90] sm:$0xff] %v3303
      %3336 = vst [vmem:[#allocation2 + $0x98] sm:$0xff] %v3304
      %3337 = vst [vmem:[#allocation2 + $0xa0] sm:$0xff] %v3305
      %3338 = vst [vmem:[#allocation2 + $0xa8] sm:$0xff] %v3306
      %3339 = vst [vmem:[#allocation2 + $0xb0] sm:$0xff] %v3307
      %3340 = vst [vmem:[#allocation2 + $0xb8] sm:$0xff] %v3308
      %3341 = vst [vmem:[#allocation2 + $0xc0] sm:$0xff] %v3309
      %3342 = vst [vmem:[#allocation2 + $0xc8] sm:$0xff] %v3310
      %3343 = vst [vmem:[#allocation2 + $0xd0] sm:$0xff] %v3311
      %3344 = vst [vmem:[#allocation2 + $0xd8] sm:$0xff] %v3312
      %3345 = vst [vmem:[#allocation2 + $0xe0] sm:$0xff] %v3313
      %3346 = vst [vmem:[#allocation2 + $0xe8] sm:$0xff] %v3314
      %3347 = vst [vmem:[#allocation2 + $0xf0] sm:$0xff] %v3315
      %3348 = vst [vmem:[#allocation2 + $0xf8] sm:$0xff] %v3316
      %v3350 = vshrl.u32 %v267, 16
      %v3352 = vrot.slane %v3350, 4
      %v3353 = vshll.u32 %v267, 16
      %v3355 = vrot.slane %v3353, 5
      %v3356 = vor.u32 %v3352, %v3355
      %v3357 = vrot.slane %v3356, 4
      %v3359 = vshll.u32 %v268, 16
      %v3361 = vrot.slane %v3359, 5
      %v3362 = vsel %vm721, %v3357, %v3361
      %v3363 = vshrl.u32 %v268, 16
      %v3365 = vrot.slane %v3363, 4
      %v3366 = vor.u32 %v3365, %v3361
      %v3367 = vrot.slane %v3366, 4
      %v3369 = vshll.u32 %v269, 16
      %v3371 = vrot.slane %v3369, 5
      %v3372 = vsel %vm721, %v3367, %v3371
      %v3373 = vld [vmem:[#allocation2] sm:$0xff]
      %v3374 = vld [vmem:[#allocation2 + $0x8] sm:$0xff]
      %v3375 = vld [vmem:[#allocation2 + $0x10] sm:$0xff]
      %v3376 = vld [vmem:[#allocation2 + $0x18] sm:$0xff]
      %v3377 = vld [vmem:[#allocation2 + $0x20] sm:$0xff]
      %v3378 = vld [vmem:[#allocation2 + $0x28] sm:$0xff]
      %v3379 = vld [vmem:[#allocation2 + $0x30] sm:$0xff]
      %v3380 = vld [vmem:[#allocation2 + $0x38] sm:$0xff]
      %v3381 = vld [vmem:[#allocation2 + $0x40] sm:$0xff]
      %v3382 = vld [vmem:[#allocation2 + $0x48] sm:$0xff]
      %v3383 = vld [vmem:[#allocation2 + $0x50] sm:$0xff]
      %v3384 = vld [vmem:[#allocation2 + $0x58] sm:$0xff]
      %v3385 = vld [vmem:[#allocation2 + $0x60] sm:$0xff]
      %v3386 = vld [vmem:[#allocation2 + $0x68] sm:$0xff]
      %v3387 = vld [vmem:[#allocation2 + $0x70] sm:$0xff]
      %v3388 = vld [vmem:[#allocation2 + $0x78] sm:$0xff]
      %v3389 = vld [vmem:[#allocation2 + $0x80] sm:$0xff]
      %v3390 = vld [vmem:[#allocation2 + $0x88] sm:$0xff]
      %v3391 = vld [vmem:[#allocation2 + $0x90] sm:$0xff]
      %v3392 = vld [vmem:[#allocation2 + $0x98] sm:$0xff]
      %v3393 = vld [vmem:[#allocation2 + $0xa0] sm:$0xff]
      %v3394 = vld [vmem:[#allocation2 + $0xa8] sm:$0xff]
      %v3395 = vld [vmem:[#allocation2 + $0xb0] sm:$0xff]
      %v3396 = vld [vmem:[#allocation2 + $0xb8] sm:$0xff]
      %v3397 = vld [vmem:[#allocation2 + $0xc0] sm:$0xff]
      %v3398 = vld [vmem:[#allocation2 + $0xc8] sm:$0xff]
      %v3399 = vld [vmem:[#allocation2 + $0xd0] sm:$0xff]
      %v3400 = vld [vmem:[#allocation2 + $0xd8] sm:$0xff]
      %v3401 = vld [vmem:[#allocation2 + $0xe0] sm:$0xff]
      %v3402 = vld [vmem:[#allocation2 + $0xe8] sm:$0xff]
      %v3403 = vld [vmem:[#allocation2 + $0xf0] sm:$0xff]
      %v3404 = vld [vmem:[#allocation2 + $0xf8] sm:$0xff]
      %s3405 = scalar_lea.vmem %s1, 448
      %v3406 = vld [vmem:[%s3405] sm:$0xf]
      %v3407 = vld [vmem:[%s3405 + $0x4] sm:$0xf]
      %v3408 = vld [vmem:[%s3405 + $0x8] sm:$0xf]
      %v3409 = vld [vmem:[%s3405 + $0xc] sm:$0xf]
      %v3410 = vld [vmem:[%s3405 + $0x10] sm:$0xf]
      %v3411 = vld [vmem:[%s3405 + $0x14] sm:$0xf]
      %v3412 = vld [vmem:[%s3405 + $0x18] sm:$0xf]
      %v3413 = vld [vmem:[%s3405 + $0x1c] sm:$0xf]
      %v3414 = vld [vmem:[%s3405 + $0x20] sm:$0xf]
      %v3415 = vld [vmem:[%s3405 + $0x24] sm:$0xf]
      %v3416 = vld [vmem:[%s3405 + $0x28] sm:$0xf]
      %v3417 = vld [vmem:[%s3405 + $0x2c] sm:$0xf]
      %v3418 = vld [vmem:[%s3405 + $0x30] sm:$0xf]
      %v3419 = vld [vmem:[%s3405 + $0x34] sm:$0xf]
      %v3420 = vld [vmem:[%s3405 + $0x38] sm:$0xf]
      %v3421 = vld [vmem:[%s3405 + $0x3c] sm:$0xf]
      %v3422 = vunpack.c.l.b16 %v3362
      %v3423 = vunpack.c.l.b16 %v3372
      %v3424 = vpack.c.b16 %v3423, %v3422
      %v3442 = vunpack.c.l.b16 %v3406
      %v3443 = vunpack.c.l.b16 %v3407
      %v3444 = vunpack.c.l.b16 %v3408
      %v3445 = vunpack.c.l.b16 %v3409
      %v3446 = vunpack.c.l.b16 %v3410
      %v3447 = vunpack.c.l.b16 %v3411
      %v3448 = vunpack.c.l.b16 %v3412
      %v3449 = vunpack.c.l.b16 %v3413
      %v3450 = vunpack.c.l.b16 %v3414
      %v3451 = vunpack.c.l.b16 %v3415
      %v3452 = vunpack.c.l.b16 %v3416
      %v3453 = vunpack.c.l.b16 %v3417
      %v3454 = vunpack.c.l.b16 %v3418
      %v3455 = vunpack.c.l.b16 %v3419
      %v3456 = vunpack.c.l.b16 %v3420
      %v3457 = vunpack.c.l.b16 %v3421
      %v3458 = vpack.c.b16 %v3443, %v3442
      %v3459 = vpack.c.b16 %v3445, %v3444
      %v3460 = vpack.c.b16 %v3447, %v3446
      %v3461 = vpack.c.b16 %v3449, %v3448
      %v3462 = vpack.c.b16 %v3451, %v3450
      %v3463 = vpack.c.b16 %v3453, %v3452
      %v3464 = vpack.c.b16 %v3455, %v3454
      %v3465 = vpack.c.b16 %v3457, %v3456
      %3474 = vmatprep.subr.bf16.mxu0 0
      %3475 = vmatpush1.bf16.msra.mxu0 %v3458
      %3476 = vmatprep.subr.bf16.mxu0 0
      %3477 = vmatpush1.bf16.msra.mxu0 %v3459
      %3478 = vmatprep.subr.bf16.mxu0 0
      %3479 = vmatpush1.bf16.msra.mxu0 %v3460
      %3480 = vmatprep.subr.bf16.mxu0 0
      %3481 = vmatpush1.bf16.msra.mxu0 %v3461
      %3482 = vmatprep.subr.bf16.mxu0 0
      %3483 = vmatpush1.bf16.msra.mxu0 %v3462
      %3484 = vmatprep.subr.bf16.mxu0 0
      %3485 = vmatpush1.bf16.msra.mxu0 %v3463
      %3486 = vmatprep.subr.bf16.mxu0 0
      %3487 = vmatpush1.bf16.msra.mxu0 %v3464
      %3488 = vmatprep.subr.bf16.mxu0 0
      %3489 = vmatpush1.bf16.msra.mxu0 %v3465
      %3490 = vmatprep.subr.bf16.mxu0 0
      %3491 = vmatpush1.bf16.msra.mxu0 0
      %3492 = vmatprep.subr.bf16.mxu0 0
      %3493 = vmatpush1.bf16.msra.mxu0 0
      %3494 = vmatprep.subr.bf16.mxu0 0
      %3495 = vmatpush1.bf16.msra.mxu0 0
      %3496 = vmatprep.subr.bf16.mxu0 0
      %3497 = vmatpush1.bf16.msra.mxu0 0
      %3498 = vmatprep.subr.bf16.mxu0 0
      %3499 = vmatpush1.bf16.msra.mxu0 0
      %3500 = vmatprep.subr.bf16.mxu0 0
      %3501 = vmatpush1.bf16.msra.mxu0 0
      %3502 = vmatprep.subr.bf16.mxu0 0
      %3503 = vmatpush1.bf16.msra.mxu0 0
      %3504 = vmatprep.subr.bf16.mxu0 0
      %3505 = vmatpush1.bf16.msra.mxu0 0
      %3506 = vmatprep.mubr.bf16.mxu0 0
      %3507 = vmatmul.mubr.bf16.gmra.mrb[0].mxu0 %v1189
      %v3508 = vpop.f32.mrb[0].mxu0
      %v3509 = vadd.f32 0.0, %v3508
      %v3510 = vpop.f32.mrb[0].mxu0
      %v3511 = vpop.f32.mrb[0].mxu0
      %v3512 = vadd.f32 0.0, %v3511
      %v3513 = vpop.f32.mrb[0].mxu0
      %3514 = vmatprep.mubr.bf16.mxu0 0
      %3515 = vmatmul.mubr.bf16.gmra.mrb[0].mxu0 %v1190
      %v3516 = vpop.f32.mrb[0].mxu0
      %v3517 = vadd.f32 0.0, %v3516
      %v3518 = vpop.f32.mrb[0].mxu0
      %v3519 = vpop.f32.mrb[0].mxu0
      %v3520 = vadd.f32 0.0, %v3519
      %v3521 = vpop.f32.mrb[0].mxu0
      %3522 = vmatprep.mubr.bf16.mxu0 0
      %3523 = vmatmul.mubr.bf16.gmra.mrb[0].mxu0 %v1191
      %v3524 = vpop.f32.mrb[0].mxu0
      %v3525 = vadd.f32 0.0, %v3524
      %v3526 = vpop.f32.mrb[0].mxu0
      %v3527 = vpop.f32.mrb[0].mxu0
      %v3528 = vadd.f32 0.0, %v3527
      %v3529 = vpop.f32.mrb[0].mxu0
      %3530 = vmatprep.mubr.bf16.mxu0 0
      %3531 = vmatmul.mubr.bf16.gmra.mrb[0].mxu0 %v1192
      %v3532 = vpop.f32.mrb[0].mxu0
      %v3533 = vadd.f32 0.0, %v3532
      %v3534 = vpop.f32.mrb[0].mxu0
      %v3535 = vpop.f32.mrb[0].mxu0
      %v3536 = vadd.f32 0.0, %v3535
      %v3537 = vpop.f32.mrb[0].mxu0
      %3538 = vmatprep.mubr.bf16.mxu0 0
      %3539 = vmatmul.mubr.bf16.gmra.mrb[0].mxu0 %v1193
      %v3540 = vpop.f32.mrb[0].mxu0
      %v3541 = vadd.f32 0.0, %v3540
      %v3542 = vpop.f32.mrb[0].mxu0
      %v3543 = vpop.f32.mrb[0].mxu0
      %v3544 = vadd.f32 0.0, %v3543
      %v3545 = vpop.f32.mrb[0].mxu0
      %3546 = vmatprep.mubr.bf16.mxu0 0
      %3547 = vmatmul.mubr.bf16.gmra.mrb[0].mxu0 %v1194
      %v3548 = vpop.f32.mrb[0].mxu0
      %v3549 = vadd.f32 0.0, %v3548
      %v3550 = vpop.f32.mrb[0].mxu0
      %v3551 = vpop.f32.mrb[0].mxu0
      %v3552 = vadd.f32 0.0, %v3551
      %v3553 = vpop.f32.mrb[0].mxu0
      %3554 = vmatprep.mubr.bf16.mxu0 0
      %3555 = vmatmul.mubr.bf16.gmra.mrb[0].mxu0 %v1195
      %v3556 = vpop.f32.mrb[0].mxu0
      %v3557 = vadd.f32 0.0, %v3556
      %v3558 = vpop.f32.mrb[0].mxu0
      %v3559 = vpop.f32.mrb[0].mxu0
      %v3560 = vadd.f32 0.0, %v3559
      %v3561 = vpop.f32.mrb[0].mxu0
      %3562 = vmatprep.mubr.bf16.mxu0 0
      %3563 = vmatmul.mubr.bf16.gmra.mrb[0].mxu0 %v1196
      %v3564 = vpop.f32.mrb[0].mxu0
      %v3565 = vadd.f32 0.0, %v3564
      %v3566 = vpop.f32.mrb[0].mxu0
      %v3567 = vpop.f32.mrb[0].mxu0
      %v3568 = vadd.f32 0.0, %v3567
      %v3569 = vpop.f32.mrb[0].mxu0
      %3570 = vmatprep.mubr.bf16.mxu0 0
      %3571 = vmatmul.mubr.bf16.gmra.mrb[0].mxu0 %v1197
      %v3572 = vpop.f32.mrb[0].mxu0
      %v3573 = vadd.f32 0.0, %v3572
      %v3574 = vpop.f32.mrb[0].mxu0
      %v3575 = vpop.f32.mrb[0].mxu0
      %v3576 = vadd.f32 0.0, %v3575
      %v3577 = vpop.f32.mrb[0].mxu0
      %3578 = vmatprep.mubr.bf16.mxu0 0
      %3579 = vmatmul.mubr.bf16.gmra.mrb[0].mxu0 %v1198
      %v3580 = vpop.f32.mrb[0].mxu0
      %v3581 = vadd.f32 0.0, %v3580
      %v3582 = vpop.f32.mrb[0].mxu0
      %v3583 = vpop.f32.mrb[0].mxu0
      %v3584 = vadd.f32 0.0, %v3583
      %v3585 = vpop.f32.mrb[0].mxu0
      %3586 = vmatprep.mubr.bf16.mxu0 0
      %3587 = vmatmul.mubr.bf16.gmra.mrb[0].mxu0 %v1199
      %v3588 = vpop.f32.mrb[0].mxu0
      %v3589 = vadd.f32 0.0, %v3588
      %v3590 = vpop.f32.mrb[0].mxu0
      %v3591 = vpop.f32.mrb[0].mxu0
      %v3592 = vadd.f32 0.0, %v3591
      %v3593 = vpop.f32.mrb[0].mxu0
      %3594 = vmatprep.mubr.bf16.mxu0 0
      %3595 = vmatmul.mubr.bf16.gmra.mrb[0].mxu0 %v1200
      %v3596 = vpop.f32.mrb[0].mxu0
      %v3597 = vadd.f32 0.0, %v3596
      %v3598 = vpop.f32.mrb[0].mxu0
      %v3599 = vpop.f32.mrb[0].mxu0
      %v3600 = vadd.f32 0.0, %v3599
      %v3601 = vpop.f32.mrb[0].mxu0
      %3602 = vmatprep.mubr.bf16.mxu0 0
      %3603 = vmatmul.mubr.bf16.gmra.mrb[0].mxu0 %v1201
      %v3604 = vpop.f32.mrb[0].mxu0
      %v3605 = vadd.f32 0.0, %v3604
      %v3606 = vpop.f32.mrb[0].mxu0
      %v3607 = vpop.f32.mrb[0].mxu0
      %v3608 = vadd.f32 0.0, %v3607
      %v3609 = vpop.f32.mrb[0].mxu0
      %3610 = vmatprep.mubr.bf16.mxu0 0
      %3611 = vmatmul.mubr.bf16.gmra.mrb[0].mxu0 %v1202
      %v3612 = vpop.f32.mrb[0].mxu0
      %v3613 = vadd.f32 0.0, %v3612
      %v3614 = vpop.f32.mrb[0].mxu0
      %v3615 = vpop.f32.mrb[0].mxu0
      %v3616 = vadd.f32 0.0, %v3615
      %v3617 = vpop.f32.mrb[0].mxu0
      %3618 = vmatprep.mubr.bf16.mxu0 0
      %3619 = vmatmul.mubr.bf16.gmra.mrb[0].mxu0 %v2412
      %v3620 = vpop.f32.mrb[0].mxu0
      %v3621 = vadd.f32 0.0, %v3620
      %v3622 = vpop.f32.mrb[0].mxu0
      %v3623 = vpop.f32.mrb[0].mxu0
      %v3624 = vadd.f32 0.0, %v3623
      %v3625 = vpop.f32.mrb[0].mxu0
      %3626 = vmatprep.mubr.bf16.mxu0 0
      %3627 = vmatmul.mubr.bf16.gmra.mrb[0].mxu0 %v3424
      %v3628 = vpop.f32.mrb[0].mxu0
      %v3629 = vadd.f32 0.0, %v3628
      %v3630 = vpop.f32.mrb[0].mxu0
      %v3631 = vpop.f32.mrb[0].mxu0
      %v3632 = vadd.f32 0.0, %v3631
      %v3633 = vpop.f32.mrb[0].mxu0
      %3634 = vdwg.mxu0
      %v3635 = vadd.f32 %v3373, %v3509
      %v3636 = vadd.f32 %v3374, %v3512
      %v3637 = vadd.f32 %v3375, %v3517
      %v3638 = vadd.f32 %v3376, %v3520
      %v3639 = vadd.f32 %v3377, %v3525
      %v3640 = vadd.f32 %v3378, %v3528
      %v3641 = vadd.f32 %v3379, %v3533
      %v3642 = vadd.f32 %v3380, %v3536
      %v3643 = vadd.f32 %v3381, %v3541
      %v3644 = vadd.f32 %v3382, %v3544
      %v3645 = vadd.f32 %v3383, %v3549
      %v3646 = vadd.f32 %v3384, %v3552
      %v3647 = vadd.f32 %v3385, %v3557
      %v3648 = vadd.f32 %v3386, %v3560
      %v3649 = vadd.f32 %v3387, %v3565
      %v3650 = vadd.f32 %v3388, %v3568
      %v3651 = vadd.f32 %v3389, %v3573
      %v3652 = vadd.f32 %v3390, %v3576
      %v3653 = vadd.f32 %v3391, %v3581
      %v3654 = vadd.f32 %v3392, %v3584
      %v3655 = vadd.f32 %v3393, %v3589
      %v3656 = vadd.f32 %v3394, %v3592
      %v3657 = vadd.f32 %v3395, %v3597
      %v3658 = vadd.f32 %v3396, %v3600
      %v3659 = vadd.f32 %v3397, %v3605
      %v3660 = vadd.f32 %v3398, %v3608
      %v3661 = vadd.f32 %v3399, %v3613
      %v3662 = vadd.f32 %v3400, %v3616
      %v3663 = vadd.f32 %v3401, %v3621
      %v3664 = vadd.f32 %v3402, %v3624
      %v3665 = vadd.f32 %v3403, %v3629
      %v3666 = vadd.f32 %v3404, %v3632
      %3667 = vst [vmem:[#allocation2] sm:$0xff] %v3635
      %3668 = vst [vmem:[#allocation2 + $0x8] sm:$0xff] %v3636
      %3669 = vst [vmem:[#allocation2 + $0x10] sm:$0xff] %v3637
      %3670 = vst [vmem:[#allocation2 + $0x18] sm:$0xff] %v3638
      %3671 = vst [vmem:[#allocation2 + $0x20] sm:$0xff] %v3639
      %3672 = vst [vmem:[#allocation2 + $0x28] sm:$0xff] %v3640
      %3673 = vst [vmem:[#allocation2 + $0x30] sm:$0xff] %v3641
      %3674 = vst [vmem:[#allocation2 + $0x38] sm:$0xff] %v3642
      %3675 = vst [vmem:[#allocation2 + $0x40] sm:$0xff] %v3643
      %3676 = vst [vmem:[#allocation2 + $0x48] sm:$0xff] %v3644
      %3677 = vst [vmem:[#allocation2 + $0x50] sm:$0xff] %v3645
      %3678 = vst [vmem:[#allocation2 + $0x58] sm:$0xff] %v3646
      %3679 = vst [vmem:[#allocation2 + $0x60] sm:$0xff] %v3647
      %3680 = vst [vmem:[#allocation2 + $0x68] sm:$0xff] %v3648
      %3681 = vst [vmem:[#allocation2 + $0x70] sm:$0xff] %v3649
      %3682 = vst [vmem:[#allocation2 + $0x78] sm:$0xff] %v3650
      %3683 = vst [vmem:[#allocation2 + $0x80] sm:$0xff] %v3651
      %3684 = vst [vmem:[#allocation2 + $0x88] sm:$0xff] %v3652
      %3685 = vst [vmem:[#allocation2 + $0x90] sm:$0xff] %v3653
      %3686 = vst [vmem:[#allocation2 + $0x98] sm:$0xff] %v3654
      %3687 = vst [vmem:[#allocation2 + $0xa0] sm:$0xff] %v3655
      %3688 = vst [vmem:[#allocation2 + $0xa8] sm:$0xff] %v3656
      %3689 = vst [vmem:[#allocation2 + $0xb0] sm:$0xff] %v3657
      %3690 = vst [vmem:[#allocation2 + $0xb8] sm:$0xff] %v3658
      %3691 = vst [vmem:[#allocation2 + $0xc0] sm:$0xff] %v3659
      %3692 = vst [vmem:[#allocation2 + $0xc8] sm:$0xff] %v3660
      %3693 = vst [vmem:[#allocation2 + $0xd0] sm:$0xff] %v3661
      %3694 = vst [vmem:[#allocation2 + $0xd8] sm:$0xff] %v3662
      %3695 = vst [vmem:[#allocation2 + $0xe0] sm:$0xff] %v3663
      %3696 = vst [vmem:[#allocation2 + $0xe8] sm:$0xff] %v3664
      %3697 = vst [vmem:[#allocation2 + $0xf0] sm:$0xff] %v3665
      %3698 = vst [vmem:[#allocation2 + $0xf8] sm:$0xff] %v3666
      %v3700 = vrot.slane %v267, 5
      %v3701 = vrot.slane %v3700, 4
      %v3702 = vrot.slane %v268, 5
      %v3703 = vsel %vm1510, %v3701, %v3702
      %v3704 = vrot.slane %v3702, 4
      %v3705 = vrot.slane %v269, 5
      %v3706 = vsel %vm1510, %v3704, %v3705
      %v3707 = vld [vmem:[#allocation2] sm:$0xff]
      %v3708 = vld [vmem:[#allocation2 + $0x8] sm:$0xff]
      %v3709 = vld [vmem:[#allocation2 + $0x10] sm:$0xff]
      %v3710 = vld [vmem:[#allocation2 + $0x18] sm:$0xff]
      %v3711 = vld [vmem:[#allocation2 + $0x20] sm:$0xff]
      %v3712 = vld [vmem:[#allocation2 + $0x28] sm:$0xff]
      %v3713 = vld [vmem:[#allocation2 + $0x30] sm:$0xff]
      %v3714 = vld [vmem:[#allocation2 + $0x38] sm:$0xff]
      %v3715 = vld [vmem:[#allocation2 + $0x40] sm:$0xff]
      %v3716 = vld [vmem:[#allocation2 + $0x48] sm:$0xff]
      %v3717 = vld [vmem:[#allocation2 + $0x50] sm:$0xff]
      %v3718 = vld [vmem:[#allocation2 + $0x58] sm:$0xff]
      %v3719 = vld [vmem:[#allocation2 + $0x60] sm:$0xff]
      %v3720 = vld [vmem:[#allocation2 + $0x68] sm:$0xff]
      %v3721 = vld [vmem:[#allocation2 + $0x70] sm:$0xff]
      %v3722 = vld [vmem:[#allocation2 + $0x78] sm:$0xff]
      %v3723 = vld [vmem:[#allocation2 + $0x80] sm:$0xff]
      %v3724 = vld [vmem:[#allocation2 + $0x88] sm:$0xff]
      %v3725 = vld [vmem:[#allocation2 + $0x90] sm:$0xff]
      %v3726 = vld [vmem:[#allocation2 + $0x98] sm:$0xff]
      %v3727 = vld [vmem:[#allocation2 + $0xa0] sm:$0xff]
      %v3728 = vld [vmem:[#allocation2 + $0xa8] sm:$0xff]
      %v3729 = vld [vmem:[#allocation2 + $0xb0] sm:$0xff]
      %v3730 = vld [vmem:[#allocation2 + $0xb8] sm:$0xff]
      %v3731 = vld [vmem:[#allocation2 + $0xc0] sm:$0xff]
      %v3732 = vld [vmem:[#allocation2 + $0xc8] sm:$0xff]
      %v3733 = vld [vmem:[#allocation2 + $0xd0] sm:$0xff]
      %v3734 = vld [vmem:[#allocation2 + $0xd8] sm:$0xff]
      %v3735 = vld [vmem:[#allocation2 + $0xe0] sm:$0xff]
      %v3736 = vld [vmem:[#allocation2 + $0xe8] sm:$0xff]
      %v3737 = vld [vmem:[#allocation2 + $0xf0] sm:$0xff]
      %v3738 = vld [vmem:[#allocation2 + $0xf8] sm:$0xff]
      %s3739 = scalar_lea.vmem %s1, 512
      %v3740 = vld [vmem:[%s3739] sm:$0xf]
      %v3741 = vld [vmem:[%s3739 + $0x4] sm:$0xf]
      %v3742 = vld [vmem:[%s3739 + $0x8] sm:$0xf]
      %v3743 = vld [vmem:[%s3739 + $0xc] sm:$0xf]
      %v3744 = vld [vmem:[%s3739 + $0x10] sm:$0xf]
      %v3745 = vld [vmem:[%s3739 + $0x14] sm:$0xf]
      %v3746 = vld [vmem:[%s3739 + $0x18] sm:$0xf]
      %v3747 = vld [vmem:[%s3739 + $0x1c] sm:$0xf]
      %v3748 = vld [vmem:[%s3739 + $0x20] sm:$0xf]
      %v3749 = vld [vmem:[%s3739 + $0x24] sm:$0xf]
      %v3750 = vld [vmem:[%s3739 + $0x28] sm:$0xf]
      %v3751 = vld [vmem:[%s3739 + $0x2c] sm:$0xf]
      %v3752 = vld [vmem:[%s3739 + $0x30] sm:$0xf]
      %v3753 = vld [vmem:[%s3739 + $0x34] sm:$0xf]
      %v3754 = vld [vmem:[%s3739 + $0x38] sm:$0xf]
      %v3755 = vld [vmem:[%s3739 + $0x3c] sm:$0xf]
      %v3756 = vunpack.c.l.b16 %v3703
      %v3757 = vunpack.c.l.b16 %v3706
      %v3758 = vpack.c.b16 %v3757, %v3756
      %v3776 = vunpack.c.l.b16 %v3740
      %v3777 = vunpack.c.l.b16 %v3741
      %v3778 = vunpack.c.l.b16 %v3742
      %v3779 = vunpack.c.l.b16 %v3743
      %v3780 = vunpack.c.l.b16 %v3744
      %v3781 = vunpack.c.l.b16 %v3745
      %v3782 = vunpack.c.l.b16 %v3746
      %v3783 = vunpack.c.l.b16 %v3747
      %v3784 = vunpack.c.l.b16 %v3748
      %v3785 = vunpack.c.l.b16 %v3749
      %v3786 = vunpack.c.l.b16 %v3750
      %v3787 = vunpack.c.l.b16 %v3751
      %v3788 = vunpack.c.l.b16 %v3752
      %v3789 = vunpack.c.l.b16 %v3753
      %v3790 = vunpack.c.l.b16 %v3754
      %v3791 = vunpack.c.l.b16 %v3755
      %v3792 = vpack.c.b16 %v3777, %v3776
      %v3793 = vpack.c.b16 %v3779, %v3778
      %v3794 = vpack.c.b16 %v3781, %v3780
      %v3795 = vpack.c.b16 %v3783, %v3782
      %v3796 = vpack.c.b16 %v3785, %v3784
      %v3797 = vpack.c.b16 %v3787, %v3786
      %v3798 = vpack.c.b16 %v3789, %v3788
      %v3799 = vpack.c.b16 %v3791, %v3790
      %3808 = vmatprep.subr.bf16.mxu0 0
      %3809 = vmatpush1.bf16.msra.mxu0 %v3792
      %3810 = vmatprep.subr.bf16.mxu0 0
      %3811 = vmatpush1.bf16.msra.mxu0 %v3793
      %3812 = vmatprep.subr.bf16.mxu0 0
      %3813 = vmatpush1.bf16.msra.mxu0 %v3794
      %3814 = vmatprep.subr.bf16.mxu0 0
      %3815 = vmatpush1.bf16.msra.mxu0 %v3795
      %3816 = vmatprep.subr.bf16.mxu0 0
      %3817 = vmatpush1.bf16.msra.mxu0 %v3796
      %3818 = vmatprep.subr.bf16.mxu0 0
      %3819 = vmatpush1.bf16.msra.mxu0 %v3797
      %3820 = vmatprep.subr.bf16.mxu0 0
      %3821 = vmatpush1.bf16.msra.mxu0 %v3798
      %3822 = vmatprep.subr.bf16.mxu0 0
      %3823 = vmatpush1.bf16.msra.mxu0 %v3799
      %3824 = vmatprep.subr.bf16.mxu0 0
      %3825 = vmatpush1.bf16.msra.mxu0 0
      %3826 = vmatprep.subr.bf16.mxu0 0
      %3827 = vmatpush1.bf16.msra.mxu0 0
      %3828 = vmatprep.subr.bf16.mxu0 0
      %3829 = vmatpush1.bf16.msra.mxu0 0
      %3830 = vmatprep.subr.bf16.mxu0 0
      %3831 = vmatpush1.bf16.msra.mxu0 0
      %3832 = vmatprep.subr.bf16.mxu0 0
      %3833 = vmatpush1.bf16.msra.mxu0 0
      %3834 = vmatprep.subr.bf16.mxu0 0
      %3835 = vmatpush1.bf16.msra.mxu0 0
      %3836 = vmatprep.subr.bf16.mxu0 0
      %3837 = vmatpush1.bf16.msra.mxu0 0
      %3838 = vmatprep.subr.bf16.mxu0 0
      %3839 = vmatpush1.bf16.msra.mxu0 0
      %3840 = vmatprep.mubr.bf16.mxu0 0
      %3841 = vmatmul.mubr.bf16.gmra.mrb[0].mxu0 %v1706
      %v3842 = vpop.f32.mrb[0].mxu0
      %v3843 = vadd.f32 0.0, %v3842
      %v3844 = vpop.f32.mrb[0].mxu0
      %v3845 = vpop.f32.mrb[0].mxu0
      %v3846 = vadd.f32 0.0, %v3845
      %v3847 = vpop.f32.mrb[0].mxu0
      %3848 = vmatprep.mubr.bf16.mxu0 0
      %3849 = vmatmul.mubr.bf16.gmra.mrb[0].mxu0 %v1707
      %v3850 = vpop.f32.mrb[0].mxu0
      %v3851 = vadd.f32 0.0, %v3850
      %v3852 = vpop.f32.mrb[0].mxu0
      %v3853 = vpop.f32.mrb[0].mxu0
      %v3854 = vadd.f32 0.0, %v3853
      %v3855 = vpop.f32.mrb[0].mxu0
      %3856 = vmatprep.mubr.bf16.mxu0 0
      %3857 = vmatmul.mubr.bf16.gmra.mrb[0].mxu0 %v1708
      %v3858 = vpop.f32.mrb[0].mxu0
      %v3859 = vadd.f32 0.0, %v3858
      %v3860 = vpop.f32.mrb[0].mxu0
      %v3861 = vpop.f32.mrb[0].mxu0
      %v3862 = vadd.f32 0.0, %v3861
      %v3863 = vpop.f32.mrb[0].mxu0
      %3864 = vmatprep.mubr.bf16.mxu0 0
      %3865 = vmatmul.mubr.bf16.gmra.mrb[0].mxu0 %v1709
      %v3866 = vpop.f32.mrb[0].mxu0
      %v3867 = vadd.f32 0.0, %v3866
      %v3868 = vpop.f32.mrb[0].mxu0
      %v3869 = vpop.f32.mrb[0].mxu0
      %v3870 = vadd.f32 0.0, %v3869
      %v3871 = vpop.f32.mrb[0].mxu0
      %3872 = vmatprep.mubr.bf16.mxu0 0
      %3873 = vmatmul.mubr.bf16.gmra.mrb[0].mxu0 %v1710
      %v3874 = vpop.f32.mrb[0].mxu0
      %v3875 = vadd.f32 0.0, %v3874
      %v3876 = vpop.f32.mrb[0].mxu0
      %v3877 = vpop.f32.mrb[0].mxu0
      %v3878 = vadd.f32 0.0, %v3877
      %v3879 = vpop.f32.mrb[0].mxu0
      %3880 = vmatprep.mubr.bf16.mxu0 0
      %3881 = vmatmul.mubr.bf16.gmra.mrb[0].mxu0 %v1711
      %v3882 = vpop.f32.mrb[0].mxu0
      %v3883 = vadd.f32 0.0, %v3882
      %v3884 = vpop.f32.mrb[0].mxu0
      %v3885 = vpop.f32.mrb[0].mxu0
      %v3886 = vadd.f32 0.0, %v3885
      %v3887 = vpop.f32.mrb[0].mxu0
      %3888 = vmatprep.mubr.bf16.mxu0 0
      %3889 = vmatmul.mubr.bf16.gmra.mrb[0].mxu0 %v1712
      %v3890 = vpop.f32.mrb[0].mxu0
      %v3891 = vadd.f32 0.0, %v3890
      %v3892 = vpop.f32.mrb[0].mxu0
      %v3893 = vpop.f32.mrb[0].mxu0
      %v3894 = vadd.f32 0.0, %v3893
      %v3895 = vpop.f32.mrb[0].mxu0
      %3896 = vmatprep.mubr.bf16.mxu0 0
      %3897 = vmatmul.mubr.bf16.gmra.mrb[0].mxu0 %v1713
      %v3898 = vpop.f32.mrb[0].mxu0
      %v3899 = vadd.f32 0.0, %v3898
      %v3900 = vpop.f32.mrb[0].mxu0
      %v3901 = vpop.f32.mrb[0].mxu0
      %v3902 = vadd.f32 0.0, %v3901
      %v3903 = vpop.f32.mrb[0].mxu0
      %3904 = vmatprep.mubr.bf16.mxu0 0
      %3905 = vmatmul.mubr.bf16.gmra.mrb[0].mxu0 %v1714
      %v3906 = vpop.f32.mrb[0].mxu0
      %v3907 = vadd.f32 0.0, %v3906
      %v3908 = vpop.f32.mrb[0].mxu0
      %v3909 = vpop.f32.mrb[0].mxu0
      %v3910 = vadd.f32 0.0, %v3909
      %v3911 = vpop.f32.mrb[0].mxu0
      %3912 = vmatprep.mubr.bf16.mxu0 0
      %3913 = vmatmul.mubr.bf16.gmra.mrb[0].mxu0 %v1715
      %v3914 = vpop.f32.mrb[0].mxu0
      %v3915 = vadd.f32 0.0, %v3914
      %v3916 = vpop.f32.mrb[0].mxu0
      %v3917 = vpop.f32.mrb[0].mxu0
      %v3918 = vadd.f32 0.0, %v3917
      %v3919 = vpop.f32.mrb[0].mxu0
      %3920 = vmatprep.mubr.bf16.mxu0 0
      %3921 = vmatmul.mubr.bf16.gmra.mrb[0].mxu0 %v1716
      %v3922 = vpop.f32.mrb[0].mxu0
      %v3923 = vadd.f32 0.0, %v3922
      %v3924 = vpop.f32.mrb[0].mxu0
      %v3925 = vpop.f32.mrb[0].mxu0
      %v3926 = vadd.f32 0.0, %v3925
      %v3927 = vpop.f32.mrb[0].mxu0
      %3928 = vmatprep.mubr.bf16.mxu0 0
      %3929 = vmatmul.mubr.bf16.gmra.mrb[0].mxu0 %v1717
      %v3930 = vpop.f32.mrb[0].mxu0
      %v3931 = vadd.f32 0.0, %v3930
      %v3932 = vpop.f32.mrb[0].mxu0
      %v3933 = vpop.f32.mrb[0].mxu0
      %v3934 = vadd.f32 0.0, %v3933
      %v3935 = vpop.f32.mrb[0].mxu0
      %3936 = vmatprep.mubr.bf16.mxu0 0
      %3937 = vmatmul.mubr.bf16.gmra.mrb[0].mxu0 %v1718
      %v3938 = vpop.f32.mrb[0].mxu0
      %v3939 = vadd.f32 0.0, %v3938
      %v3940 = vpop.f32.mrb[0].mxu0
      %v3941 = vpop.f32.mrb[0].mxu0
      %v3942 = vadd.f32 0.0, %v3941
      %v3943 = vpop.f32.mrb[0].mxu0
      %3944 = vmatprep.mubr.bf16.mxu0 0
      %3945 = vmatmul.mubr.bf16.gmra.mrb[0].mxu0 %v1719
      %v3946 = vpop.f32.mrb[0].mxu0
      %v3947 = vadd.f32 0.0, %v3946
      %v3948 = vpop.f32.mrb[0].mxu0
      %v3949 = vpop.f32.mrb[0].mxu0
      %v3950 = vadd.f32 0.0, %v3949
      %v3951 = vpop.f32.mrb[0].mxu0
      %3952 = vmatprep.mubr.bf16.mxu0 0
      %3953 = vmatmul.mubr.bf16.gmra.mrb[0].mxu0 %v2746
      %v3954 = vpop.f32.mrb[0].mxu0
      %v3955 = vadd.f32 0.0, %v3954
      %v3956 = vpop.f32.mrb[0].mxu0
      %v3957 = vpop.f32.mrb[0].mxu0
      %v3958 = vadd.f32 0.0, %v3957
      %v3959 = vpop.f32.mrb[0].mxu0
      %3960 = vmatprep.mubr.bf16.mxu0 0
      %3961 = vmatmul.mubr.bf16.gmra.mrb[0].mxu0 %v3758
      %v3962 = vpop.f32.mrb[0].mxu0
      %v3963 = vadd.f32 0.0, %v3962
      %v3964 = vpop.f32.mrb[0].mxu0
      %v3965 = vpop.f32.mrb[0].mxu0
      %v3966 = vadd.f32 0.0, %v3965
      %v3967 = vpop.f32.mrb[0].mxu0
      %3968 = vdwg.mxu0
      %v3969 = vadd.f32 %v3707, %v3843
      %v3970 = vadd.f32 %v3708, %v3846
      %v3971 = vadd.f32 %v3709, %v3851
      %v3972 = vadd.f32 %v3710, %v3854
      %v3973 = vadd.f32 %v3711, %v3859
      %v3974 = vadd.f32 %v3712, %v3862
      %v3975 = vadd.f32 %v3713, %v3867
      %v3976 = vadd.f32 %v3714, %v3870
      %v3977 = vadd.f32 %v3715, %v3875
      %v3978 = vadd.f32 %v3716, %v3878
      %v3979 = vadd.f32 %v3717, %v3883
      %v3980 = vadd.f32 %v3718, %v3886
      %v3981 = vadd.f32 %v3719, %v3891
      %v3982 = vadd.f32 %v3720, %v3894
      %v3983 = vadd.f32 %v3721, %v3899
      %v3984 = vadd.f32 %v3722, %v3902
      %v3985 = vadd.f32 %v3723, %v3907
      %v3986 = vadd.f32 %v3724, %v3910
      %v3987 = vadd.f32 %v3725, %v3915
      %v3988 = vadd.f32 %v3726, %v3918
      %v3989 = vadd.f32 %v3727, %v3923
      %v3990 = vadd.f32 %v3728, %v3926
      %v3991 = vadd.f32 %v3729, %v3931
      %v3992 = vadd.f32 %v3730, %v3934
      %v3993 = vadd.f32 %v3731, %v3939
      %v3994 = vadd.f32 %v3732, %v3942
      %v3995 = vadd.f32 %v3733, %v3947
      %v3996 = vadd.f32 %v3734, %v3950
      %v3997 = vadd.f32 %v3735, %v3955
      %v3998 = vadd.f32 %v3736, %v3958
      %v3999 = vadd.f32 %v3737, %v3963
      %v4000 = vadd.f32 %v3738, %v3966
      %4001 = vst [vmem:[#allocation2] sm:$0xff] %v3969
      %4002 = vst [vmem:[#allocation2 + $0x8] sm:$0xff] %v3970
      %4003 = vst [vmem:[#allocation2 + $0x10] sm:$0xff] %v3971
      %4004 = vst [vmem:[#allocation2 + $0x18] sm:$0xff] %v3972
      %4005 = vst [vmem:[#allocation2 + $0x20] sm:$0xff] %v3973
      %4006 = vst [vmem:[#allocation2 + $0x28] sm:$0xff] %v3974
      %4007 = vst [vmem:[#allocation2 + $0x30] sm:$0xff] %v3975
      %4008 = vst [vmem:[#allocation2 + $0x38] sm:$0xff] %v3976
      %4009 = vst [vmem:[#allocation2 + $0x40] sm:$0xff] %v3977
      %4010 = vst [vmem:[#allocation2 + $0x48] sm:$0xff] %v3978
      %4011 = vst [vmem:[#allocation2 + $0x50] sm:$0xff] %v3979
      %4012 = vst [vmem:[#allocation2 + $0x58] sm:$0xff] %v3980
      %4013 = vst [vmem:[#allocation2 + $0x60] sm:$0xff] %v3981
      %4014 = vst [vmem:[#allocation2 + $0x68] sm:$0xff] %v3982
      %4015 = vst [vmem:[#allocation2 + $0x70] sm:$0xff] %v3983
      %4016 = vst [vmem:[#allocation2 + $0x78] sm:$0xff] %v3984
      %4017 = vst [vmem:[#allocation2 + $0x80] sm:$0xff] %v3985
      %4018 = vst [vmem:[#allocation2 + $0x88] sm:$0xff] %v3986
      %4019 = vst [vmem:[#allocation2 + $0x90] sm:$0xff] %v3987
      %4020 = vst [vmem:[#allocation2 + $0x98] sm:$0xff] %v3988
      %4021 = vst [vmem:[#allocation2 + $0xa0] sm:$0xff] %v3989
      %4022 = vst [vmem:[#allocation2 + $0xa8] sm:$0xff] %v3990
      %4023 = vst [vmem:[#allocation2 + $0xb0] sm:$0xff] %v3991
      %4024 = vst [vmem:[#allocation2 + $0xb8] sm:$0xff] %v3992
      %4025 = vst [vmem:[#allocation2 + $0xc0] sm:$0xff] %v3993
      %4026 = vst [vmem:[#allocation2 + $0xc8] sm:$0xff] %v3994
      %4027 = vst [vmem:[#allocation2 + $0xd0] sm:$0xff] %v3995
      %4028 = vst [vmem:[#allocation2 + $0xd8] sm:$0xff] %v3996
      %4029 = vst [vmem:[#allocation2 + $0xe0] sm:$0xff] %v3997
      %4030 = vst [vmem:[#allocation2 + $0xe8] sm:$0xff] %v3998
      %4031 = vst [vmem:[#allocation2 + $0xf0] sm:$0xff] %v3999
      %4032 = vst [vmem:[#allocation2 + $0xf8] sm:$0xff] %v4000
      %v4033 = vld [vmem:[#allocation2] sm:$0xff]
      %v4034 = vld [vmem:[#allocation2 + $0x8] sm:$0xff]
      %v4035 = vld [vmem:[#allocation2 + $0x10] sm:$0xff]
      %v4036 = vld [vmem:[#allocation2 + $0x18] sm:$0xff]
      %v4037 = vld [vmem:[#allocation2 + $0x20] sm:$0xff]
      %v4038 = vld [vmem:[#allocation2 + $0x28] sm:$0xff]
      %v4039 = vld [vmem:[#allocation2 + $0x30] sm:$0xff]
      %v4040 = vld [vmem:[#allocation2 + $0x38] sm:$0xff]
      %v4041 = vld [vmem:[#allocation2 + $0x40] sm:$0xff]
      %v4042 = vld [vmem:[#allocation2 + $0x48] sm:$0xff]
      %v4043 = vld [vmem:[#allocation2 + $0x50] sm:$0xff]
      %v4044 = vld [vmem:[#allocation2 + $0x58] sm:$0xff]
      %v4045 = vld [vmem:[#allocation2 + $0x60] sm:$0xff]
      %v4046 = vld [vmem:[#allocation2 + $0x68] sm:$0xff]
      %v4047 = vld [vmem:[#allocation2 + $0x70] sm:$0xff]
      %v4048 = vld [vmem:[#allocation2 + $0x78] sm:$0xff]
      %v4049 = vld [vmem:[#allocation2 + $0x80] sm:$0xff]
      %v4050 = vld [vmem:[#allocation2 + $0x88] sm:$0xff]
      %v4051 = vld [vmem:[#allocation2 + $0x90] sm:$0xff]
      %v4052 = vld [vmem:[#allocation2 + $0x98] sm:$0xff]
      %v4053 = vld [vmem:[#allocation2 + $0xa0] sm:$0xff]
      %v4054 = vld [vmem:[#allocation2 + $0xa8] sm:$0xff]
      %v4055 = vld [vmem:[#allocation2 + $0xb0] sm:$0xff]
      %v4056 = vld [vmem:[#allocation2 + $0xb8] sm:$0xff]
      %v4057 = vld [vmem:[#allocation2 + $0xc0] sm:$0xff]
      %v4058 = vld [vmem:[#allocation2 + $0xc8] sm:$0xff]
      %v4059 = vld [vmem:[#allocation2 + $0xd0] sm:$0xff]
      %v4060 = vld [vmem:[#allocation2 + $0xd8] sm:$0xff]
      %v4061 = vld [vmem:[#allocation2 + $0xe0] sm:$0xff]
      %v4062 = vld [vmem:[#allocation2 + $0xe8] sm:$0xff]
      %v4063 = vld [vmem:[#allocation2 + $0xf0] sm:$0xff]
      %v4064 = vld [vmem:[#allocation2 + $0xf8] sm:$0xff]
      %4065 = vst [vmem:[%s208] sm:$0xff] %v4033
      %4066 = vst [vmem:[%s208 + $0x8] sm:$0xff] %v4034
      %4067 = vst [vmem:[%s208 + $0x10] sm:$0xff] %v4035
      %4068 = vst [vmem:[%s208 + $0x18] sm:$0xff] %v4036
      %4069 = vst [vmem:[%s208 + $0x20] sm:$0xff] %v4037
      %4070 = vst [vmem:[%s208 + $0x28] sm:$0xff] %v4038
      %4071 = vst [vmem:[%s208 + $0x30] sm:$0xff] %v4039
      %4072 = vst [vmem:[%s208 + $0x38] sm:$0xff] %v4040
      %4073 = vst [vmem:[%s208 + $0x40] sm:$0xff] %v4041
      %4074 = vst [vmem:[%s208 + $0x48] sm:$0xff] %v4042
      %4075 = vst [vmem:[%s208 + $0x50] sm:$0xff] %v4043
      %4076 = vst [vmem:[%s208 + $0x58] sm:$0xff] %v4044
      %4077 = vst [vmem:[%s208 + $0x60] sm:$0xff] %v4045
      %4078 = vst [vmem:[%s208 + $0x68] sm:$0xff] %v4046
      %4079 = vst [vmem:[%s208 + $0x70] sm:$0xff] %v4047
      %4080 = vst [vmem:[%s208 + $0x78] sm:$0xff] %v4048
      %4081 = vst [vmem:[%s208 + $0x80] sm:$0xff] %v4049
      %4082 = vst [vmem:[%s208 + $0x88] sm:$0xff] %v4050
      %4083 = vst [vmem:[%s208 + $0x90] sm:$0xff] %v4051
      %4084 = vst [vmem:[%s208 + $0x98] sm:$0xff] %v4052
      %4085 = vst [vmem:[%s208 + $0xa0] sm:$0xff] %v4053
      %4086 = vst [vmem:[%s208 + $0xa8] sm:$0xff] %v4054
      %4087 = vst [vmem:[%s208 + $0xb0] sm:$0xff] %v4055
      %4088 = vst [vmem:[%s208 + $0xb8] sm:$0xff] %v4056
      %4089 = vst [vmem:[%s208 + $0xc0] sm:$0xff] %v4057
      %4090 = vst [vmem:[%s208 + $0xc8] sm:$0xff] %v4058
      %4091 = vst [vmem:[%s208 + $0xd0] sm:$0xff] %v4059
      %4092 = vst [vmem:[%s208 + $0xd8] sm:$0xff] %v4060
      %4093 = vst [vmem:[%s208 + $0xe0] sm:$0xff] %v4061
      %4094 = vst [vmem:[%s208 + $0xe8] sm:$0xff] %v4062
      %4095 = vst [vmem:[%s208 + $0xf0] sm:$0xff] %v4063
      %4096 = vst [vmem:[%s208 + $0xf8] sm:$0xff] %v4064
      %v4097 = vadd.f32 %v4033, %v4034
      %v4098 = vadd.f32 %v4097, %v4035
      %v4099 = vadd.f32 %v4098, %v4036
      %v4100 = vadd.f32 %v4099, %v4037
      %v4101 = vadd.f32 %v4100, %v4038
      %v4102 = vadd.f32 %v4101, %v4039
      %v4103 = vadd.f32 %v4102, %v4040
      %v4104 = vadd.f32 %v4103, %v4041
      %v4105 = vadd.f32 %v4104, %v4042
      %v4106 = vadd.f32 %v4105, %v4043
      %v4107 = vadd.f32 %v4106, %v4044
      %v4108 = vadd.f32 %v4107, %v4045
      %v4109 = vadd.f32 %v4108, %v4046
      %v4110 = vadd.f32 %v4109, %v4047
      %v4111 = vadd.f32 %v4110, %v4048
      %v4112 = vadd.f32 %v4111, %v4049
      %v4113 = vadd.f32 %v4112, %v4050
      %v4114 = vadd.f32 %v4113, %v4051
      %v4115 = vadd.f32 %v4114, %v4052
      %v4116 = vadd.f32 %v4115, %v4053
      %v4117 = vadd.f32 %v4116, %v4054
      %v4118 = vadd.f32 %v4117, %v4055
      %v4119 = vadd.f32 %v4118, %v4056
      %v4120 = vadd.f32 %v4119, %v4057
      %v4121 = vadd.f32 %v4120, %v4058
      %v4122 = vadd.f32 %v4121, %v4059
      %v4123 = vadd.f32 %v4122, %v4060
      %v4124 = vadd.f32 %v4123, %v4061
      %v4125 = vadd.f32 %v4124, %v4062
      %v4126 = vadd.f32 %v4125, %v4063
      %v4127 = vadd.f32 %v4126, %v4064
      %v4128 = vrot.slane %v4127, 4
      %v4129 = vadd.f32 %v4127, %v4128
      %v4130 = vrot.slane %v4129, 2
      %v4131 = vadd.f32 %v4129, %v4130
      %v4132 = vrot.slane %v4131, 1
      %v4133 = vadd.f32 %v4131, %v4132
      %4134 = vst [vmem:[%s211] sm:$0x1] %v4133
      %v4135 = vmul.f32 %v4033, %v4033
      %v4136 = vmul.f32 %v4034, %v4034
      %v4137 = vmul.f32 %v4035, %v4035
      %v4138 = vmul.f32 %v4036, %v4036
      %v4139 = vmul.f32 %v4037, %v4037
      %v4140 = vmul.f32 %v4038, %v4038
      %v4141 = vmul.f32 %v4039, %v4039
      %v4142 = vmul.f32 %v4040, %v4040
      %v4143 = vmul.f32 %v4041, %v4041
      %v4144 = vmul.f32 %v4042, %v4042
      %v4145 = vmul.f32 %v4043, %v4043
      %v4146 = vmul.f32 %v4044, %v4044
      %v4147 = vmul.f32 %v4045, %v4045
      %v4148 = vmul.f32 %v4046, %v4046
      %v4149 = vmul.f32 %v4047, %v4047
      %v4150 = vmul.f32 %v4048, %v4048
      %v4151 = vmul.f32 %v4049, %v4049
      %v4152 = vmul.f32 %v4050, %v4050
      %v4153 = vmul.f32 %v4051, %v4051
      %v4154 = vmul.f32 %v4052, %v4052
      %v4155 = vmul.f32 %v4053, %v4053
      %v4156 = vmul.f32 %v4054, %v4054
      %v4157 = vmul.f32 %v4055, %v4055
      %v4158 = vmul.f32 %v4056, %v4056
      %v4159 = vmul.f32 %v4057, %v4057
      %v4160 = vmul.f32 %v4058, %v4058
      %v4161 = vmul.f32 %v4059, %v4059
      %v4162 = vmul.f32 %v4060, %v4060
      %v4163 = vmul.f32 %v4061, %v4061
      %v4164 = vmul.f32 %v4062, %v4062
      %v4165 = vmul.f32 %v4063, %v4063
      %v4166 = vmul.f32 %v4064, %v4064
      %v4167 = vadd.f32 %v4135, %v4136
      %v4168 = vadd.f32 %v4167, %v4137
      %v4169 = vadd.f32 %v4168, %v4138
      %v4170 = vadd.f32 %v4169, %v4139
      %v4171 = vadd.f32 %v4170, %v4140
      %v4172 = vadd.f32 %v4171, %v4141
      %v4173 = vadd.f32 %v4172, %v4142
      %v4174 = vadd.f32 %v4173, %v4143
      %v4175 = vadd.f32 %v4174, %v4144
      %v4176 = vadd.f32 %v4175, %v4145
      %v4177 = vadd.f32 %v4176, %v4146
      %v4178 = vadd.f32 %v4177, %v4147
      %v4179 = vadd.f32 %v4178, %v4148
      %v4180 = vadd.f32 %v4179, %v4149
      %v4181 = vadd.f32 %v4180, %v4150
      %v4182 = vadd.f32 %v4181, %v4151
      %v4183 = vadd.f32 %v4182, %v4152
      %v4184 = vadd.f32 %v4183, %v4153
      %v4185 = vadd.f32 %v4184, %v4154
      %v4186 = vadd.f32 %v4185, %v4155
      %v4187 = vadd.f32 %v4186, %v4156
      %v4188 = vadd.f32 %v4187, %v4157
      %v4189 = vadd.f32 %v4188, %v4158
      %v4190 = vadd.f32 %v4189, %v4159
      %v4191 = vadd.f32 %v4190, %v4160
      %v4192 = vadd.f32 %v4191, %v4161
      %v4193 = vadd.f32 %v4192, %v4162
      %v4194 = vadd.f32 %v4193, %v4163
      %v4195 = vadd.f32 %v4194, %v4164
      %v4196 = vadd.f32 %v4195, %v4165
      %v4197 = vadd.f32 %v4196, %v4166
      %v4198 = vrot.slane %v4197, 4
      %v4199 = vadd.f32 %v4197, %v4198
      %v4200 = vrot.slane %v4199, 2
      %v4201 = vadd.f32 %v4199, %v4200
      %v4202 = vrot.slane %v4201, 1
      %v4203 = vadd.f32 %v4201, %v4202
      %4204 = vst [vmem:[%s214] sm:$0x1] %v4203
      %p4205 = scmp.lt.s32.totalorder %s16, 1
      %s4206 = scalar_select %p4205, %s16, 1
      %s4207 = smul.addr %s4206, 32
      %s4208 = smul.addr %s4207, 8
      %s4209 = scalar_lea.vmem %s2, %s4208
      %p4210 = scmp.lt.s32.totalorder %s16, 1
      %s4211 = scalar_select %p4210, %s16, 1
      %s4212 = scalar_lea.vmem %s3, %s4211
      %p4213 = scmp.lt.s32.totalorder %s16, 1
      %s4214 = scalar_select %p4213, %s16, 1
      %s4215 = scalar_lea.vmem %s4, %s4214
      // Predicated region
      $region29: #{basic_block2_forward.4} parent=27 // pred_check
        %p4216 = pneg %p81
      $region30: #{basic_block2_forward.4} parent=27 // pred_check_branch
        %4218 = sbr.rel (%p4216) target = $region32
      $region31: #{basic_block2_forward.4} parent=27 // pred_region
        _
      $region32: #{basic_block2_forward.4} parent=27 // pred_fallthru
        _
      // Predicated region
      $region33: #{basic_block2_forward.4} parent=27 // pred_check
        %p4219 = pneg %p107
      $region34: #{basic_block2_forward.4} parent=27 // pred_check_branch
        %4221 = sbr.rel (%p4219) target = $region36
      $region35: #{basic_block2_forward.4} parent=27 // pred_region
        _
      $region36: #{basic_block2_forward.4} parent=27 // pred_fallthru
        _
      // Predicated region
      $region37: #{basic_block2_forward.4} parent=27 // pred_check
        %p4222 = pneg %p133
      $region38: #{basic_block2_forward.4} parent=27 // pred_check_branch
        %4224 = sbr.rel (%p4222) target = $region40
      $region39: #{basic_block2_forward.4} parent=27 // pred_region
        _
      $region40: #{basic_block2_forward.4} parent=27 // pred_fallthru
        _
    $region28: #{basic_block2_forward.4} parent=5 // pred_fallthru
      _
    %p4225 = scmp.le.s32.totalorder 2, %s11
    // Predicated region
    $region41: #{basic_block2_forward.4} parent=5 // pred_check
      %p4226 = pneg %p4225
    $region42: #{basic_block2_forward.4} parent=5 // pred_check_branch
      %4228 = sbr.rel (%p4226) target = $region44
    $region43: #{basic_block2_forward.4} parent=5 // pred_region
      %s4229 = ssub.s32 %s11, 2
      // Predicated region
      $region45: #{basic_block2_forward.4} parent=43 // pred_check
        %p4230 = pneg %p87
      $region46: #{basic_block2_forward.4} parent=43 // pred_check_branch
        %4232 = sbr.rel (%p4230) target = $region48
      $region47: #{basic_block2_forward.4} parent=43 // pred_region
        %p4233 = scmp.lt.s32.totalorder %s17, 1
        %s4234 = scalar_select %p4233, %s17, 1
        %s4235 = smul.addr %s4234, 32
        %s4236 = smul.addr %s4235, 8
        %s4237 = scalar_lea.vmem %s2, %s4236
      $region48: #{basic_block2_forward.4} parent=43 // pred_fallthru
        _
      // Predicated region
      $region49: #{basic_block2_forward.4} parent=43 // pred_check
        %p4238 = pneg %p113
      $region50: #{basic_block2_forward.4} parent=43 // pred_check_branch
        %4240 = sbr.rel (%p4238) target = $region52
      $region51: #{basic_block2_forward.4} parent=43 // pred_region
        %p4241 = scmp.lt.s32.totalorder %s17, 1
        %s4242 = scalar_select %p4241, %s17, 1
        %s4243 = scalar_lea.vmem %s3, %s4242
      $region52: #{basic_block2_forward.4} parent=43 // pred_fallthru
        _
      // Predicated region
      $region53: #{basic_block2_forward.4} parent=43 // pred_check
        %p4244 = pneg %p139
      $region54: #{basic_block2_forward.4} parent=43 // pred_check_branch
        %4246 = sbr.rel (%p4244) target = $region56
      $region55: #{basic_block2_forward.4} parent=43 // pred_region
        %p4247 = scmp.lt.s32.totalorder %s17, 1
        %s4248 = scalar_select %p4247, %s17, 1
        %s4249 = scalar_lea.vmem %s4, %s4248
      $region56: #{basic_block2_forward.4} parent=43 // pred_fallthru
        _
    $region44: #{basic_block2_forward.4} parent=5 // pred_fallthru
      _
  $region6: #{basic_block2_forward.4} parent=0 // loop_footer
    %s15 = sadd.s32 1, %s11
  $region7: #{basic_block2_forward.4} parent=0 // loop_footer_branch
    %10 = sbr.rel target = $region3
  $region8: #{basic_block2_forward.4} parent=0 // loop_exit
    _

</llo_original>
